<compile_context>
chip_gen: v5e
topology: v5e:2x2
jax: 0.10.0
libtpu: 0.0.40
codegen_flags: <defaults>
</compile_context>

<pallas_src>
import functools

import jax
import jax.numpy as jnp
from jax.experimental import pallas as pl
from jax.experimental.pallas import tpu as pltpu


# ----------------------------------------------------------------------------
# Fused kernel: whole Bottleneck block for the whole (small) batch.
# Activations are (N*H*W, C): rows on sublanes, channels on lanes.
# Cin == Cout == 4*planes == 128 -> input / residual / output tiles lane-dense.
# ----------------------------------------------------------------------------
def _bottleneck_kernel(x_ref, w1_ref, b1_ref, w2_ref, b2_ref, w3_ref, b3_ref,
                       o_ref, col_ref, *, N, H, W, P):
    NM = N * H * W

    # --- conv1 (1x1, BN1 folded) + ReLU : one (NM,Cin)x(Cin,P) MXU dot ------
    y1 = jnp.dot(x_ref[...], w1_ref[...], preferred_element_type=jnp.float32)
    y1 = jnp.maximum(y1 + b1_ref[...], 0.0).astype(jnp.bfloat16)
    y1hw = y1.reshape(N, H, W, P)

    # --- build the (NM, 9P) bf16 im2col buffer in VMEM ----------------------
    # Zero-fill happens exactly ONCE per pallas_call (grid has a single step);
    # the zeros that survive the 9 shifted stores are exactly the 3x3 conv's
    # implicit padding.  TODO(synk): for a multi-step grid, restrict this to
    # the halo strips or guard it with pl.when(step == 0).
    col_ref[...] = jnp.zeros_like(col_ref)
    for kh in range(3):
        for kw in range(3):
            t = kh * 3 + kw
            dh, dw = kh - 1, kw - 1
            # col[n, h, w, t*P:(t+1)*P] = y1[n, h+dh, w+dw, :]  (zero if OOR)
            h0, h1 = max(0, -dh), min(H, H - dh)
            w0, w1 = max(0, -dw), min(W, W - dw)
            col_ref[:, h0:h1, w0:w1, t * P:(t + 1) * P] = (
                y1hw[:, h0 + dh:h1 + dh, w0 + dw:w1 + dw, :])

    # --- conv2 (3x3 pad=1, BN2 folded) + ReLU : ONE K=9P contraction --------
    col = col_ref[...].reshape(NM, 9 * P)
    y2 = jnp.dot(col, w2_ref[...], preferred_element_type=jnp.float32)
    y2 = jnp.maximum(y2 + b2_ref[...], 0.0).astype(jnp.bfloat16)

    # --- conv3 (1x1, BN3 folded) + residual + ReLU, bf16 epilogue store -----
    y3 = jnp.dot(y2, w3_ref[...], preferred_element_type=jnp.float32)
    y3 = y3 + b3_ref[...]
    # Re-read x here (residual) instead of keeping it live across the body.
    y3 = y3 + x_ref[...].astype(jnp.float32)
    o_ref[...] = jnp.maximum(y3, 0.0).astype(jnp.bfloat16)


# ----------------------------------------------------------------------------
# BatchNorm folding (inference mode): BN(conv(x)) == conv(x; w*scale) + shift
# ----------------------------------------------------------------------------
def _fold_bn(w, bn, eps=1e-5):
    gamma, beta, mean, var = bn
    scale = gamma / jnp.sqrt(var + eps)                 # (Cout,)
    w_f = (w * scale).astype(jnp.bfloat16)              # scale output channels
    b_f = (beta - mean * scale).astype(jnp.float32)
    return w_f, b_f


def _fold_params(params):
    w1, b1 = _fold_bn(params["w1"], params["bn1"])      # (Cin, P), (P,)
    w2, b2 = _fold_bn(params["w2"], params["bn2"])      # (9, P, P), (P,)
    w3, b3 = _fold_bn(params["w3"], params["bn3"])      # (P, 4P), (4P,)
    return dict(w1=w1, b1=b1, w2=w2, b2=b2, w3=w3, b3=b3)


# ----------------------------------------------------------------------------
# Module forward: NCHW in (matches PyTorch), (N*H*W, C) lane-dense inside,
# bf16 NCHW out.
# ----------------------------------------------------------------------------
def bottleneck_forward(x_nchw, params):
    f = _fold_params(params)
    n, cin, h, w = x_nchw.shape
    p = f["w1"].shape[1]
    cout = f["w3"].shape[1]
    assert cin == cout, "identity residual requires inplanes == planes * 4"
    nm = n * h * w

    # layout plumbing (wrapper glue): NCHW -> (N*H*W, C), bf16 operands
    x_flat = jnp.transpose(x_nchw, (0, 2, 3, 1)).reshape(nm, cin)
    x_flat = x_flat.astype(jnp.bfloat16)

    w2col = f["w2"].reshape(9 * p, p)                    # (9P, P) bf16, im2col
    b1 = f["b1"].reshape(1, p)
    b2 = f["b2"].reshape(1, p)
    b3 = f["b3"].reshape(1, cout)

    kernel = functools.partial(_bottleneck_kernel, N=n, H=h, W=w, P=p)
    out = pl.pallas_call(
        kernel,
        out_shape=jax.ShapeDtypeStruct((nm, cout), jnp.bfloat16),
        grid=(1,),
        in_specs=[
            pl.BlockSpec((nm, cin), lambda i: (0, 0)),    # x / residual
            pl.BlockSpec((cin, p), lambda i: (0, 0)),     # w1 (BN folded)
            pl.BlockSpec((1, p), lambda i: (0, 0)),       # b1
            pl.BlockSpec((9 * p, p), lambda i: (0, 0)),   # w2 (im2col layout)
            pl.BlockSpec((1, p), lambda i: (0, 0)),       # b2
            pl.BlockSpec((p, cout), lambda i: (0, 0)),    # w3
            pl.BlockSpec((1, cout), lambda i: (0, 0)),    # b3
        ],
        out_specs=pl.BlockSpec((nm, cout), lambda i: (0, 0)),
        scratch_shapes=[pltpu.VMEM((n, h, w, 9 * p), jnp.bfloat16)],
        compiler_params=pltpu.CompilerParams(
            dimension_semantics=("arbitrary",)),
    )(x_flat, f["w1"], b1, w2col, b2, f["w3"], b3)

    return jnp.transpose(out.reshape(n, h, w, cout), (0, 3, 1, 2))


# ----------------------------------------------------------------------------
# Pure-JAX reference (same folded bf16 operands, f32 accumulation, f32 output)
# ----------------------------------------------------------------------------
def bottleneck_ref(x_nchw, params):
    f = _fold_params(params)
    n, cin, h, w = x_nchw.shape
    p = f["w1"].shape[1]
    x = jnp.transpose(x_nchw, (0, 2, 3, 1)).astype(jnp.bfloat16)   # NHWC
    y1 = jnp.einsum("nhwc,cp->nhwp", x, f["w1"],
                    preferred_element_type=jnp.float32)
    y1 = jnp.maximum(y1 + f["b1"], 0.0).astype(jnp.bfloat16)
    y1p = jnp.pad(y1, ((0, 0), (1, 1), (1, 1), (0, 0)))
    acc = jnp.zeros((n, h, w, p), jnp.float32)
    for kh in range(3):
        for kw in range(3):
            acc = acc + jnp.einsum("nhwc,cp->nhwp",
                                   y1p[:, kh:kh + h, kw:kw + w, :],
                                   f["w2"][kh * 3 + kw],
                                   preferred_element_type=jnp.float32)
    y2 = jnp.maximum(acc + f["b2"], 0.0).astype(jnp.bfloat16)
    y3 = jnp.einsum("nhwc,cp->nhwp", y2, f["w3"],
                    preferred_element_type=jnp.float32) + f["b3"]
    out = jnp.maximum(y3 + x.astype(jnp.float32), 0.0)
    return jnp.transpose(out, (0, 3, 1, 2))


# ----------------------------------------------------------------------------
# Deterministic parameter construction (mimics PyTorch init + random BN stats)
# ----------------------------------------------------------------------------
def _conv_w(key, shape, fan_in):
    bound = 1.0 / (fan_in ** 0.5)
    return jax.random.uniform(key, shape, jnp.float32, -bound, bound)


def _bn_params(key, c):
    k1, k2, k3, k4 = jax.random.split(key, 4)
    gamma = 1.0 + 0.1 * jax.random.normal(k1, (c,), jnp.float32)
    beta = 0.1 * jax.random.normal(k2, (c,), jnp.float32)
    mean = 0.1 * jax.random.normal(k3, (c,), jnp.float32)
    var = jnp.abs(jax.random.normal(k4, (c,), jnp.float32)) + 0.5
    return gamma, beta, mean, var


def make_params(key, inplanes, planes):
    k = jax.random.split(key, 6)
    return dict(
        w1=_conv_w(k[0], (inplanes, planes), inplanes * 1 * 1),
        w2=_conv_w(k[1], (9, planes, planes), planes * 3 * 3),
        w3=_conv_w(k[2], (planes, planes * 4), planes * 1 * 1),
        bn1=_bn_params(k[3], planes),
        bn2=_bn_params(k[4], planes),
        bn3=_bn_params(k[5], planes * 4),
    )


# ----------------------------------------------------------------------------
if __name__ == "__main__":
    N, PLANES, H, W = 2, 32, 16, 16
    INPLANES = PLANES * 4          # required for the identity residual path

    key = jax.random.PRNGKey(0)
    k_params, k_input = jax.random.split(key)
    params = make_params(k_params, INPLANES, PLANES)
    x = jax.random.normal(k_input, (N, INPLANES, H, W), jnp.float32)

    fwd = jax.jit(functools.partial(bottleneck_forward, params=params))
    y = fwd(x)
    jax.block_until_ready(y)

    assert y.shape == (N, INPLANES, H, W), y.shape
    y32 = y.astype(jnp.float32)
    assert bool(jnp.all(jnp.isfinite(y32)))
    assert bool(jnp.all(y32 >= 0.0))            # final ReLU

    y_ref = bottleneck_ref(x, params)
    err = float(jnp.max(jnp.abs(y32 - y_ref)))
    tol = 2e-2 * (1.0 + float(jnp.max(jnp.abs(y_ref))))   # bf16 output + acc order
    assert err < tol, (err, tol)

    print("KERNEL_OK")
</pallas_src>

<mosaic_0001>
module attributes {stable_mosaic.version = 11 : i64} {
  func.func @_bottleneck_kernel(%arg0: i32, %arg1: memref<512x128xbf16, #tpu.memory_space<vmem>>, %arg2: memref<128x32xbf16, #tpu.memory_space<vmem>>, %arg3: memref<1x32xf32, #tpu.memory_space<vmem>>, %arg4: memref<288x32xbf16, #tpu.memory_space<vmem>>, %arg5: memref<1x32xf32, #tpu.memory_space<vmem>>, %arg6: memref<32x128xbf16, #tpu.memory_space<vmem>>, %arg7: memref<1x128xf32, #tpu.memory_space<vmem>>, %arg8: memref<512x128xbf16, #tpu.memory_space<vmem>>, %arg9: memref<2x16x16x288xbf16, #tpu.memory_space<vmem>>) attributes {dimension_semantics = [#tpu.dimension_semantics<arbitrary>], iteration_bounds = array<i64: 1>, scalar_prefetch = 0 : i64, scratch_operands = 1 : i64, tpu.core_type = #tpu.core_type<tc>, window_params = [{pipeline_mode = #tpu.pipeline_mode<synchronous>, transform_indices = @transform_0, window_bounds = array<i64: 512, 128>}, {pipeline_mode = #tpu.pipeline_mode<synchronous>, transform_indices = @transform_1, window_bounds = array<i64: 128, 32>}, {pipeline_mode = #tpu.pipeline_mode<synchronous>, transform_indices = @transform_2, window_bounds = array<i64: 1, 32>}, {pipeline_mode = #tpu.pipeline_mode<synchronous>, transform_indices = @transform_3, window_bounds = array<i64: 288, 32>}, {pipeline_mode = #tpu.pipeline_mode<synchronous>, transform_indices = @transform_4, window_bounds = array<i64: 1, 32>}, {pipeline_mode = #tpu.pipeline_mode<synchronous>, transform_indices = @transform_5, window_bounds = array<i64: 32, 128>}, {pipeline_mode = #tpu.pipeline_mode<synchronous>, transform_indices = @transform_6, window_bounds = array<i64: 1, 128>}, {pipeline_mode = #tpu.pipeline_mode<synchronous>, transform_indices = @transform_7, window_bounds = array<i64: 512, 128>}]} {
    %c0 = arith.constant 0 : index
    %c0_0 = arith.constant 0 : index
    %0 = vector.load %arg1[%c0, %c0_0] : memref<512x128xbf16, #tpu.memory_space<vmem>>, vector<512x128xbf16>
    %c0_1 = arith.constant 0 : index
    %c0_2 = arith.constant 0 : index
    %1 = vector.load %arg2[%c0_1, %c0_2] : memref<128x32xbf16, #tpu.memory_space<vmem>>, vector<128x32xbf16>
    %cst = arith.constant dense<0.000000e+00> : vector<512x32xf32>
    %2 = tpu.matmul %0, %1, %cst {dimension_numbers = #tpu.dot_dimension_numbers<[1], [0], [0], [1], [0, 0, 1, 1], [], []>} : vector<512x128xbf16>, vector<128x32xbf16>, vector<512x32xf32> -> vector<512x32xf32>
    %c0_3 = arith.constant 0 : index
    %c0_4 = arith.constant 0 : index
    %3 = vector.load %arg3[%c0_3, %c0_4] : memref<1x32xf32, #tpu.memory_space<vmem>>, vector<1x32xf32>
    %4 = vector.broadcast %3 : vector<1x32xf32> to vector<512x32xf32>
    %5 = arith.addf %2, %4 : vector<512x32xf32>
    %cst_5 = arith.constant 0.000000e+00 : f32
    %6 = vector.broadcast %cst_5 : f32 to vector<512x32xf32>
    %7 = arith.maximumf %5, %6 : vector<512x32xf32>
    %8 = arith.truncf %7 : vector<512x32xf32> to vector<512x32xbf16>
    %9 = vector.shape_cast %8 : vector<512x32xbf16> to vector<2x16x16x32xbf16>
    %cst_6 = arith.constant 0.000000e+00 : bf16
    %10 = vector.broadcast %cst_6 : bf16 to vector<2x16x16x288xbf16>
    %c0_7 = arith.constant 0 : index
    %c0_8 = arith.constant 0 : index
    %c0_9 = arith.constant 0 : index
    %c0_10 = arith.constant 0 : index
    %11 = vector.load %arg9[%c0_7, %c0_8, %c0_9, %c0_10] : memref<2x16x16x288xbf16, #tpu.memory_space<vmem>>, vector<2x16x16x288xbf16>
    tpu.vector_store %arg9[%c0_7, %c0_8, %c0_9, %c0_10], %10 {strides = array<i32>} : memref<2x16x16x288xbf16, #tpu.memory_space<vmem>>, vector<2x16x16x288xbf16>,
    %12 = vector.extract_strided_slice %9 {offsets = [0, 0, 0, 0], sizes = [2, 15, 15, 32], strides = [1, 1, 1, 1]} : vector<2x16x16x32xbf16> to vector<2x15x15x32xbf16>
    %c0_11 = arith.constant 0 : index
    %c1 = arith.constant 1 : index
    %c1_12 = arith.constant 1 : index
    %c0_13 = arith.constant 0 : index
    %13 = vector.load %arg9[%c0_11, %c1, %c1_12, %c0_13] : memref<2x16x16x288xbf16, #tpu.memory_space<vmem>>, vector<2x15x15x32xbf16>
    tpu.vector_store %arg9[%c0_11, %c1, %c1_12, %c0_13], %12 {strides = array<i32>} : memref<2x16x16x288xbf16, #tpu.memory_space<vmem>>, vector<2x15x15x32xbf16>,
    %14 = vector.extract_strided_slice %9 {offsets = [0, 0, 0, 0], sizes = [2, 15, 16, 32], strides = [1, 1, 1, 1]} : vector<2x16x16x32xbf16> to vector<2x15x16x32xbf16>
    %c0_14 = arith.constant 0 : index
    %c1_15 = arith.constant 1 : index
    %c0_16 = arith.constant 0 : index
    %c32 = arith.constant 32 : index
    %15 = vector.load %arg9[%c0_14, %c1_15, %c0_16, %c32] : memref<2x16x16x288xbf16, #tpu.memory_space<vmem>>, vector<2x15x16x32xbf16>
    tpu.vector_store %arg9[%c0_14, %c1_15, %c0_16, %c32], %14 {strides = array<i32>} : memref<2x16x16x288xbf16, #tpu.memory_space<vmem>>, vector<2x15x16x32xbf16>,
    %16 = vector.extract_strided_slice %9 {offsets = [0, 0, 1, 0], sizes = [2, 15, 15, 32], strides = [1, 1, 1, 1]} : vector<2x16x16x32xbf16> to vector<2x15x15x32xbf16>
    %c0_17 = arith.constant 0 : index
    %c1_18 = arith.constant 1 : index
    %c0_19 = arith.constant 0 : index
    %c64 = arith.constant 64 : index
    %17 = vector.load %arg9[%c0_17, %c1_18, %c0_19, %c64] : memref<2x16x16x288xbf16, #tpu.memory_space<vmem>>, vector<2x15x15x32xbf16>
    tpu.vector_store %arg9[%c0_17, %c1_18, %c0_19, %c64], %16 {strides = array<i32>} : memref<2x16x16x288xbf16, #tpu.memory_space<vmem>>, vector<2x15x15x32xbf16>,
    %18 = vector.extract_strided_slice %9 {offsets = [0, 0, 0, 0], sizes = [2, 16, 15, 32], strides = [1, 1, 1, 1]} : vector<2x16x16x32xbf16> to vector<2x16x15x32xbf16>
    %c0_20 = arith.constant 0 : index
    %c0_21 = arith.constant 0 : index
    %c1_22 = arith.constant 1 : index
    %c96 = arith.constant 96 : index
    %19 = vector.load %arg9[%c0_20, %c0_21, %c1_22, %c96] : memref<2x16x16x288xbf16, #tpu.memory_space<vmem>>, vector<2x16x15x32xbf16>
    tpu.vector_store %arg9[%c0_20, %c0_21, %c1_22, %c96], %18 {strides = array<i32>} : memref<2x16x16x288xbf16, #tpu.memory_space<vmem>>, vector<2x16x15x32xbf16>,
    %c0_23 = arith.constant 0 : index
    %c0_24 = arith.constant 0 : index
    %c0_25 = arith.constant 0 : index
    %c128 = arith.constant 128 : index
    %20 = vector.load %arg9[%c0_23, %c0_24, %c0_25, %c128] : memref<2x16x16x288xbf16, #tpu.memory_space<vmem>>, vector<2x16x16x32xbf16>
    tpu.vector_store %arg9[%c0_23, %c0_24, %c0_25, %c128], %9 {strides = array<i32>} : memref<2x16x16x288xbf16, #tpu.memory_space<vmem>>, vector<2x16x16x32xbf16>,
    %21 = vector.extract_strided_slice %9 {offsets = [0, 0, 1, 0], sizes = [2, 16, 15, 32], strides = [1, 1, 1, 1]} : vector<2x16x16x32xbf16> to vector<2x16x15x32xbf16>
    %c0_26 = arith.constant 0 : index
    %c0_27 = arith.constant 0 : index
    %c0_28 = arith.constant 0 : index
    %c160 = arith.constant 160 : index
    %22 = vector.load %arg9[%c0_26, %c0_27, %c0_28, %c160] : memref<2x16x16x288xbf16, #tpu.memory_space<vmem>>, vector<2x16x15x32xbf16>
    tpu.vector_store %arg9[%c0_26, %c0_27, %c0_28, %c160], %21 {strides = array<i32>} : memref<2x16x16x288xbf16, #tpu.memory_space<vmem>>, vector<2x16x15x32xbf16>,
    %23 = vector.extract_strided_slice %9 {offsets = [0, 1, 0, 0], sizes = [2, 15, 15, 32], strides = [1, 1, 1, 1]} : vector<2x16x16x32xbf16> to vector<2x15x15x32xbf16>
    %c0_29 = arith.constant 0 : index
    %c0_30 = arith.constant 0 : index
    %c1_31 = arith.constant 1 : index
    %c192 = arith.constant 192 : index
    %24 = vector.load %arg9[%c0_29, %c0_30, %c1_31, %c192] : memref<2x16x16x288xbf16, #tpu.memory_space<vmem>>, vector<2x15x15x32xbf16>
    tpu.vector_store %arg9[%c0_29, %c0_30, %c1_31, %c192], %23 {strides = array<i32>} : memref<2x16x16x288xbf16, #tpu.memory_space<vmem>>, vector<2x15x15x32xbf16>,
    %25 = vector.extract_strided_slice %9 {offsets = [0, 1, 0, 0], sizes = [2, 15, 16, 32], strides = [1, 1, 1, 1]} : vector<2x16x16x32xbf16> to vector<2x15x16x32xbf16>
    %c0_32 = arith.constant 0 : index
    %c0_33 = arith.constant 0 : index
    %c0_34 = arith.constant 0 : index
    %c224 = arith.constant 224 : index
    %26 = vector.load %arg9[%c0_32, %c0_33, %c0_34, %c224] : memref<2x16x16x288xbf16, #tpu.memory_space<vmem>>, vector<2x15x16x32xbf16>
    tpu.vector_store %arg9[%c0_32, %c0_33, %c0_34, %c224], %25 {strides = array<i32>} : memref<2x16x16x288xbf16, #tpu.memory_space<vmem>>, vector<2x15x16x32xbf16>,
    %27 = vector.extract_strided_slice %9 {offsets = [0, 1, 1, 0], sizes = [2, 15, 15, 32], strides = [1, 1, 1, 1]} : vector<2x16x16x32xbf16> to vector<2x15x15x32xbf16>
    %c0_35 = arith.constant 0 : index
    %c0_36 = arith.constant 0 : index
    %c0_37 = arith.constant 0 : index
    %c256 = arith.constant 256 : index
    %28 = vector.load %arg9[%c0_35, %c0_36, %c0_37, %c256] : memref<2x16x16x288xbf16, #tpu.memory_space<vmem>>, vector<2x15x15x32xbf16>
    tpu.vector_store %arg9[%c0_35, %c0_36, %c0_37, %c256], %27 {strides = array<i32>} : memref<2x16x16x288xbf16, #tpu.memory_space<vmem>>, vector<2x15x15x32xbf16>,
    %c0_38 = arith.constant 0 : index
    %c0_39 = arith.constant 0 : index
    %c0_40 = arith.constant 0 : index
    %c0_41 = arith.constant 0 : index
    %29 = vector.load %arg9[%c0_38, %c0_39, %c0_40, %c0_41] : memref<2x16x16x288xbf16, #tpu.memory_space<vmem>>, vector<2x16x16x288xbf16>
    %30 = vector.shape_cast %29 : vector<2x16x16x288xbf16> to vector<512x288xbf16>
    %c0_42 = arith.constant 0 : index
    %c0_43 = arith.constant 0 : index
    %31 = vector.load %arg4[%c0_42, %c0_43] : memref<288x32xbf16, #tpu.memory_space<vmem>>, vector<288x32xbf16>
    %cst_44 = arith.constant dense<0.000000e+00> : vector<512x32xf32>
    %32 = tpu.matmul %30, %31, %cst_44 {dimension_numbers = #tpu.dot_dimension_numbers<[1], [0], [0], [1], [0, 0, 1, 1], [], []>} : vector<512x288xbf16>, vector<288x32xbf16>, vector<512x32xf32> -> vector<512x32xf32>
    %c0_45 = arith.constant 0 : index
    %c0_46 = arith.constant 0 : index
    %33 = vector.load %arg5[%c0_45, %c0_46] : memref<1x32xf32, #tpu.memory_space<vmem>>, vector<1x32xf32>
    %34 = vector.broadcast %33 : vector<1x32xf32> to vector<512x32xf32>
    %35 = arith.addf %32, %34 : vector<512x32xf32>
    %cst_47 = arith.constant 0.000000e+00 : f32
    %36 = vector.broadcast %cst_47 : f32 to vector<512x32xf32>
    %37 = arith.maximumf %35, %36 : vector<512x32xf32>
    %38 = arith.truncf %37 : vector<512x32xf32> to vector<512x32xbf16>
    %c0_48 = arith.constant 0 : index
    %c0_49 = arith.constant 0 : index
    %39 = vector.load %arg6[%c0_48, %c0_49] : memref<32x128xbf16, #tpu.memory_space<vmem>>, vector<32x128xbf16>
    %cst_50 = arith.constant dense<0.000000e+00> : vector<512x128xf32>
    %40 = tpu.matmul %38, %39, %cst_50 {dimension_numbers = #tpu.dot_dimension_numbers<[1], [0], [0], [1], [0, 0, 1, 1], [], []>} : vector<512x32xbf16>, vector<32x128xbf16>, vector<512x128xf32> -> vector<512x128xf32>
    %c0_51 = arith.constant 0 : index
    %c0_52 = arith.constant 0 : index
    %41 = vector.load %arg7[%c0_51, %c0_52] : memref<1x128xf32, #tpu.memory_space<vmem>>, vector<1x128xf32>
    %42 = vector.broadcast %41 : vector<1x128xf32> to vector<512x128xf32>
    %43 = arith.addf %40, %42 : vector<512x128xf32>
    %c0_53 = arith.constant 0 : index
    %c0_54 = arith.constant 0 : index
    %44 = vector.load %arg1[%c0_53, %c0_54] : memref<512x128xbf16, #tpu.memory_space<vmem>>, vector<512x128xbf16>
    %45 = arith.extf %44 : vector<512x128xbf16> to vector<512x128xf32>
    %46 = arith.addf %43, %45 : vector<512x128xf32>
    %cst_55 = arith.constant 0.000000e+00 : f32
    %47 = vector.broadcast %cst_55 : f32 to vector<512x128xf32>
    %48 = arith.maximumf %46, %47 : vector<512x128xf32>
    %49 = arith.truncf %48 : vector<512x128xf32> to vector<512x128xbf16>
    %c0_56 = arith.constant 0 : index
    %c0_57 = arith.constant 0 : index
    %50 = vector.load %arg8[%c0_56, %c0_57] : memref<512x128xbf16, #tpu.memory_space<vmem>>, vector<512x128xbf16>
    tpu.vector_store %arg8[%c0_56, %c0_57], %49 {strides = array<i32>} : memref<512x128xbf16, #tpu.memory_space<vmem>>, vector<512x128xbf16>,
    return
  }
  func.func @transform_0(%arg0: i32) -> (i32, i32) {
    %c0_i32 = arith.constant 0 : i32
    %c0_i32_0 = arith.constant 0 : i32
    %c0_i32_1 = arith.constant 0 : i32
    return %c0_i32, %c0_i32_0 : i32, i32
  }
  func.func @transform_1(%arg0: i32) -> (i32, i32) {
    %c0_i32 = arith.constant 0 : i32
    %c0_i32_0 = arith.constant 0 : i32
    %c0_i32_1 = arith.constant 0 : i32
    return %c0_i32, %c0_i32_0 : i32, i32
  }
  func.func @transform_2(%arg0: i32) -> (i32, i32) {
    %c0_i32 = arith.constant 0 : i32
    %c0_i32_0 = arith.constant 0 : i32
    %c0_i32_1 = arith.constant 0 : i32
    return %c0_i32, %c0_i32_0 : i32, i32
  }
  func.func @transform_3(%arg0: i32) -> (i32, i32) {
    %c0_i32 = arith.constant 0 : i32
    %c0_i32_0 = arith.constant 0 : i32
    %c0_i32_1 = arith.constant 0 : i32
    return %c0_i32, %c0_i32_0 : i32, i32
  }
  func.func @transform_4(%arg0: i32) -> (i32, i32) {
    %c0_i32 = arith.constant 0 : i32
    %c0_i32_0 = arith.constant 0 : i32
    %c0_i32_1 = arith.constant 0 : i32
    return %c0_i32, %c0_i32_0 : i32, i32
  }
  func.func @transform_5(%arg0: i32) -> (i32, i32) {
    %c0_i32 = arith.constant 0 : i32
    %c0_i32_0 = arith.constant 0 : i32
    %c0_i32_1 = arith.constant 0 : i32
    return %c0_i32, %c0_i32_0 : i32, i32
  }
  func.func @transform_6(%arg0: i32) -> (i32, i32) {
    %c0_i32 = arith.constant 0 : i32
    %c0_i32_0 = arith.constant 0 : i32
    %c0_i32_1 = arith.constant 0 : i32
    return %c0_i32, %c0_i32_0 : i32, i32
  }
  func.func @transform_7(%arg0: i32) -> (i32, i32) {
    %c0_i32 = arith.constant 0 : i32
    %c0_i32_0 = arith.constant 0 : i32
    %c0_i32_1 = arith.constant 0 : i32
    return %c0_i32, %c0_i32_0 : i32, i32
  }
}

</mosaic_0001>

<llo_original>
// kernel: bottleneck_forward.1
$region0: #{bottleneck_forward.1}
  #allocation0 [shape = 'u32[]', space=smem, size = 0x4, offset = 0x4, fixed_abs, tag = 'smem constant byte address 0x4 - core index']
  #allocation1 [shape = 'u32[72,128]{1,0:T(1,128)}', space=vmem, size = 0x9000, scoped, tag = 'internal scratch']
  #allocation2 [shape = 'bf16[2,16,16,288]{3,2,1,0:T(8,128)(2,1)}', space=vmem, size = 0x60000, scoped, tag = 'scratch operand']
  %s0 = inlined_call_operand.vmem [shape: bf16[512,128], index: 0, kind: input, shape index: {}]
  %s1 = inlined_call_operand.vmem [shape: bf16[128,32], index: 1, kind: input, shape index: {}]
  %s2 = inlined_call_operand.vmem [shape: f32[1,32], index: 2, kind: input, shape index: {}]
  %s3 = inlined_call_operand.vmem [shape: bf16[288,32], index: 3, kind: input, shape index: {}]
  %s4 = inlined_call_operand.vmem [shape: f32[1,32], index: 4, kind: input, shape index: {}]
  %s5 = inlined_call_operand.vmem [shape: bf16[32,128], index: 5, kind: input, shape index: {}]
  %s6 = inlined_call_operand.vmem [shape: f32[1,128], index: 6, kind: input, shape index: {}]
  %s7 = inlined_call_operand.hbm [shape: bf16[512,128], index: 7, kind: output, shape index: {}]
  %s8 = sld [smem:[#allocation0]]
  $region38: #{bottleneck_forward.1} parent=0
    _
  %s10 = ssub.s32 1, %s8
  %s11 = scalar_select 0, %s10, %s8
  $region1: #{bottleneck_forward.1} parent=0
    #allocation3 [shape = 'u8[131072]{0}', space=vmem, size = 0x20000, scoped, tag = 'output window, operand 0, single buffered']
    #allocation4 [shape = 's32[1]{0}', space=sflag, size = 0x4, scoped, tag = 'scoped memory for bottleneck_forward.1']
    %12 = vsyncpa [#allocation4], 0
    // Predicated region
    $region2: #{bottleneck_forward.1} parent=1 // pred_check
      _
    $region3: #{bottleneck_forward.1} parent=1 // pred_check_branch
      %14 = sbr.rel (0) target = $region5
    $region4: #{bottleneck_forward.1} parent=1 // pred_region
      _
    $region5: #{bottleneck_forward.1} parent=1 // pred_fallthru
      _
    // Predicated region
    $region6: #{bottleneck_forward.1} parent=1 // pred_check
      _
    $region7: #{bottleneck_forward.1} parent=1 // pred_check_branch
      %16 = sbr.rel (0) target = $region9
    $region8: #{bottleneck_forward.1} parent=1 // pred_region
      _
    $region9: #{bottleneck_forward.1} parent=1 // pred_fallthru
      _
    // Predicated region
    $region10: #{bottleneck_forward.1} parent=1 // pred_check
      _
    $region11: #{bottleneck_forward.1} parent=1 // pred_check_branch
      %18 = sbr.rel (0) target = $region13
    $region12: #{bottleneck_forward.1} parent=1 // pred_region
      _
    $region13: #{bottleneck_forward.1} parent=1 // pred_fallthru
      _
    // Predicated region
    $region14: #{bottleneck_forward.1} parent=1 // pred_check
      _
    $region15: #{bottleneck_forward.1} parent=1 // pred_check_branch
      %20 = sbr.rel (0) target = $region17
    $region16: #{bottleneck_forward.1} parent=1 // pred_region
      _
    $region17: #{bottleneck_forward.1} parent=1 // pred_fallthru
      _
    // Predicated region
    $region18: #{bottleneck_forward.1} parent=1 // pred_check
      _
    $region19: #{bottleneck_forward.1} parent=1 // pred_check_branch
      %22 = sbr.rel (0) target = $region21
    $region20: #{bottleneck_forward.1} parent=1 // pred_region
      _
    $region21: #{bottleneck_forward.1} parent=1 // pred_fallthru
      _
    // Predicated region
    $region22: #{bottleneck_forward.1} parent=1 // pred_check
      _
    $region23: #{bottleneck_forward.1} parent=1 // pred_check_branch
      %24 = sbr.rel (0) target = $region25
    $region24: #{bottleneck_forward.1} parent=1 // pred_region
      _
    $region25: #{bottleneck_forward.1} parent=1 // pred_fallthru
      _
    // Predicated region
    $region26: #{bottleneck_forward.1} parent=1 // pred_check
      _
    $region27: #{bottleneck_forward.1} parent=1 // pred_check_branch
      %26 = sbr.rel (0) target = $region29
    $region28: #{bottleneck_forward.1} parent=1 // pred_region
      _
    $region29: #{bottleneck_forward.1} parent=1 // pred_fallthru
      _
    %v28 = vld [vmem:[%s0] sm:$0xf]
    %v29 = vld [vmem:[%s0 + $0x4] sm:$0xf]
    %v30 = vld [vmem:[%s0 + $0x8] sm:$0xf]
    %v31 = vld [vmem:[%s0 + $0xc] sm:$0xf]
    %v32 = vld [vmem:[%s0 + $0x10] sm:$0xf]
    %v33 = vld [vmem:[%s0 + $0x14] sm:$0xf]
    %v34 = vld [vmem:[%s0 + $0x18] sm:$0xf]
    %v35 = vld [vmem:[%s0 + $0x1c] sm:$0xf]
    %v36 = vld [vmem:[%s0 + $0x20] sm:$0xf]
    %v37 = vld [vmem:[%s0 + $0x24] sm:$0xf]
    %v38 = vld [vmem:[%s0 + $0x28] sm:$0xf]
    %v39 = vld [vmem:[%s0 + $0x2c] sm:$0xf]
    %v40 = vld [vmem:[%s0 + $0x30] sm:$0xf]
    %v41 = vld [vmem:[%s0 + $0x34] sm:$0xf]
    %v42 = vld [vmem:[%s0 + $0x38] sm:$0xf]
    %v43 = vld [vmem:[%s0 + $0x3c] sm:$0xf]
    %v44 = vld [vmem:[%s0 + $0x40] sm:$0xf]
    %v45 = vld [vmem:[%s0 + $0x44] sm:$0xf]
    %v46 = vld [vmem:[%s0 + $0x48] sm:$0xf]
    %v47 = vld [vmem:[%s0 + $0x4c] sm:$0xf]
    %v48 = vld [vmem:[%s0 + $0x50] sm:$0xf]
    %v49 = vld [vmem:[%s0 + $0x54] sm:$0xf]
    %v50 = vld [vmem:[%s0 + $0x58] sm:$0xf]
    %v51 = vld [vmem:[%s0 + $0x5c] sm:$0xf]
    %v52 = vld [vmem:[%s0 + $0x60] sm:$0xf]
    %v53 = vld [vmem:[%s0 + $0x64] sm:$0xf]
    %v54 = vld [vmem:[%s0 + $0x68] sm:$0xf]
    %v55 = vld [vmem:[%s0 + $0x6c] sm:$0xf]
    %v56 = vld [vmem:[%s0 + $0x70] sm:$0xf]
    %v57 = vld [vmem:[%s0 + $0x74] sm:$0xf]
    %v58 = vld [vmem:[%s0 + $0x78] sm:$0xf]
    %v59 = vld [vmem:[%s0 + $0x7c] sm:$0xf]
    %v60 = vld [vmem:[%s0 + $0x80] sm:$0xf]
    %v61 = vld [vmem:[%s0 + $0x84] sm:$0xf]
    %v62 = vld [vmem:[%s0 + $0x88] sm:$0xf]
    %v63 = vld [vmem:[%s0 + $0x8c] sm:$0xf]
    %v64 = vld [vmem:[%s0 + $0x90] sm:$0xf]
    %v65 = vld [vmem:[%s0 + $0x94] sm:$0xf]
    %v66 = vld [vmem:[%s0 + $0x98] sm:$0xf]
    %v67 = vld [vmem:[%s0 + $0x9c] sm:$0xf]
    %v68 = vld [vmem:[%s0 + $0xa0] sm:$0xf]
    %v69 = vld [vmem:[%s0 + $0xa4] sm:$0xf]
    %v70 = vld [vmem:[%s0 + $0xa8] sm:$0xf]
    %v71 = vld [vmem:[%s0 + $0xac] sm:$0xf]
    %v72 = vld [vmem:[%s0 + $0xb0] sm:$0xf]
    %v73 = vld [vmem:[%s0 + $0xb4] sm:$0xf]
    %v74 = vld [vmem:[%s0 + $0xb8] sm:$0xf]
    %v75 = vld [vmem:[%s0 + $0xbc] sm:$0xf]
    %v76 = vld [vmem:[%s0 + $0xc0] sm:$0xf]
    %v77 = vld [vmem:[%s0 + $0xc4] sm:$0xf]
    %v78 = vld [vmem:[%s0 + $0xc8] sm:$0xf]
    %v79 = vld [vmem:[%s0 + $0xcc] sm:$0xf]
    %v80 = vld [vmem:[%s0 + $0xd0] sm:$0xf]
    %v81 = vld [vmem:[%s0 + $0xd4] sm:$0xf]
    %v82 = vld [vmem:[%s0 + $0xd8] sm:$0xf]
    %v83 = vld [vmem:[%s0 + $0xdc] sm:$0xf]
    %v84 = vld [vmem:[%s0 + $0xe0] sm:$0xf]
    %v85 = vld [vmem:[%s0 + $0xe4] sm:$0xf]
    %v86 = vld [vmem:[%s0 + $0xe8] sm:$0xf]
    %v87 = vld [vmem:[%s0 + $0xec] sm:$0xf]
    %v88 = vld [vmem:[%s0 + $0xf0] sm:$0xf]
    %v89 = vld [vmem:[%s0 + $0xf4] sm:$0xf]
    %v90 = vld [vmem:[%s0 + $0xf8] sm:$0xf]
    %v91 = vld [vmem:[%s0 + $0xfc] sm:$0xf]
    %v92 = vld [vmem:[%s1] sm:$0xf]
    %v93 = vld [vmem:[%s1 + $0x4] sm:$0xf]
    %v94 = vld [vmem:[%s1 + $0x8] sm:$0xf]
    %v95 = vld [vmem:[%s1 + $0xc] sm:$0xf]
    %v96 = vld [vmem:[%s1 + $0x10] sm:$0xf]
    %v97 = vld [vmem:[%s1 + $0x14] sm:$0xf]
    %v98 = vld [vmem:[%s1 + $0x18] sm:$0xf]
    %v99 = vld [vmem:[%s1 + $0x1c] sm:$0xf]
    %v100 = vld [vmem:[%s1 + $0x20] sm:$0xf]
    %v101 = vld [vmem:[%s1 + $0x24] sm:$0xf]
    %v102 = vld [vmem:[%s1 + $0x28] sm:$0xf]
    %v103 = vld [vmem:[%s1 + $0x2c] sm:$0xf]
    %v104 = vld [vmem:[%s1 + $0x30] sm:$0xf]
    %v105 = vld [vmem:[%s1 + $0x34] sm:$0xf]
    %v106 = vld [vmem:[%s1 + $0x38] sm:$0xf]
    %v107 = vld [vmem:[%s1 + $0x3c] sm:$0xf]
    %v108 = vld [vmem:[%s2] sm:$0x1]
    %v110 = vperm.slane %v108, 0
    %v176 = vunpack.c.l.b16 %v28
    %v177 = vunpack.c.l.b16 %v29
    %v178 = vunpack.c.l.b16 %v30
    %v179 = vunpack.c.l.b16 %v31
    %v180 = vunpack.c.l.b16 %v32
    %v181 = vunpack.c.l.b16 %v33
    %v182 = vunpack.c.l.b16 %v34
    %v183 = vunpack.c.l.b16 %v35
    %v184 = vunpack.c.l.b16 %v36
    %v185 = vunpack.c.l.b16 %v37
    %v186 = vunpack.c.l.b16 %v38
    %v187 = vunpack.c.l.b16 %v39
    %v188 = vunpack.c.l.b16 %v40
    %v189 = vunpack.c.l.b16 %v41
    %v190 = vunpack.c.l.b16 %v42
    %v191 = vunpack.c.l.b16 %v43
    %v192 = vunpack.c.l.b16 %v44
    %v193 = vunpack.c.l.b16 %v45
    %v194 = vunpack.c.l.b16 %v46
    %v195 = vunpack.c.l.b16 %v47
    %v196 = vunpack.c.l.b16 %v48
    %v197 = vunpack.c.l.b16 %v49
    %v198 = vunpack.c.l.b16 %v50
    %v199 = vunpack.c.l.b16 %v51
    %v200 = vunpack.c.l.b16 %v52
    %v201 = vunpack.c.l.b16 %v53
    %v202 = vunpack.c.l.b16 %v54
    %v203 = vunpack.c.l.b16 %v55
    %v204 = vunpack.c.l.b16 %v56
    %v205 = vunpack.c.l.b16 %v57
    %v206 = vunpack.c.l.b16 %v58
    %v207 = vunpack.c.l.b16 %v59
    %v208 = vunpack.c.l.b16 %v60
    %v209 = vunpack.c.l.b16 %v61
    %v210 = vunpack.c.l.b16 %v62
    %v211 = vunpack.c.l.b16 %v63
    %v212 = vunpack.c.l.b16 %v64
    %v213 = vunpack.c.l.b16 %v65
    %v214 = vunpack.c.l.b16 %v66
    %v215 = vunpack.c.l.b16 %v67
    %v216 = vunpack.c.l.b16 %v68
    %v217 = vunpack.c.l.b16 %v69
    %v218 = vunpack.c.l.b16 %v70
    %v219 = vunpack.c.l.b16 %v71
    %v220 = vunpack.c.l.b16 %v72
    %v221 = vunpack.c.l.b16 %v73
    %v222 = vunpack.c.l.b16 %v74
    %v223 = vunpack.c.l.b16 %v75
    %v224 = vunpack.c.l.b16 %v76
    %v225 = vunpack.c.l.b16 %v77
    %v226 = vunpack.c.l.b16 %v78
    %v227 = vunpack.c.l.b16 %v79
    %v228 = vunpack.c.l.b16 %v80
    %v229 = vunpack.c.l.b16 %v81
    %v230 = vunpack.c.l.b16 %v82
    %v231 = vunpack.c.l.b16 %v83
    %v232 = vunpack.c.l.b16 %v84
    %v233 = vunpack.c.l.b16 %v85
    %v234 = vunpack.c.l.b16 %v86
    %v235 = vunpack.c.l.b16 %v87
    %v236 = vunpack.c.l.b16 %v88
    %v237 = vunpack.c.l.b16 %v89
    %v238 = vunpack.c.l.b16 %v90
    %v239 = vunpack.c.l.b16 %v91
    %v240 = vpack.c.b16 %v177, %v176
    %v241 = vpack.c.b16 %v179, %v178
    %v242 = vpack.c.b16 %v181, %v180
    %v243 = vpack.c.b16 %v183, %v182
    %v244 = vpack.c.b16 %v185, %v184
    %v245 = vpack.c.b16 %v187, %v186
    %v246 = vpack.c.b16 %v189, %v188
    %v247 = vpack.c.b16 %v191, %v190
    %v248 = vpack.c.b16 %v193, %v192
    %v249 = vpack.c.b16 %v195, %v194
    %v250 = vpack.c.b16 %v197, %v196
    %v251 = vpack.c.b16 %v199, %v198
    %v252 = vpack.c.b16 %v201, %v200
    %v253 = vpack.c.b16 %v203, %v202
    %v254 = vpack.c.b16 %v205, %v204
    %v255 = vpack.c.b16 %v207, %v206
    %v256 = vpack.c.b16 %v209, %v208
    %v257 = vpack.c.b16 %v211, %v210
    %v258 = vpack.c.b16 %v213, %v212
    %v259 = vpack.c.b16 %v215, %v214
    %v260 = vpack.c.b16 %v217, %v216
    %v261 = vpack.c.b16 %v219, %v218
    %v262 = vpack.c.b16 %v221, %v220
    %v263 = vpack.c.b16 %v223, %v222
    %v264 = vpack.c.b16 %v225, %v224
    %v265 = vpack.c.b16 %v227, %v226
    %v266 = vpack.c.b16 %v229, %v228
    %v267 = vpack.c.b16 %v231, %v230
    %v268 = vpack.c.b16 %v233, %v232
    %v269 = vpack.c.b16 %v235, %v234
    %v270 = vpack.c.b16 %v237, %v236
    %v271 = vpack.c.b16 %v239, %v238
    %v320 = vunpack.c.l.b16 %v92
    %v321 = vunpack.c.l.b16 %v93
    %v322 = vunpack.c.l.b16 %v94
    %v323 = vunpack.c.l.b16 %v95
    %v324 = vunpack.c.l.b16 %v96
    %v325 = vunpack.c.l.b16 %v97
    %v326 = vunpack.c.l.b16 %v98
    %v327 = vunpack.c.l.b16 %v99
    %v328 = vunpack.c.l.b16 %v100
    %v329 = vunpack.c.l.b16 %v101
    %v330 = vunpack.c.l.b16 %v102
    %v331 = vunpack.c.l.b16 %v103
    %v332 = vunpack.c.l.b16 %v104
    %v333 = vunpack.c.l.b16 %v105
    %v334 = vunpack.c.l.b16 %v106
    %v335 = vunpack.c.l.b16 %v107
    %v336 = vpack.c.b16 %v321, %v320
    %v337 = vpack.c.b16 %v323, %v322
    %v338 = vpack.c.b16 %v325, %v324
    %v339 = vpack.c.b16 %v327, %v326
    %v340 = vpack.c.b16 %v329, %v328
    %v341 = vpack.c.b16 %v331, %v330
    %v342 = vpack.c.b16 %v333, %v332
    %v343 = vpack.c.b16 %v335, %v334
    %352 = vmatpush.bf16.msra.mxu0 %v343
    %353 = vmatpush.bf16.msra.mxu0 %v342
    %354 = vmatpush.bf16.msra.mxu0 %v341
    %355 = vmatpush.bf16.msra.mxu0 %v340
    %356 = vmatpush.bf16.msra.mxu0 %v339
    %357 = vmatpush.bf16.msra.mxu0 %v338
    %358 = vmatpush.bf16.msra.mxu0 %v337
    %359 = vmatpush.bf16.msra.mxu0 %v336
    %360 = vmatmul.bf16.gmra.mxu0 %v240
    %v361 = vpop.f32.mrf.mxu0
    %v362 = vadd.f32 %v110, %v361
    %v363 = vpop.f32.mrf.mxu0
    %v364 = vadd.f32 %v110, %v363
    %365 = vmatmul.bf16.gmra.mxu0 %v241
    %v366 = vpop.f32.mrf.mxu0
    %v367 = vadd.f32 %v110, %v366
    %v368 = vpop.f32.mrf.mxu0
    %v369 = vadd.f32 %v110, %v368
    %370 = vmatmul.bf16.gmra.mxu0 %v242
    %v371 = vpop.f32.mrf.mxu0
    %v372 = vadd.f32 %v110, %v371
    %v373 = vpop.f32.mrf.mxu0
    %v374 = vadd.f32 %v110, %v373
    %375 = vmatmul.bf16.gmra.mxu0 %v243
    %v376 = vpop.f32.mrf.mxu0
    %v377 = vadd.f32 %v110, %v376
    %v378 = vpop.f32.mrf.mxu0
    %v379 = vadd.f32 %v110, %v378
    %380 = vmatmul.bf16.gmra.mxu0 %v244
    %v381 = vpop.f32.mrf.mxu0
    %v382 = vadd.f32 %v110, %v381
    %v383 = vpop.f32.mrf.mxu0
    %v384 = vadd.f32 %v110, %v383
    %385 = vmatmul.bf16.gmra.mxu0 %v245
    %v386 = vpop.f32.mrf.mxu0
    %v387 = vadd.f32 %v110, %v386
    %v388 = vpop.f32.mrf.mxu0
    %v389 = vadd.f32 %v110, %v388
    %390 = vmatmul.bf16.gmra.mxu0 %v246
    %v391 = vpop.f32.mrf.mxu0
    %v392 = vadd.f32 %v110, %v391
    %v393 = vpop.f32.mrf.mxu0
    %v394 = vadd.f32 %v110, %v393
    %395 = vmatmul.bf16.gmra.mxu0 %v247
    %v396 = vpop.f32.mrf.mxu0
    %v397 = vadd.f32 %v110, %v396
    %v398 = vpop.f32.mrf.mxu0
    %v399 = vadd.f32 %v110, %v398
    %400 = vmatmul.bf16.gmra.mxu0 %v248
    %v401 = vpop.f32.mrf.mxu0
    %v402 = vadd.f32 %v110, %v401
    %v403 = vpop.f32.mrf.mxu0
    %v404 = vadd.f32 %v110, %v403
    %405 = vmatmul.bf16.gmra.mxu0 %v249
    %v406 = vpop.f32.mrf.mxu0
    %v407 = vadd.f32 %v110, %v406
    %v408 = vpop.f32.mrf.mxu0
    %v409 = vadd.f32 %v110, %v408
    %410 = vmatmul.bf16.gmra.mxu0 %v250
    %v411 = vpop.f32.mrf.mxu0
    %v412 = vadd.f32 %v110, %v411
    %v413 = vpop.f32.mrf.mxu0
    %v414 = vadd.f32 %v110, %v413
    %415 = vmatmul.bf16.gmra.mxu0 %v251
    %v416 = vpop.f32.mrf.mxu0
    %v417 = vadd.f32 %v110, %v416
    %v418 = vpop.f32.mrf.mxu0
    %v419 = vadd.f32 %v110, %v418
    %420 = vmatmul.bf16.gmra.mxu0 %v252
    %v421 = vpop.f32.mrf.mxu0
    %v422 = vadd.f32 %v110, %v421
    %v423 = vpop.f32.mrf.mxu0
    %v424 = vadd.f32 %v110, %v423
    %425 = vmatmul.bf16.gmra.mxu0 %v253
    %v426 = vpop.f32.mrf.mxu0
    %v427 = vadd.f32 %v110, %v426
    %v428 = vpop.f32.mrf.mxu0
    %v429 = vadd.f32 %v110, %v428
    %430 = vmatmul.bf16.gmra.mxu0 %v254
    %v431 = vpop.f32.mrf.mxu0
    %v432 = vadd.f32 %v110, %v431
    %v433 = vpop.f32.mrf.mxu0
    %v434 = vadd.f32 %v110, %v433
    %435 = vmatmul.bf16.gmra.mxu0 %v255
    %v436 = vpop.f32.mrf.mxu0
    %v437 = vadd.f32 %v110, %v436
    %v438 = vpop.f32.mrf.mxu0
    %v439 = vadd.f32 %v110, %v438
    %440 = vmatmul.bf16.gmra.mxu0 %v256
    %v441 = vpop.f32.mrf.mxu0
    %v442 = vadd.f32 %v110, %v441
    %v443 = vpop.f32.mrf.mxu0
    %v444 = vadd.f32 %v110, %v443
    %445 = vmatmul.bf16.gmra.mxu0 %v257
    %v446 = vpop.f32.mrf.mxu0
    %v447 = vadd.f32 %v110, %v446
    %v448 = vpop.f32.mrf.mxu0
    %v449 = vadd.f32 %v110, %v448
    %450 = vmatmul.bf16.gmra.mxu0 %v258
    %v451 = vpop.f32.mrf.mxu0
    %v452 = vadd.f32 %v110, %v451
    %v453 = vpop.f32.mrf.mxu0
    %v454 = vadd.f32 %v110, %v453
    %455 = vmatmul.bf16.gmra.mxu0 %v259
    %v456 = vpop.f32.mrf.mxu0
    %v457 = vadd.f32 %v110, %v456
    %v458 = vpop.f32.mrf.mxu0
    %v459 = vadd.f32 %v110, %v458
    %460 = vmatmul.bf16.gmra.mxu0 %v260
    %v461 = vpop.f32.mrf.mxu0
    %v462 = vadd.f32 %v110, %v461
    %v463 = vpop.f32.mrf.mxu0
    %v464 = vadd.f32 %v110, %v463
    %465 = vmatmul.bf16.gmra.mxu0 %v261
    %v466 = vpop.f32.mrf.mxu0
    %v467 = vadd.f32 %v110, %v466
    %v468 = vpop.f32.mrf.mxu0
    %v469 = vadd.f32 %v110, %v468
    %470 = vmatmul.bf16.gmra.mxu0 %v262
    %v471 = vpop.f32.mrf.mxu0
    %v472 = vadd.f32 %v110, %v471
    %v473 = vpop.f32.mrf.mxu0
    %v474 = vadd.f32 %v110, %v473
    %475 = vmatmul.bf16.gmra.mxu0 %v263
    %v476 = vpop.f32.mrf.mxu0
    %v477 = vadd.f32 %v110, %v476
    %v478 = vpop.f32.mrf.mxu0
    %v479 = vadd.f32 %v110, %v478
    %480 = vmatmul.bf16.gmra.mxu0 %v264
    %v481 = vpop.f32.mrf.mxu0
    %v482 = vadd.f32 %v110, %v481
    %v483 = vpop.f32.mrf.mxu0
    %v484 = vadd.f32 %v110, %v483
    %485 = vmatmul.bf16.gmra.mxu0 %v265
    %v486 = vpop.f32.mrf.mxu0
    %v487 = vadd.f32 %v110, %v486
    %v488 = vpop.f32.mrf.mxu0
    %v489 = vadd.f32 %v110, %v488
    %490 = vmatmul.bf16.gmra.mxu0 %v266
    %v491 = vpop.f32.mrf.mxu0
    %v492 = vadd.f32 %v110, %v491
    %v493 = vpop.f32.mrf.mxu0
    %v494 = vadd.f32 %v110, %v493
    %495 = vmatmul.bf16.gmra.mxu0 %v267
    %v496 = vpop.f32.mrf.mxu0
    %v497 = vadd.f32 %v110, %v496
    %v498 = vpop.f32.mrf.mxu0
    %v499 = vadd.f32 %v110, %v498
    %500 = vmatmul.bf16.gmra.mxu0 %v268
    %v501 = vpop.f32.mrf.mxu0
    %v502 = vadd.f32 %v110, %v501
    %v503 = vpop.f32.mrf.mxu0
    %v504 = vadd.f32 %v110, %v503
    %505 = vmatmul.bf16.gmra.mxu0 %v269
    %v506 = vpop.f32.mrf.mxu0
    %v507 = vadd.f32 %v110, %v506
    %v508 = vpop.f32.mrf.mxu0
    %v509 = vadd.f32 %v110, %v508
    %510 = vmatmul.bf16.gmra.mxu0 %v270
    %v511 = vpop.f32.mrf.mxu0
    %v512 = vadd.f32 %v110, %v511
    %v513 = vpop.f32.mrf.mxu0
    %v514 = vadd.f32 %v110, %v513
    %515 = vmatmul.bf16.gmra.mxu0 %v271
    %v516 = vpop.f32.mrf.mxu0
    %v517 = vadd.f32 %v110, %v516
    %v518 = vpop.f32.mrf.mxu0
    %v519 = vadd.f32 %v110, %v518
    %520 = vdwg.mxu0
    %v521 = vmax.f32 %v362, 0.0
    %v522 = vmax.f32 %v364, 0.0
    %v523 = vmax.f32 %v367, 0.0
    %v524 = vmax.f32 %v369, 0.0
    %v525 = vmax.f32 %v372, 0.0
    %v526 = vmax.f32 %v374, 0.0
    %v527 = vmax.f32 %v377, 0.0
    %v528 = vmax.f32 %v379, 0.0
    %v529 = vmax.f32 %v382, 0.0
    %v530 = vmax.f32 %v384, 0.0
    %v531 = vmax.f32 %v387, 0.0
    %v532 = vmax.f32 %v389, 0.0
    %v533 = vmax.f32 %v392, 0.0
    %v534 = vmax.f32 %v394, 0.0
    %v535 = vmax.f32 %v397, 0.0
    %v536 = vmax.f32 %v399, 0.0
    %v537 = vmax.f32 %v402, 0.0
    %v538 = vmax.f32 %v404, 0.0
    %v539 = vmax.f32 %v407, 0.0
    %v540 = vmax.f32 %v409, 0.0
    %v541 = vmax.f32 %v412, 0.0
    %v542 = vmax.f32 %v414, 0.0
    %v543 = vmax.f32 %v417, 0.0
    %v544 = vmax.f32 %v419, 0.0
    %v545 = vmax.f32 %v422, 0.0
    %v546 = vmax.f32 %v424, 0.0
    %v547 = vmax.f32 %v427, 0.0
    %v548 = vmax.f32 %v429, 0.0
    %v549 = vmax.f32 %v432, 0.0
    %v550 = vmax.f32 %v434, 0.0
    %v551 = vmax.f32 %v437, 0.0
    %v552 = vmax.f32 %v439, 0.0
    %v553 = vmax.f32 %v442, 0.0
    %v554 = vmax.f32 %v444, 0.0
    %v555 = vmax.f32 %v447, 0.0
    %v556 = vmax.f32 %v449, 0.0
    %v557 = vmax.f32 %v452, 0.0
    %v558 = vmax.f32 %v454, 0.0
    %v559 = vmax.f32 %v457, 0.0
    %v560 = vmax.f32 %v459, 0.0
    %v561 = vmax.f32 %v462, 0.0
    %v562 = vmax.f32 %v464, 0.0
    %v563 = vmax.f32 %v467, 0.0
    %v564 = vmax.f32 %v469, 0.0
    %v565 = vmax.f32 %v472, 0.0
    %v566 = vmax.f32 %v474, 0.0
    %v567 = vmax.f32 %v477, 0.0
    %v568 = vmax.f32 %v479, 0.0
    %v569 = vmax.f32 %v482, 0.0
    %v570 = vmax.f32 %v484, 0.0
    %v571 = vmax.f32 %v487, 0.0
    %v572 = vmax.f32 %v489, 0.0
    %v573 = vmax.f32 %v492, 0.0
    %v574 = vmax.f32 %v494, 0.0
    %v575 = vmax.f32 %v497, 0.0
    %v576 = vmax.f32 %v499, 0.0
    %v577 = vmax.f32 %v502, 0.0
    %v578 = vmax.f32 %v504, 0.0
    %v579 = vmax.f32 %v507, 0.0
    %v580 = vmax.f32 %v509, 0.0
    %v581 = vmax.f32 %v512, 0.0
    %v582 = vmax.f32 %v514, 0.0
    %v583 = vmax.f32 %v517, 0.0
    %v584 = vmax.f32 %v519, 0.0
    %v585 = vpack.c.bf16 %v521, %v521
    %v586 = vpack.c.bf16 %v522, %v522
    %v587 = vpack.c.bf16 %v523, %v523
    %v588 = vpack.c.bf16 %v524, %v524
    %v589 = vpack.c.bf16 %v525, %v525
    %v590 = vpack.c.bf16 %v526, %v526
    %v591 = vpack.c.bf16 %v527, %v527
    %v592 = vpack.c.bf16 %v528, %v528
    %v593 = vpack.c.bf16 %v529, %v529
    %v594 = vpack.c.bf16 %v530, %v530
    %v595 = vpack.c.bf16 %v531, %v531
    %v596 = vpack.c.bf16 %v532, %v532
    %v597 = vpack.c.bf16 %v533, %v533
    %v598 = vpack.c.bf16 %v534, %v534
    %v599 = vpack.c.bf16 %v535, %v535
    %v600 = vpack.c.bf16 %v536, %v536
    %v601 = vpack.c.bf16 %v537, %v537
    %v602 = vpack.c.bf16 %v538, %v538
    %v603 = vpack.c.bf16 %v539, %v539
    %v604 = vpack.c.bf16 %v540, %v540
    %v605 = vpack.c.bf16 %v541, %v541
    %v606 = vpack.c.bf16 %v542, %v542
    %v607 = vpack.c.bf16 %v543, %v543
    %v608 = vpack.c.bf16 %v544, %v544
    %v609 = vpack.c.bf16 %v545, %v545
    %v610 = vpack.c.bf16 %v546, %v546
    %v611 = vpack.c.bf16 %v547, %v547
    %v612 = vpack.c.bf16 %v548, %v548
    %v613 = vpack.c.bf16 %v549, %v549
    %v614 = vpack.c.bf16 %v550, %v550
    %v615 = vpack.c.bf16 %v551, %v551
    %v616 = vpack.c.bf16 %v552, %v552
    %v617 = vpack.c.bf16 %v553, %v553
    %v618 = vpack.c.bf16 %v554, %v554
    %v619 = vpack.c.bf16 %v555, %v555
    %v620 = vpack.c.bf16 %v556, %v556
    %v621 = vpack.c.bf16 %v557, %v557
    %v622 = vpack.c.bf16 %v558, %v558
    %v623 = vpack.c.bf16 %v559, %v559
    %v624 = vpack.c.bf16 %v560, %v560
    %v625 = vpack.c.bf16 %v561, %v561
    %v626 = vpack.c.bf16 %v562, %v562
    %v627 = vpack.c.bf16 %v563, %v563
    %v628 = vpack.c.bf16 %v564, %v564
    %v629 = vpack.c.bf16 %v565, %v565
    %v630 = vpack.c.bf16 %v566, %v566
    %v631 = vpack.c.bf16 %v567, %v567
    %v632 = vpack.c.bf16 %v568, %v568
    %v633 = vpack.c.bf16 %v569, %v569
    %v634 = vpack.c.bf16 %v570, %v570
    %v635 = vpack.c.bf16 %v571, %v571
    %v636 = vpack.c.bf16 %v572, %v572
    %v637 = vpack.c.bf16 %v573, %v573
    %v638 = vpack.c.bf16 %v574, %v574
    %v639 = vpack.c.bf16 %v575, %v575
    %v640 = vpack.c.bf16 %v576, %v576
    %v641 = vpack.c.bf16 %v577, %v577
    %v642 = vpack.c.bf16 %v578, %v578
    %v643 = vpack.c.bf16 %v579, %v579
    %v644 = vpack.c.bf16 %v580, %v580
    %v645 = vpack.c.bf16 %v581, %v581
    %v646 = vpack.c.bf16 %v582, %v582
    %v647 = vpack.c.bf16 %v583, %v583
    %v648 = vpack.c.bf16 %v584, %v584
    %649 = vst [vmem:[#allocation2] sm:$0xff] 0
    %vm650 = vcmask 257024
    %651 = vst.msk [vmem:[#allocation2 + $0x8] sm:$0xf] %vm650, 0
    %652 = vst [vmem:[#allocation2 + $0xc] sm:$0xff] 0
    %653 = vst.msk [vmem:[#allocation2 + $0x14] sm:$0xf] %vm650, 0
    %654 = vst [vmem:[#allocation2 + $0x18] sm:$0xff] 0
    %655 = vst.msk [vmem:[#allocation2 + $0x20] sm:$0xf] %vm650, 0
    %656 = vst [vmem:[#allocation2 + $0x24] sm:$0xff] 0
    %657 = vst.msk [vmem:[#allocation2 + $0x2c] sm:$0xf] %vm650, 0
    %658 = vst [vmem:[#allocation2 + $0x30] sm:$0xff] 0
    %659 = vst.msk [vmem:[#allocation2 + $0x38] sm:$0xf] %vm650, 0
    %660 = vst [vmem:[#allocation2 + $0x3c] sm:$0xff] 0
    %661 = vst.msk [vmem:[#allocation2 + $0x44] sm:$0xf] %vm650, 0
    %662 = vst [vmem:[#allocation2 + $0x48] sm:$0xff] 0
    %663 = vst.msk [vmem:[#allocation2 + $0x50] sm:$0xf] %vm650, 0
    %664 = vst [vmem:[#allocation2 + $0x54] sm:$0xff] 0
    %665 = vst.msk [vmem:[#allocation2 + $0x5c] sm:$0xf] %vm650, 0
    %666 = vst [vmem:[#allocation2 + $0x60] sm:$0xff] 0
    %667 = vst.msk [vmem:[#allocation2 + $0x68] sm:$0xf] %vm650, 0
    %668 = vst [vmem:[#allocation2 + $0x6c] sm:$0xff] 0
    %669 = vst.msk [vmem:[#allocation2 + $0x74] sm:$0xf] %vm650, 0
    %670 = vst [vmem:[#allocation2 + $0x78] sm:$0xff] 0
    %671 = vst.msk [vmem:[#allocation2 + $0x80] sm:$0xf] %vm650, 0
    %672 = vst [vmem:[#allocation2 + $0x84] sm:$0xff] 0
    %673 = vst.msk [vmem:[#allocation2 + $0x8c] sm:$0xf] %vm650, 0
    %674 = vst [vmem:[#allocation2 + $0x90] sm:$0xff] 0
    %675 = vst.msk [vmem:[#allocation2 + $0x98] sm:$0xf] %vm650, 0
    %676 = vst [vmem:[#allocation2 + $0x9c] sm:$0xff] 0
    %677 = vst.msk [vmem:[#allocation2 + $0xa4] sm:$0xf] %vm650, 0
    %678 = vst [vmem:[#allocation2 + $0xa8] sm:$0xff] 0
    %679 = vst.msk [vmem:[#allocation2 + $0xb0] sm:$0xf] %vm650, 0
    %680 = vst [vmem:[#allocation2 + $0xb4] sm:$0xff] 0
    %681 = vst.msk [vmem:[#allocation2 + $0xbc] sm:$0xf] %vm650, 0
    %682 = vst [vmem:[#allocation2 + $0xc0] sm:$0xff] 0
    %683 = vst.msk [vmem:[#allocation2 + $0xc8] sm:$0xf] %vm650, 0
    %684 = vst [vmem:[#allocation2 + $0xcc] sm:$0xff] 0
    %685 = vst.msk [vmem:[#allocation2 + $0xd4] sm:$0xf] %vm650, 0
    %686 = vst [vmem:[#allocation2 + $0xd8] sm:$0xff] 0
    %687 = vst.msk [vmem:[#allocation2 + $0xe0] sm:$0xf] %vm650, 0
    %688 = vst [vmem:[#allocation2 + $0xe4] sm:$0xff] 0
    %689 = vst.msk [vmem:[#allocation2 + $0xec] sm:$0xf] %vm650, 0
    %690 = vst [vmem:[#allocation2 + $0xf0] sm:$0xff] 0
    %691 = vst.msk [vmem:[#allocation2 + $0xf8] sm:$0xf] %vm650, 0
    %692 = vst [vmem:[#allocation2 + $0xfc] sm:$0xff] 0
    %693 = vst.msk [vmem:[#allocation2 + $0x104] sm:$0xf] %vm650, 0
    %694 = vst [vmem:[#allocation2 + $0x108] sm:$0xff] 0
    %695 = vst.msk [vmem:[#allocation2 + $0x110] sm:$0xf] %vm650, 0
    %696 = vst [vmem:[#allocation2 + $0x114] sm:$0xff] 0
    %697 = vst.msk [vmem:[#allocation2 + $0x11c] sm:$0xf] %vm650, 0
    %698 = vst [vmem:[#allocation2 + $0x120] sm:$0xff] 0
    %699 = vst.msk [vmem:[#allocation2 + $0x128] sm:$0xf] %vm650, 0
    %700 = vst [vmem:[#allocation2 + $0x12c] sm:$0xff] 0
    %701 = vst.msk [vmem:[#allocation2 + $0x134] sm:$0xf] %vm650, 0
    %702 = vst [vmem:[#allocation2 + $0x138] sm:$0xff] 0
    %703 = vst.msk [vmem:[#allocation2 + $0x140] sm:$0xf] %vm650, 0
    %704 = vst [vmem:[#allocation2 + $0x144] sm:$0xff] 0
    %705 = vst.msk [vmem:[#allocation2 + $0x14c] sm:$0xf] %vm650, 0
    %706 = vst [vmem:[#allocation2 + $0x150] sm:$0xff] 0
    %707 = vst.msk [vmem:[#allocation2 + $0x158] sm:$0xf] %vm650, 0
    %708 = vst [vmem:[#allocation2 + $0x15c] sm:$0xff] 0
    %709 = vst.msk [vmem:[#allocation2 + $0x164] sm:$0xf] %vm650, 0
    %710 = vst [vmem:[#allocation2 + $0x168] sm:$0xff] 0
    %711 = vst.msk [vmem:[#allocation2 + $0x170] sm:$0xf] %vm650, 0
    %712 = vst [vmem:[#allocation2 + $0x174] sm:$0xff] 0
    %713 = vst.msk [vmem:[#allocation2 + $0x17c] sm:$0xf] %vm650, 0
    %714 = vst [vmem:[#allocation2 + $0x180] sm:$0xff] 0
    %715 = vst.msk [vmem:[#allocation2 + $0x188] sm:$0xf] %vm650, 0
    %716 = vst [vmem:[#allocation2 + $0x18c] sm:$0xff] 0
    %717 = vst.msk [vmem:[#allocation2 + $0x194] sm:$0xf] %vm650, 0
    %718 = vst [vmem:[#allocation2 + $0x198] sm:$0xff] 0
    %719 = vst.msk [vmem:[#allocation2 + $0x1a0] sm:$0xf] %vm650, 0
    %720 = vst [vmem:[#allocation2 + $0x1a4] sm:$0xff] 0
    %721 = vst.msk [vmem:[#allocation2 + $0x1ac] sm:$0xf] %vm650, 0
    %722 = vst [vmem:[#allocation2 + $0x1b0] sm:$0xff] 0
    %723 = vst.msk [vmem:[#allocation2 + $0x1b8] sm:$0xf] %vm650, 0
    %724 = vst [vmem:[#allocation2 + $0x1bc] sm:$0xff] 0
    %725 = vst.msk [vmem:[#allocation2 + $0x1c4] sm:$0xf] %vm650, 0
    %726 = vst [vmem:[#allocation2 + $0x1c8] sm:$0xff] 0
    %727 = vst.msk [vmem:[#allocation2 + $0x1d0] sm:$0xf] %vm650, 0
    %728 = vst [vmem:[#allocation2 + $0x1d4] sm:$0xff] 0
    %729 = vst.msk [vmem:[#allocation2 + $0x1dc] sm:$0xf] %vm650, 0
    %730 = vst [vmem:[#allocation2 + $0x1e0] sm:$0xff] 0
    %731 = vst.msk [vmem:[#allocation2 + $0x1e8] sm:$0xf] %vm650, 0
    %732 = vst [vmem:[#allocation2 + $0x1ec] sm:$0xff] 0
    %733 = vst.msk [vmem:[#allocation2 + $0x1f4] sm:$0xf] %vm650, 0
    %734 = vst [vmem:[#allocation2 + $0x1f8] sm:$0xff] 0
    %735 = vst.msk [vmem:[#allocation2 + $0x200] sm:$0xf] %vm650, 0
    %736 = vst [vmem:[#allocation2 + $0x204] sm:$0xff] 0
    %737 = vst.msk [vmem:[#allocation2 + $0x20c] sm:$0xf] %vm650, 0
    %738 = vst [vmem:[#allocation2 + $0x210] sm:$0xff] 0
    %739 = vst.msk [vmem:[#allocation2 + $0x218] sm:$0xf] %vm650, 0
    %740 = vst [vmem:[#allocation2 + $0x21c] sm:$0xff] 0
    %741 = vst.msk [vmem:[#allocation2 + $0x224] sm:$0xf] %vm650, 0
    %742 = vst [vmem:[#allocation2 + $0x228] sm:$0xff] 0
    %743 = vst.msk [vmem:[#allocation2 + $0x230] sm:$0xf] %vm650, 0
    %744 = vst [vmem:[#allocation2 + $0x234] sm:$0xff] 0
    %745 = vst.msk [vmem:[#allocation2 + $0x23c] sm:$0xf] %vm650, 0
    %746 = vst [vmem:[#allocation2 + $0x240] sm:$0xff] 0
    %747 = vst.msk [vmem:[#allocation2 + $0x248] sm:$0xf] %vm650, 0
    %748 = vst [vmem:[#allocation2 + $0x24c] sm:$0xff] 0
    %749 = vst.msk [vmem:[#allocation2 + $0x254] sm:$0xf] %vm650, 0
    %750 = vst [vmem:[#allocation2 + $0x258] sm:$0xff] 0
    %751 = vst.msk [vmem:[#allocation2 + $0x260] sm:$0xf] %vm650, 0
    %752 = vst [vmem:[#allocation2 + $0x264] sm:$0xff] 0
    %753 = vst.msk [vmem:[#allocation2 + $0x26c] sm:$0xf] %vm650, 0
    %754 = vst [vmem:[#allocation2 + $0x270] sm:$0xff] 0
    %755 = vst.msk [vmem:[#allocation2 + $0x278] sm:$0xf] %vm650, 0
    %756 = vst [vmem:[#allocation2 + $0x27c] sm:$0xff] 0
    %757 = vst.msk [vmem:[#allocation2 + $0x284] sm:$0xf] %vm650, 0
    %758 = vst [vmem:[#allocation2 + $0x288] sm:$0xff] 0
    %759 = vst.msk [vmem:[#allocation2 + $0x290] sm:$0xf] %vm650, 0
    %760 = vst [vmem:[#allocation2 + $0x294] sm:$0xff] 0
    %761 = vst.msk [vmem:[#allocation2 + $0x29c] sm:$0xf] %vm650, 0
    %762 = vst [vmem:[#allocation2 + $0x2a0] sm:$0xff] 0
    %763 = vst.msk [vmem:[#allocation2 + $0x2a8] sm:$0xf] %vm650, 0
    %764 = vst [vmem:[#allocation2 + $0x2ac] sm:$0xff] 0
    %765 = vst.msk [vmem:[#allocation2 + $0x2b4] sm:$0xf] %vm650, 0
    %766 = vst [vmem:[#allocation2 + $0x2b8] sm:$0xff] 0
    %767 = vst.msk [vmem:[#allocation2 + $0x2c0] sm:$0xf] %vm650, 0
    %768 = vst [vmem:[#allocation2 + $0x2c4] sm:$0xff] 0
    %769 = vst.msk [vmem:[#allocation2 + $0x2cc] sm:$0xf] %vm650, 0
    %770 = vst [vmem:[#allocation2 + $0x2d0] sm:$0xff] 0
    %771 = vst.msk [vmem:[#allocation2 + $0x2d8] sm:$0xf] %vm650, 0
    %772 = vst [vmem:[#allocation2 + $0x2dc] sm:$0xff] 0
    %773 = vst.msk [vmem:[#allocation2 + $0x2e4] sm:$0xf] %vm650, 0
    %774 = vst [vmem:[#allocation2 + $0x2e8] sm:$0xff] 0
    %775 = vst.msk [vmem:[#allocation2 + $0x2f0] sm:$0xf] %vm650, 0
    %776 = vst [vmem:[#allocation2 + $0x2f4] sm:$0xff] 0
    %777 = vst.msk [vmem:[#allocation2 + $0x2fc] sm:$0xf] %vm650, 0
    %vm778 = vsmask.f32 256
    %vm779 = vsmask.f32 4368
    %vm780 = vmor %vm778, %vm779
    %v782 = vshrl.u32 %v585, 16
    %v784 = vrot.slane %v782, 7
    %v785 = vshll.u32 %v585, 16
    %v787 = vor.u32 %v784, %v785
    %v788 = vrot.slane %v784, 4
    %v790 = vshrl.u32 %v586, 16
    %v792 = vrot.slane %v790, 7
    %v793 = vshll.u32 %v586, 16
    %v795 = vor.u32 %v792, %v793
    %v796 = vsel %vm780, %v788, %v795
    %v798 = vshrl.u32 %v587, 16
    %v800 = vrot.slane %v798, 7
    %v801 = vshll.u32 %v587, 16
    %v803 = vor.u32 %v800, %v801
    %v804 = vrot.slane %v800, 4
    %v806 = vshrl.u32 %v588, 16
    %v808 = vrot.slane %v806, 7
    %v809 = vshll.u32 %v588, 16
    %v811 = vor.u32 %v808, %v809
    %v812 = vsel %vm780, %v804, %v811
    %v814 = vshrl.u32 %v589, 16
    %v816 = vrot.slane %v814, 7
    %v817 = vshll.u32 %v589, 16
    %v819 = vor.u32 %v816, %v817
    %v820 = vrot.slane %v816, 4
    %v822 = vshrl.u32 %v590, 16
    %v824 = vrot.slane %v822, 7
    %v825 = vshll.u32 %v590, 16
    %v827 = vor.u32 %v824, %v825
    %v828 = vsel %vm780, %v820, %v827
    %v830 = vshrl.u32 %v591, 16
    %v832 = vrot.slane %v830, 7
    %v833 = vshll.u32 %v591, 16
    %v835 = vor.u32 %v832, %v833
    %v836 = vrot.slane %v832, 4
    %v838 = vshrl.u32 %v592, 16
    %v840 = vrot.slane %v838, 7
    %v841 = vshll.u32 %v592, 16
    %v843 = vor.u32 %v840, %v841
    %v844 = vsel %vm780, %v836, %v843
    %v846 = vshrl.u32 %v593, 16
    %v848 = vrot.slane %v846, 7
    %v849 = vshll.u32 %v593, 16
    %v851 = vor.u32 %v848, %v849
    %v852 = vrot.slane %v848, 4
    %v854 = vshrl.u32 %v594, 16
    %v856 = vrot.slane %v854, 7
    %v857 = vshll.u32 %v594, 16
    %v859 = vor.u32 %v856, %v857
    %v860 = vsel %vm780, %v852, %v859
    %v862 = vshrl.u32 %v595, 16
    %v864 = vrot.slane %v862, 7
    %v865 = vshll.u32 %v595, 16
    %v867 = vor.u32 %v864, %v865
    %v868 = vrot.slane %v864, 4
    %v870 = vshrl.u32 %v596, 16
    %v872 = vrot.slane %v870, 7
    %v873 = vshll.u32 %v596, 16
    %v875 = vor.u32 %v872, %v873
    %v876 = vsel %vm780, %v868, %v875
    %v878 = vshrl.u32 %v597, 16
    %v880 = vrot.slane %v878, 7
    %v881 = vshll.u32 %v597, 16
    %v883 = vor.u32 %v880, %v881
    %v884 = vrot.slane %v880, 4
    %v886 = vshrl.u32 %v598, 16
    %v888 = vrot.slane %v886, 7
    %v889 = vshll.u32 %v598, 16
    %v891 = vor.u32 %v888, %v889
    %v892 = vsel %vm780, %v884, %v891
    %v894 = vshrl.u32 %v599, 16
    %v896 = vrot.slane %v894, 7
    %v897 = vshll.u32 %v599, 16
    %v899 = vor.u32 %v896, %v897
    %v900 = vrot.slane %v896, 4
    %v902 = vshrl.u32 %v600, 16
    %v904 = vrot.slane %v902, 7
    %v905 = vshll.u32 %v600, 16
    %v907 = vor.u32 %v904, %v905
    %v908 = vsel %vm780, %v900, %v907
    %v910 = vshrl.u32 %v601, 16
    %v912 = vrot.slane %v910, 7
    %v913 = vshll.u32 %v601, 16
    %v915 = vor.u32 %v912, %v913
    %v916 = vrot.slane %v912, 4
    %v918 = vshrl.u32 %v602, 16
    %v920 = vrot.slane %v918, 7
    %v921 = vshll.u32 %v602, 16
    %v923 = vor.u32 %v920, %v921
    %v924 = vsel %vm780, %v916, %v923
    %v926 = vshrl.u32 %v603, 16
    %v928 = vrot.slane %v926, 7
    %v929 = vshll.u32 %v603, 16
    %v931 = vor.u32 %v928, %v929
    %v932 = vrot.slane %v928, 4
    %v934 = vshrl.u32 %v604, 16
    %v936 = vrot.slane %v934, 7
    %v937 = vshll.u32 %v604, 16
    %v939 = vor.u32 %v936, %v937
    %v940 = vsel %vm780, %v932, %v939
    %v942 = vshrl.u32 %v605, 16
    %v944 = vrot.slane %v942, 7
    %v945 = vshll.u32 %v605, 16
    %v947 = vor.u32 %v944, %v945
    %v948 = vrot.slane %v944, 4
    %v950 = vshrl.u32 %v606, 16
    %v952 = vrot.slane %v950, 7
    %v953 = vshll.u32 %v606, 16
    %v955 = vor.u32 %v952, %v953
    %v956 = vsel %vm780, %v948, %v955
    %v958 = vshrl.u32 %v607, 16
    %v960 = vrot.slane %v958, 7
    %v961 = vshll.u32 %v607, 16
    %v963 = vor.u32 %v960, %v961
    %v964 = vrot.slane %v960, 4
    %v966 = vshrl.u32 %v608, 16
    %v968 = vrot.slane %v966, 7
    %v969 = vshll.u32 %v608, 16
    %v971 = vor.u32 %v968, %v969
    %v972 = vsel %vm780, %v964, %v971
    %v974 = vshrl.u32 %v609, 16
    %v976 = vrot.slane %v974, 7
    %v977 = vshll.u32 %v609, 16
    %v979 = vor.u32 %v976, %v977
    %v980 = vrot.slane %v976, 4
    %v982 = vshrl.u32 %v610, 16
    %v984 = vrot.slane %v982, 7
    %v985 = vshll.u32 %v610, 16
    %v987 = vor.u32 %v984, %v985
    %v988 = vsel %vm780, %v980, %v987
    %v990 = vshrl.u32 %v611, 16
    %v992 = vrot.slane %v990, 7
    %v993 = vshll.u32 %v611, 16
    %v995 = vor.u32 %v992, %v993
    %v996 = vrot.slane %v992, 4
    %v998 = vshrl.u32 %v612, 16
    %v1000 = vrot.slane %v998, 7
    %v1001 = vshll.u32 %v612, 16
    %v1003 = vor.u32 %v1000, %v1001
    %v1004 = vsel %vm780, %v996, %v1003
    %v1006 = vshrl.u32 %v613, 16
    %v1008 = vrot.slane %v1006, 7
    %v1009 = vshll.u32 %v613, 16
    %v1011 = vor.u32 %v1008, %v1009
    %v1012 = vrot.slane %v1008, 4
    %v1014 = vshrl.u32 %v614, 16
    %v1016 = vrot.slane %v1014, 7
    %v1017 = vshll.u32 %v614, 16
    %v1019 = vor.u32 %v1016, %v1017
    %v1020 = vsel %vm780, %v1012, %v1019
    %v1022 = vshrl.u32 %v617, 16
    %v1024 = vrot.slane %v1022, 7
    %v1025 = vshll.u32 %v617, 16
    %v1027 = vor.u32 %v1024, %v1025
    %v1028 = vrot.slane %v1024, 4
    %v1030 = vshrl.u32 %v618, 16
    %v1032 = vrot.slane %v1030, 7
    %v1033 = vshll.u32 %v618, 16
    %v1035 = vor.u32 %v1032, %v1033
    %v1036 = vsel %vm780, %v1028, %v1035
    %v1038 = vshrl.u32 %v619, 16
    %v1040 = vrot.slane %v1038, 7
    %v1041 = vshll.u32 %v619, 16
    %v1043 = vor.u32 %v1040, %v1041
    %v1044 = vrot.slane %v1040, 4
    %v1046 = vshrl.u32 %v620, 16
    %v1048 = vrot.slane %v1046, 7
    %v1049 = vshll.u32 %v620, 16
    %v1051 = vor.u32 %v1048, %v1049
    %v1052 = vsel %vm780, %v1044, %v1051
    %v1054 = vshrl.u32 %v621, 16
    %v1056 = vrot.slane %v1054, 7
    %v1057 = vshll.u32 %v621, 16
    %v1059 = vor.u32 %v1056, %v1057
    %v1060 = vrot.slane %v1056, 4
    %v1062 = vshrl.u32 %v622, 16
    %v1064 = vrot.slane %v1062, 7
    %v1065 = vshll.u32 %v622, 16
    %v1067 = vor.u32 %v1064, %v1065
    %v1068 = vsel %vm780, %v1060, %v1067
    %v1070 = vshrl.u32 %v623, 16
    %v1072 = vrot.slane %v1070, 7
    %v1073 = vshll.u32 %v623, 16
    %v1075 = vor.u32 %v1072, %v1073
    %v1076 = vrot.slane %v1072, 4
    %v1078 = vshrl.u32 %v624, 16
    %v1080 = vrot.slane %v1078, 7
    %v1081 = vshll.u32 %v624, 16
    %v1083 = vor.u32 %v1080, %v1081
    %v1084 = vsel %vm780, %v1076, %v1083
    %v1086 = vshrl.u32 %v625, 16
    %v1088 = vrot.slane %v1086, 7
    %v1089 = vshll.u32 %v625, 16
    %v1091 = vor.u32 %v1088, %v1089
    %v1092 = vrot.slane %v1088, 4
    %v1094 = vshrl.u32 %v626, 16
    %v1096 = vrot.slane %v1094, 7
    %v1097 = vshll.u32 %v626, 16
    %v1099 = vor.u32 %v1096, %v1097
    %v1100 = vsel %vm780, %v1092, %v1099
    %v1102 = vshrl.u32 %v627, 16
    %v1104 = vrot.slane %v1102, 7
    %v1105 = vshll.u32 %v627, 16
    %v1107 = vor.u32 %v1104, %v1105
    %v1108 = vrot.slane %v1104, 4
    %v1110 = vshrl.u32 %v628, 16
    %v1112 = vrot.slane %v1110, 7
    %v1113 = vshll.u32 %v628, 16
    %v1115 = vor.u32 %v1112, %v1113
    %v1116 = vsel %vm780, %v1108, %v1115
    %v1118 = vshrl.u32 %v629, 16
    %v1120 = vrot.slane %v1118, 7
    %v1121 = vshll.u32 %v629, 16
    %v1123 = vor.u32 %v1120, %v1121
    %v1124 = vrot.slane %v1120, 4
    %v1126 = vshrl.u32 %v630, 16
    %v1128 = vrot.slane %v1126, 7
    %v1129 = vshll.u32 %v630, 16
    %v1131 = vor.u32 %v1128, %v1129
    %v1132 = vsel %vm780, %v1124, %v1131
    %v1134 = vshrl.u32 %v631, 16
    %v1136 = vrot.slane %v1134, 7
    %v1137 = vshll.u32 %v631, 16
    %v1139 = vor.u32 %v1136, %v1137
    %v1140 = vrot.slane %v1136, 4
    %v1142 = vshrl.u32 %v632, 16
    %v1144 = vrot.slane %v1142, 7
    %v1145 = vshll.u32 %v632, 16
    %v1147 = vor.u32 %v1144, %v1145
    %v1148 = vsel %vm780, %v1140, %v1147
    %v1150 = vshrl.u32 %v633, 16
    %v1152 = vrot.slane %v1150, 7
    %v1153 = vshll.u32 %v633, 16
    %v1155 = vor.u32 %v1152, %v1153
    %v1156 = vrot.slane %v1152, 4
    %v1158 = vshrl.u32 %v634, 16
    %v1160 = vrot.slane %v1158, 7
    %v1161 = vshll.u32 %v634, 16
    %v1163 = vor.u32 %v1160, %v1161
    %v1164 = vsel %vm780, %v1156, %v1163
    %v1166 = vshrl.u32 %v635, 16
    %v1168 = vrot.slane %v1166, 7
    %v1169 = vshll.u32 %v635, 16
    %v1171 = vor.u32 %v1168, %v1169
    %v1172 = vrot.slane %v1168, 4
    %v1174 = vshrl.u32 %v636, 16
    %v1176 = vrot.slane %v1174, 7
    %v1177 = vshll.u32 %v636, 16
    %v1179 = vor.u32 %v1176, %v1177
    %v1180 = vsel %vm780, %v1172, %v1179
    %v1182 = vshrl.u32 %v637, 16
    %v1184 = vrot.slane %v1182, 7
    %v1185 = vshll.u32 %v637, 16
    %v1187 = vor.u32 %v1184, %v1185
    %v1188 = vrot.slane %v1184, 4
    %v1190 = vshrl.u32 %v638, 16
    %v1192 = vrot.slane %v1190, 7
    %v1193 = vshll.u32 %v638, 16
    %v1195 = vor.u32 %v1192, %v1193
    %v1196 = vsel %vm780, %v1188, %v1195
    %v1198 = vshrl.u32 %v639, 16
    %v1200 = vrot.slane %v1198, 7
    %v1201 = vshll.u32 %v639, 16
    %v1203 = vor.u32 %v1200, %v1201
    %v1204 = vrot.slane %v1200, 4
    %v1206 = vshrl.u32 %v640, 16
    %v1208 = vrot.slane %v1206, 7
    %v1209 = vshll.u32 %v640, 16
    %v1211 = vor.u32 %v1208, %v1209
    %v1212 = vsel %vm780, %v1204, %v1211
    %v1214 = vshrl.u32 %v641, 16
    %v1216 = vrot.slane %v1214, 7
    %v1217 = vshll.u32 %v641, 16
    %v1219 = vor.u32 %v1216, %v1217
    %v1220 = vrot.slane %v1216, 4
    %v1222 = vshrl.u32 %v642, 16
    %v1224 = vrot.slane %v1222, 7
    %v1225 = vshll.u32 %v642, 16
    %v1227 = vor.u32 %v1224, %v1225
    %v1228 = vsel %vm780, %v1220, %v1227
    %v1230 = vshrl.u32 %v643, 16
    %v1232 = vrot.slane %v1230, 7
    %v1233 = vshll.u32 %v643, 16
    %v1235 = vor.u32 %v1232, %v1233
    %v1236 = vrot.slane %v1232, 4
    %v1238 = vshrl.u32 %v644, 16
    %v1240 = vrot.slane %v1238, 7
    %v1241 = vshll.u32 %v644, 16
    %v1243 = vor.u32 %v1240, %v1241
    %v1244 = vsel %vm780, %v1236, %v1243
    %v1246 = vshrl.u32 %v645, 16
    %v1248 = vrot.slane %v1246, 7
    %v1249 = vshll.u32 %v645, 16
    %v1251 = vor.u32 %v1248, %v1249
    %v1252 = vrot.slane %v1248, 4
    %v1254 = vshrl.u32 %v646, 16
    %v1256 = vrot.slane %v1254, 7
    %v1257 = vshll.u32 %v646, 16
    %v1259 = vor.u32 %v1256, %v1257
    %v1260 = vsel %vm780, %v1252, %v1259
    %s1321 = scalar_lea.vmem [#allocation2], 24
    %vm1322 = vcmask 257024
    %vm1323 = vsmask.f32 7938
    %vm1324 = vmand %vm1322, %vm1323
    %v1325 = vld [vmem:[%s1321] sm:$0xf]
    %v1326 = vsel %vm1324, %v787, %v1325
    %1327 = vst [vmem:[%s1321] sm:$0xf] %v1326
    %1328 = vst.msk [vmem:[%s1321 + $0xc] sm:$0xf] %vm650, %v796
    %v1329 = vld [vmem:[%s1321 + $0x18] sm:$0xf]
    %v1330 = vsel %vm1324, %v803, %v1329
    %1331 = vst [vmem:[%s1321 + $0x18] sm:$0xf] %v1330
    %1332 = vst.msk [vmem:[%s1321 + $0x24] sm:$0xf] %vm650, %v812
    %v1333 = vld [vmem:[%s1321 + $0x30] sm:$0xf]
    %v1334 = vsel %vm1324, %v819, %v1333
    %1335 = vst [vmem:[%s1321 + $0x30] sm:$0xf] %v1334
    %1336 = vst.msk [vmem:[%s1321 + $0x3c] sm:$0xf] %vm650, %v828
    %v1337 = vld [vmem:[%s1321 + $0x48] sm:$0xf]
    %v1338 = vsel %vm1324, %v835, %v1337
    %1339 = vst [vmem:[%s1321 + $0x48] sm:$0xf] %v1338
    %1340 = vst.msk [vmem:[%s1321 + $0x54] sm:$0xf] %vm650, %v844
    %v1341 = vld [vmem:[%s1321 + $0x60] sm:$0xf]
    %v1342 = vsel %vm1324, %v851, %v1341
    %1343 = vst [vmem:[%s1321 + $0x60] sm:$0xf] %v1342
    %1344 = vst.msk [vmem:[%s1321 + $0x6c] sm:$0xf] %vm650, %v860
    %v1345 = vld [vmem:[%s1321 + $0x78] sm:$0xf]
    %v1346 = vsel %vm1324, %v867, %v1345
    %1347 = vst [vmem:[%s1321 + $0x78] sm:$0xf] %v1346
    %1348 = vst.msk [vmem:[%s1321 + $0x84] sm:$0xf] %vm650, %v876
    %v1349 = vld [vmem:[%s1321 + $0x90] sm:$0xf]
    %v1350 = vsel %vm1324, %v883, %v1349
    %1351 = vst [vmem:[%s1321 + $0x90] sm:$0xf] %v1350
    %1352 = vst.msk [vmem:[%s1321 + $0x9c] sm:$0xf] %vm650, %v892
    %v1353 = vld [vmem:[%s1321 + $0xa8] sm:$0xf]
    %v1354 = vsel %vm1324, %v899, %v1353
    %1355 = vst [vmem:[%s1321 + $0xa8] sm:$0xf] %v1354
    %1356 = vst.msk [vmem:[%s1321 + $0xb4] sm:$0xf] %vm650, %v908
    %v1357 = vld [vmem:[%s1321 + $0xc0] sm:$0xf]
    %v1358 = vsel %vm1324, %v915, %v1357
    %1359 = vst [vmem:[%s1321 + $0xc0] sm:$0xf] %v1358
    %1360 = vst.msk [vmem:[%s1321 + $0xcc] sm:$0xf] %vm650, %v924
    %v1361 = vld [vmem:[%s1321 + $0xd8] sm:$0xf]
    %v1362 = vsel %vm1324, %v931, %v1361
    %1363 = vst [vmem:[%s1321 + $0xd8] sm:$0xf] %v1362
    %1364 = vst.msk [vmem:[%s1321 + $0xe4] sm:$0xf] %vm650, %v940
    %v1365 = vld [vmem:[%s1321 + $0xf0] sm:$0xf]
    %v1366 = vsel %vm1324, %v947, %v1365
    %1367 = vst [vmem:[%s1321 + $0xf0] sm:$0xf] %v1366
    %1368 = vst.msk [vmem:[%s1321 + $0xfc] sm:$0xf] %vm650, %v956
    %v1369 = vld [vmem:[%s1321 + $0x108] sm:$0xf]
    %v1370 = vsel %vm1324, %v963, %v1369
    %1371 = vst [vmem:[%s1321 + $0x108] sm:$0xf] %v1370
    %1372 = vst.msk [vmem:[%s1321 + $0x114] sm:$0xf] %vm650, %v972
    %v1373 = vld [vmem:[%s1321 + $0x120] sm:$0xf]
    %v1374 = vsel %vm1324, %v979, %v1373
    %1375 = vst [vmem:[%s1321 + $0x120] sm:$0xf] %v1374
    %1376 = vst.msk [vmem:[%s1321 + $0x12c] sm:$0xf] %vm650, %v988
    %v1377 = vld [vmem:[%s1321 + $0x138] sm:$0xf]
    %v1378 = vsel %vm1324, %v995, %v1377
    %1379 = vst [vmem:[%s1321 + $0x138] sm:$0xf] %v1378
    %1380 = vst.msk [vmem:[%s1321 + $0x144] sm:$0xf] %vm650, %v1004
    %v1381 = vld [vmem:[%s1321 + $0x150] sm:$0xf]
    %v1382 = vsel %vm1324, %v1011, %v1381
    %1383 = vst [vmem:[%s1321 + $0x150] sm:$0xf] %v1382
    %1384 = vst.msk [vmem:[%s1321 + $0x15c] sm:$0xf] %vm650, %v1020
    %v1385 = vld [vmem:[%s1321 + $0x180] sm:$0xf]
    %v1386 = vsel %vm1324, %v1027, %v1385
    %1387 = vst [vmem:[%s1321 + $0x180] sm:$0xf] %v1386
    %1388 = vst.msk [vmem:[%s1321 + $0x18c] sm:$0xf] %vm650, %v1036
    %v1389 = vld [vmem:[%s1321 + $0x198] sm:$0xf]
    %v1390 = vsel %vm1324, %v1043, %v1389
    %1391 = vst [vmem:[%s1321 + $0x198] sm:$0xf] %v1390
    %1392 = vst.msk [vmem:[%s1321 + $0x1a4] sm:$0xf] %vm650, %v1052
    %v1393 = vld [vmem:[%s1321 + $0x1b0] sm:$0xf]
    %v1394 = vsel %vm1324, %v1059, %v1393
    %1395 = vst [vmem:[%s1321 + $0x1b0] sm:$0xf] %v1394
    %1396 = vst.msk [vmem:[%s1321 + $0x1bc] sm:$0xf] %vm650, %v1068
    %v1397 = vld [vmem:[%s1321 + $0x1c8] sm:$0xf]
    %v1398 = vsel %vm1324, %v1075, %v1397
    %1399 = vst [vmem:[%s1321 + $0x1c8] sm:$0xf] %v1398
    %1400 = vst.msk [vmem:[%s1321 + $0x1d4] sm:$0xf] %vm650, %v1084
    %v1401 = vld [vmem:[%s1321 + $0x1e0] sm:$0xf]
    %v1402 = vsel %vm1324, %v1091, %v1401
    %1403 = vst [vmem:[%s1321 + $0x1e0] sm:$0xf] %v1402
    %1404 = vst.msk [vmem:[%s1321 + $0x1ec] sm:$0xf] %vm650, %v1100
    %v1405 = vld [vmem:[%s1321 + $0x1f8] sm:$0xf]
    %v1406 = vsel %vm1324, %v1107, %v1405
    %1407 = vst [vmem:[%s1321 + $0x1f8] sm:$0xf] %v1406
    %1408 = vst.msk [vmem:[%s1321 + $0x204] sm:$0xf] %vm650, %v1116
    %v1409 = vld [vmem:[%s1321 + $0x210] sm:$0xf]
    %v1410 = vsel %vm1324, %v1123, %v1409
    %1411 = vst [vmem:[%s1321 + $0x210] sm:$0xf] %v1410
    %1412 = vst.msk [vmem:[%s1321 + $0x21c] sm:$0xf] %vm650, %v1132
    %v1413 = vld [vmem:[%s1321 + $0x228] sm:$0xf]
    %v1414 = vsel %vm1324, %v1139, %v1413
    %1415 = vst [vmem:[%s1321 + $0x228] sm:$0xf] %v1414
    %1416 = vst.msk [vmem:[%s1321 + $0x234] sm:$0xf] %vm650, %v1148
    %v1417 = vld [vmem:[%s1321 + $0x240] sm:$0xf]
    %v1418 = vsel %vm1324, %v1155, %v1417
    %1419 = vst [vmem:[%s1321 + $0x240] sm:$0xf] %v1418
    %1420 = vst.msk [vmem:[%s1321 + $0x24c] sm:$0xf] %vm650, %v1164
    %v1421 = vld [vmem:[%s1321 + $0x258] sm:$0xf]
    %v1422 = vsel %vm1324, %v1171, %v1421
    %1423 = vst [vmem:[%s1321 + $0x258] sm:$0xf] %v1422
    %1424 = vst.msk [vmem:[%s1321 + $0x264] sm:$0xf] %vm650, %v1180
    %v1425 = vld [vmem:[%s1321 + $0x270] sm:$0xf]
    %v1426 = vsel %vm1324, %v1187, %v1425
    %1427 = vst [vmem:[%s1321 + $0x270] sm:$0xf] %v1426
    %1428 = vst.msk [vmem:[%s1321 + $0x27c] sm:$0xf] %vm650, %v1196
    %v1429 = vld [vmem:[%s1321 + $0x288] sm:$0xf]
    %v1430 = vsel %vm1324, %v1203, %v1429
    %1431 = vst [vmem:[%s1321 + $0x288] sm:$0xf] %v1430
    %1432 = vst.msk [vmem:[%s1321 + $0x294] sm:$0xf] %vm650, %v1212
    %v1433 = vld [vmem:[%s1321 + $0x2a0] sm:$0xf]
    %v1434 = vsel %vm1324, %v1219, %v1433
    %1435 = vst [vmem:[%s1321 + $0x2a0] sm:$0xf] %v1434
    %1436 = vst.msk [vmem:[%s1321 + $0x2ac] sm:$0xf] %vm650, %v1228
    %v1437 = vld [vmem:[%s1321 + $0x2b8] sm:$0xf]
    %v1438 = vsel %vm1324, %v1235, %v1437
    %1439 = vst [vmem:[%s1321 + $0x2b8] sm:$0xf] %v1438
    %1440 = vst.msk [vmem:[%s1321 + $0x2c4] sm:$0xf] %vm650, %v1244
    %v1441 = vld [vmem:[%s1321 + $0x2d0] sm:$0xf]
    %v1442 = vsel %vm1324, %v1251, %v1441
    %1443 = vst [vmem:[%s1321 + $0x2d0] sm:$0xf] %v1442
    %1444 = vst.msk [vmem:[%s1321 + $0x2dc] sm:$0xf] %vm650, %v1260
    %1505 = vrot.lane.b32.xlu0 %v585, 32
    %v1506 = vpop.permute.xlu0 %1505
    %1507 = vrot.lane.b32.xlu0 %v586, 32
    %v1508 = vpop.permute.xlu0 %1507
    %1509 = vrot.lane.b32.xlu0 %v587, 32
    %v1510 = vpop.permute.xlu0 %1509
    %1511 = vrot.lane.b32.xlu0 %v588, 32
    %v1512 = vpop.permute.xlu0 %1511
    %1513 = vrot.lane.b32.xlu0 %v589, 32
    %v1514 = vpop.permute.xlu0 %1513
    %1515 = vrot.lane.b32.xlu0 %v590, 32
    %v1516 = vpop.permute.xlu0 %1515
    %1517 = vrot.lane.b32.xlu0 %v591, 32
    %v1518 = vpop.permute.xlu0 %1517
    %1519 = vrot.lane.b32.xlu0 %v592, 32
    %v1520 = vpop.permute.xlu0 %1519
    %1521 = vrot.lane.b32.xlu0 %v593, 32
    %v1522 = vpop.permute.xlu0 %1521
    %1523 = vrot.lane.b32.xlu0 %v594, 32
    %v1524 = vpop.permute.xlu0 %1523
    %1525 = vrot.lane.b32.xlu0 %v595, 32
    %v1526 = vpop.permute.xlu0 %1525
    %1527 = vrot.lane.b32.xlu0 %v596, 32
    %v1528 = vpop.permute.xlu0 %1527
    %1529 = vrot.lane.b32.xlu0 %v597, 32
    %v1530 = vpop.permute.xlu0 %1529
    %1531 = vrot.lane.b32.xlu0 %v598, 32
    %v1532 = vpop.permute.xlu0 %1531
    %1533 = vrot.lane.b32.xlu0 %v599, 32
    %v1534 = vpop.permute.xlu0 %1533
    %1535 = vrot.lane.b32.xlu0 %v600, 32
    %v1536 = vpop.permute.xlu0 %1535
    %1537 = vrot.lane.b32.xlu0 %v601, 32
    %v1538 = vpop.permute.xlu0 %1537
    %1539 = vrot.lane.b32.xlu0 %v602, 32
    %v1540 = vpop.permute.xlu0 %1539
    %1541 = vrot.lane.b32.xlu0 %v603, 32
    %v1542 = vpop.permute.xlu0 %1541
    %1543 = vrot.lane.b32.xlu0 %v604, 32
    %v1544 = vpop.permute.xlu0 %1543
    %1545 = vrot.lane.b32.xlu0 %v605, 32
    %v1546 = vpop.permute.xlu0 %1545
    %1547 = vrot.lane.b32.xlu0 %v606, 32
    %v1548 = vpop.permute.xlu0 %1547
    %1549 = vrot.lane.b32.xlu0 %v607, 32
    %v1550 = vpop.permute.xlu0 %1549
    %1551 = vrot.lane.b32.xlu0 %v608, 32
    %v1552 = vpop.permute.xlu0 %1551
    %1553 = vrot.lane.b32.xlu0 %v609, 32
    %v1554 = vpop.permute.xlu0 %1553
    %1555 = vrot.lane.b32.xlu0 %v610, 32
    %v1556 = vpop.permute.xlu0 %1555
    %1557 = vrot.lane.b32.xlu0 %v611, 32
    %v1558 = vpop.permute.xlu0 %1557
    %1559 = vrot.lane.b32.xlu0 %v612, 32
    %v1560 = vpop.permute.xlu0 %1559
    %1561 = vrot.lane.b32.xlu0 %v613, 32
    %v1562 = vpop.permute.xlu0 %1561
    %1563 = vrot.lane.b32.xlu0 %v614, 32
    %v1564 = vpop.permute.xlu0 %1563
    %1565 = vrot.lane.b32.xlu0 %v617, 32
    %v1566 = vpop.permute.xlu0 %1565
    %1567 = vrot.lane.b32.xlu0 %v618, 32
    %v1568 = vpop.permute.xlu0 %1567
    %1569 = vrot.lane.b32.xlu0 %v619, 32
    %v1570 = vpop.permute.xlu0 %1569
    %1571 = vrot.lane.b32.xlu0 %v620, 32
    %v1572 = vpop.permute.xlu0 %1571
    %1573 = vrot.lane.b32.xlu0 %v621, 32
    %v1574 = vpop.permute.xlu0 %1573
    %1575 = vrot.lane.b32.xlu0 %v622, 32
    %v1576 = vpop.permute.xlu0 %1575
    %1577 = vrot.lane.b32.xlu0 %v623, 32
    %v1578 = vpop.permute.xlu0 %1577
    %1579 = vrot.lane.b32.xlu0 %v624, 32
    %v1580 = vpop.permute.xlu0 %1579
    %1581 = vrot.lane.b32.xlu0 %v625, 32
    %v1582 = vpop.permute.xlu0 %1581
    %1583 = vrot.lane.b32.xlu0 %v626, 32
    %v1584 = vpop.permute.xlu0 %1583
    %1585 = vrot.lane.b32.xlu0 %v627, 32
    %v1586 = vpop.permute.xlu0 %1585
    %1587 = vrot.lane.b32.xlu0 %v628, 32
    %v1588 = vpop.permute.xlu0 %1587
    %1589 = vrot.lane.b32.xlu0 %v629, 32
    %v1590 = vpop.permute.xlu0 %1589
    %1591 = vrot.lane.b32.xlu0 %v630, 32
    %v1592 = vpop.permute.xlu0 %1591
    %1593 = vrot.lane.b32.xlu0 %v631, 32
    %v1594 = vpop.permute.xlu0 %1593
    %1595 = vrot.lane.b32.xlu0 %v632, 32
    %v1596 = vpop.permute.xlu0 %1595
    %1597 = vrot.lane.b32.xlu0 %v633, 32
    %v1598 = vpop.permute.xlu0 %1597
    %1599 = vrot.lane.b32.xlu0 %v634, 32
    %v1600 = vpop.permute.xlu0 %1599
    %1601 = vrot.lane.b32.xlu0 %v635, 32
    %v1602 = vpop.permute.xlu0 %1601
    %1603 = vrot.lane.b32.xlu0 %v636, 32
    %v1604 = vpop.permute.xlu0 %1603
    %1605 = vrot.lane.b32.xlu0 %v637, 32
    %v1606 = vpop.permute.xlu0 %1605
    %1607 = vrot.lane.b32.xlu0 %v638, 32
    %v1608 = vpop.permute.xlu0 %1607
    %1609 = vrot.lane.b32.xlu0 %v639, 32
    %v1610 = vpop.permute.xlu0 %1609
    %1611 = vrot.lane.b32.xlu0 %v640, 32
    %v1612 = vpop.permute.xlu0 %1611
    %1613 = vrot.lane.b32.xlu0 %v641, 32
    %v1614 = vpop.permute.xlu0 %1613
    %1615 = vrot.lane.b32.xlu0 %v642, 32
    %v1616 = vpop.permute.xlu0 %1615
    %1617 = vrot.lane.b32.xlu0 %v643, 32
    %v1618 = vpop.permute.xlu0 %1617
    %1619 = vrot.lane.b32.xlu0 %v644, 32
    %v1620 = vpop.permute.xlu0 %1619
    %1621 = vrot.lane.b32.xlu0 %v645, 32
    %v1622 = vpop.permute.xlu0 %1621
    %1623 = vrot.lane.b32.xlu0 %v646, 32
    %v1624 = vpop.permute.xlu0 %1623
    %vm1685 = vcmask 519424
    %1686 = vst.msk [vmem:[%s1321] sm:$0xf] %vm1685, %v1506
    %1687 = vst.msk [vmem:[%s1321 + $0xc] sm:$0xf] %vm1685, %v1508
    %1688 = vst.msk [vmem:[%s1321 + $0x18] sm:$0xf] %vm1685, %v1510
    %1689 = vst.msk [vmem:[%s1321 + $0x24] sm:$0xf] %vm1685, %v1512
    %1690 = vst.msk [vmem:[%s1321 + $0x30] sm:$0xf] %vm1685, %v1514
    %1691 = vst.msk [vmem:[%s1321 + $0x3c] sm:$0xf] %vm1685, %v1516
    %1692 = vst.msk [vmem:[%s1321 + $0x48] sm:$0xf] %vm1685, %v1518
    %1693 = vst.msk [vmem:[%s1321 + $0x54] sm:$0xf] %vm1685, %v1520
    %1694 = vst.msk [vmem:[%s1321 + $0x60] sm:$0xf] %vm1685, %v1522
    %1695 = vst.msk [vmem:[%s1321 + $0x6c] sm:$0xf] %vm1685, %v1524
    %1696 = vst.msk [vmem:[%s1321 + $0x78] sm:$0xf] %vm1685, %v1526
    %1697 = vst.msk [vmem:[%s1321 + $0x84] sm:$0xf] %vm1685, %v1528
    %1698 = vst.msk [vmem:[%s1321 + $0x90] sm:$0xf] %vm1685, %v1530
    %1699 = vst.msk [vmem:[%s1321 + $0x9c] sm:$0xf] %vm1685, %v1532
    %1700 = vst.msk [vmem:[%s1321 + $0xa8] sm:$0xf] %vm1685, %v1534
    %1701 = vst.msk [vmem:[%s1321 + $0xb4] sm:$0xf] %vm1685, %v1536
    %1702 = vst.msk [vmem:[%s1321 + $0xc0] sm:$0xf] %vm1685, %v1538
    %1703 = vst.msk [vmem:[%s1321 + $0xcc] sm:$0xf] %vm1685, %v1540
    %1704 = vst.msk [vmem:[%s1321 + $0xd8] sm:$0xf] %vm1685, %v1542
    %1705 = vst.msk [vmem:[%s1321 + $0xe4] sm:$0xf] %vm1685, %v1544
    %1706 = vst.msk [vmem:[%s1321 + $0xf0] sm:$0xf] %vm1685, %v1546
    %1707 = vst.msk [vmem:[%s1321 + $0xfc] sm:$0xf] %vm1685, %v1548
    %1708 = vst.msk [vmem:[%s1321 + $0x108] sm:$0xf] %vm1685, %v1550
    %1709 = vst.msk [vmem:[%s1321 + $0x114] sm:$0xf] %vm1685, %v1552
    %1710 = vst.msk [vmem:[%s1321 + $0x120] sm:$0xf] %vm1685, %v1554
    %1711 = vst.msk [vmem:[%s1321 + $0x12c] sm:$0xf] %vm1685, %v1556
    %1712 = vst.msk [vmem:[%s1321 + $0x138] sm:$0xf] %vm1685, %v1558
    %1713 = vst.msk [vmem:[%s1321 + $0x144] sm:$0xf] %vm1685, %v1560
    %1714 = vst.msk [vmem:[%s1321 + $0x150] sm:$0xf] %vm1685, %v1562
    %1715 = vst.msk [vmem:[%s1321 + $0x15c] sm:$0xf] %vm1685, %v1564
    %1716 = vst.msk [vmem:[%s1321 + $0x180] sm:$0xf] %vm1685, %v1566
    %1717 = vst.msk [vmem:[%s1321 + $0x18c] sm:$0xf] %vm1685, %v1568
    %1718 = vst.msk [vmem:[%s1321 + $0x198] sm:$0xf] %vm1685, %v1570
    %1719 = vst.msk [vmem:[%s1321 + $0x1a4] sm:$0xf] %vm1685, %v1572
    %1720 = vst.msk [vmem:[%s1321 + $0x1b0] sm:$0xf] %vm1685, %v1574
    %1721 = vst.msk [vmem:[%s1321 + $0x1bc] sm:$0xf] %vm1685, %v1576
    %1722 = vst.msk [vmem:[%s1321 + $0x1c8] sm:$0xf] %vm1685, %v1578
    %1723 = vst.msk [vmem:[%s1321 + $0x1d4] sm:$0xf] %vm1685, %v1580
    %1724 = vst.msk [vmem:[%s1321 + $0x1e0] sm:$0xf] %vm1685, %v1582
    %1725 = vst.msk [vmem:[%s1321 + $0x1ec] sm:$0xf] %vm1685, %v1584
    %1726 = vst.msk [vmem:[%s1321 + $0x1f8] sm:$0xf] %vm1685, %v1586
    %1727 = vst.msk [vmem:[%s1321 + $0x204] sm:$0xf] %vm1685, %v1588
    %1728 = vst.msk [vmem:[%s1321 + $0x210] sm:$0xf] %vm1685, %v1590
    %1729 = vst.msk [vmem:[%s1321 + $0x21c] sm:$0xf] %vm1685, %v1592
    %1730 = vst.msk [vmem:[%s1321 + $0x228] sm:$0xf] %vm1685, %v1594
    %1731 = vst.msk [vmem:[%s1321 + $0x234] sm:$0xf] %vm1685, %v1596
    %1732 = vst.msk [vmem:[%s1321 + $0x240] sm:$0xf] %vm1685, %v1598
    %1733 = vst.msk [vmem:[%s1321 + $0x24c] sm:$0xf] %vm1685, %v1600
    %1734 = vst.msk [vmem:[%s1321 + $0x258] sm:$0xf] %vm1685, %v1602
    %1735 = vst.msk [vmem:[%s1321 + $0x264] sm:$0xf] %vm1685, %v1604
    %1736 = vst.msk [vmem:[%s1321 + $0x270] sm:$0xf] %vm1685, %v1606
    %1737 = vst.msk [vmem:[%s1321 + $0x27c] sm:$0xf] %vm1685, %v1608
    %1738 = vst.msk [vmem:[%s1321 + $0x288] sm:$0xf] %vm1685, %v1610
    %1739 = vst.msk [vmem:[%s1321 + $0x294] sm:$0xf] %vm1685, %v1612
    %1740 = vst.msk [vmem:[%s1321 + $0x2a0] sm:$0xf] %vm1685, %v1614
    %1741 = vst.msk [vmem:[%s1321 + $0x2ac] sm:$0xf] %vm1685, %v1616
    %1742 = vst.msk [vmem:[%s1321 + $0x2b8] sm:$0xf] %vm1685, %v1618
    %1743 = vst.msk [vmem:[%s1321 + $0x2c4] sm:$0xf] %vm1685, %v1620
    %1744 = vst.msk [vmem:[%s1321 + $0x2d0] sm:$0xf] %vm1685, %v1622
    %1745 = vst.msk [vmem:[%s1321 + $0x2dc] sm:$0xf] %vm1685, %v1624
    %vm1746 = vsmask.f32 3328
    %vm1747 = vsmask.f32 7440
    %vm1748 = vmor %vm1746, %vm1747
    %v1749 = vrot.slane %v782, 4
    %v1750 = vrot.slane %v785, 5
    %v1751 = vor.u32 %v1749, %v1750
    %v1752 = vrot.slane %v1751, 4
    %v1753 = vrot.slane %v793, 5
    %v1754 = vsel %vm1748, %v1752, %v1753
    %v1755 = vrot.slane %v790, 4
    %v1756 = vor.u32 %v1755, %v1753
    %v1757 = vrot.slane %v1756, 4
    %v1758 = vrot.slane %v798, 4
    %v1759 = vrot.slane %v801, 5
    %v1760 = vor.u32 %v1758, %v1759
    %v1761 = vrot.slane %v1760, 4
    %v1762 = vrot.slane %v809, 5
    %v1763 = vsel %vm1748, %v1761, %v1762
    %v1764 = vrot.slane %v806, 4
    %v1765 = vor.u32 %v1764, %v1762
    %v1766 = vrot.slane %v1765, 4
    %v1767 = vrot.slane %v814, 4
    %v1768 = vrot.slane %v817, 5
    %v1769 = vor.u32 %v1767, %v1768
    %v1770 = vrot.slane %v1769, 4
    %v1771 = vrot.slane %v825, 5
    %v1772 = vsel %vm1748, %v1770, %v1771
    %v1773 = vrot.slane %v822, 4
    %v1774 = vor.u32 %v1773, %v1771
    %v1775 = vrot.slane %v1774, 4
    %v1776 = vrot.slane %v830, 4
    %v1777 = vrot.slane %v833, 5
    %v1778 = vor.u32 %v1776, %v1777
    %v1779 = vrot.slane %v1778, 4
    %v1780 = vrot.slane %v841, 5
    %v1781 = vsel %vm1748, %v1779, %v1780
    %v1782 = vrot.slane %v838, 4
    %v1783 = vor.u32 %v1782, %v1780
    %v1784 = vrot.slane %v1783, 4
    %v1785 = vrot.slane %v846, 4
    %v1786 = vrot.slane %v849, 5
    %v1787 = vor.u32 %v1785, %v1786
    %v1788 = vrot.slane %v1787, 4
    %v1789 = vrot.slane %v857, 5
    %v1790 = vsel %vm1748, %v1788, %v1789
    %v1791 = vrot.slane %v854, 4
    %v1792 = vor.u32 %v1791, %v1789
    %v1793 = vrot.slane %v1792, 4
    %v1794 = vrot.slane %v862, 4
    %v1795 = vrot.slane %v865, 5
    %v1796 = vor.u32 %v1794, %v1795
    %v1797 = vrot.slane %v1796, 4
    %v1798 = vrot.slane %v873, 5
    %v1799 = vsel %vm1748, %v1797, %v1798
    %v1800 = vrot.slane %v870, 4
    %v1801 = vor.u32 %v1800, %v1798
    %v1802 = vrot.slane %v1801, 4
    %v1803 = vrot.slane %v878, 4
    %v1804 = vrot.slane %v881, 5
    %v1805 = vor.u32 %v1803, %v1804
    %v1806 = vrot.slane %v1805, 4
    %v1807 = vrot.slane %v889, 5
    %v1808 = vsel %vm1748, %v1806, %v1807
    %v1809 = vrot.slane %v886, 4
    %v1810 = vor.u32 %v1809, %v1807
    %v1811 = vrot.slane %v1810, 4
    %v1812 = vrot.slane %v894, 4
    %v1813 = vrot.slane %v897, 5
    %v1814 = vor.u32 %v1812, %v1813
    %v1815 = vrot.slane %v1814, 4
    %v1816 = vrot.slane %v905, 5
    %v1817 = vsel %vm1748, %v1815, %v1816
    %v1818 = vrot.slane %v902, 4
    %v1819 = vor.u32 %v1818, %v1816
    %v1820 = vrot.slane %v1819, 4
    %v1821 = vrot.slane %v910, 4
    %v1822 = vrot.slane %v913, 5
    %v1823 = vor.u32 %v1821, %v1822
    %v1824 = vrot.slane %v1823, 4
    %v1825 = vrot.slane %v921, 5
    %v1826 = vsel %vm1748, %v1824, %v1825
    %v1827 = vrot.slane %v918, 4
    %v1828 = vor.u32 %v1827, %v1825
    %v1829 = vrot.slane %v1828, 4
    %v1830 = vrot.slane %v926, 4
    %v1831 = vrot.slane %v929, 5
    %v1832 = vor.u32 %v1830, %v1831
    %v1833 = vrot.slane %v1832, 4
    %v1834 = vrot.slane %v937, 5
    %v1835 = vsel %vm1748, %v1833, %v1834
    %v1836 = vrot.slane %v934, 4
    %v1837 = vor.u32 %v1836, %v1834
    %v1838 = vrot.slane %v1837, 4
    %v1839 = vrot.slane %v942, 4
    %v1840 = vrot.slane %v945, 5
    %v1841 = vor.u32 %v1839, %v1840
    %v1842 = vrot.slane %v1841, 4
    %v1843 = vrot.slane %v953, 5
    %v1844 = vsel %vm1748, %v1842, %v1843
    %v1845 = vrot.slane %v950, 4
    %v1846 = vor.u32 %v1845, %v1843
    %v1847 = vrot.slane %v1846, 4
    %v1848 = vrot.slane %v958, 4
    %v1849 = vrot.slane %v961, 5
    %v1850 = vor.u32 %v1848, %v1849
    %v1851 = vrot.slane %v1850, 4
    %v1852 = vrot.slane %v969, 5
    %v1853 = vsel %vm1748, %v1851, %v1852
    %v1854 = vrot.slane %v966, 4
    %v1855 = vor.u32 %v1854, %v1852
    %v1856 = vrot.slane %v1855, 4
    %v1857 = vrot.slane %v974, 4
    %v1858 = vrot.slane %v977, 5
    %v1859 = vor.u32 %v1857, %v1858
    %v1860 = vrot.slane %v1859, 4
    %v1861 = vrot.slane %v985, 5
    %v1862 = vsel %vm1748, %v1860, %v1861
    %v1863 = vrot.slane %v982, 4
    %v1864 = vor.u32 %v1863, %v1861
    %v1865 = vrot.slane %v1864, 4
    %v1866 = vrot.slane %v990, 4
    %v1867 = vrot.slane %v993, 5
    %v1868 = vor.u32 %v1866, %v1867
    %v1869 = vrot.slane %v1868, 4
    %v1870 = vrot.slane %v1001, 5
    %v1871 = vsel %vm1748, %v1869, %v1870
    %v1872 = vrot.slane %v998, 4
    %v1873 = vor.u32 %v1872, %v1870
    %v1874 = vrot.slane %v1873, 4
    %v1875 = vrot.slane %v1006, 4
    %v1876 = vrot.slane %v1009, 5
    %v1877 = vor.u32 %v1875, %v1876
    %v1878 = vrot.slane %v1877, 4
    %v1879 = vrot.slane %v1017, 5
    %v1880 = vsel %vm1748, %v1878, %v1879
    %v1881 = vrot.slane %v1014, 4
    %v1882 = vor.u32 %v1881, %v1879
    %v1883 = vrot.slane %v1882, 4
    %v1884 = vrot.slane %v1022, 4
    %v1885 = vrot.slane %v1025, 5
    %v1886 = vor.u32 %v1884, %v1885
    %v1887 = vrot.slane %v1886, 4
    %v1888 = vrot.slane %v1033, 5
    %v1889 = vsel %vm1748, %v1887, %v1888
    %v1890 = vrot.slane %v1030, 4
    %v1891 = vor.u32 %v1890, %v1888
    %v1892 = vrot.slane %v1891, 4
    %v1893 = vrot.slane %v1038, 4
    %v1894 = vrot.slane %v1041, 5
    %v1895 = vor.u32 %v1893, %v1894
    %v1896 = vrot.slane %v1895, 4
    %v1897 = vrot.slane %v1049, 5
    %v1898 = vsel %vm1748, %v1896, %v1897
    %v1899 = vrot.slane %v1046, 4
    %v1900 = vor.u32 %v1899, %v1897
    %v1901 = vrot.slane %v1900, 4
    %v1902 = vrot.slane %v1054, 4
    %v1903 = vrot.slane %v1057, 5
    %v1904 = vor.u32 %v1902, %v1903
    %v1905 = vrot.slane %v1904, 4
    %v1906 = vrot.slane %v1065, 5
    %v1907 = vsel %vm1748, %v1905, %v1906
    %v1908 = vrot.slane %v1062, 4
    %v1909 = vor.u32 %v1908, %v1906
    %v1910 = vrot.slane %v1909, 4
    %v1911 = vrot.slane %v1070, 4
    %v1912 = vrot.slane %v1073, 5
    %v1913 = vor.u32 %v1911, %v1912
    %v1914 = vrot.slane %v1913, 4
    %v1915 = vrot.slane %v1081, 5
    %v1916 = vsel %vm1748, %v1914, %v1915
    %v1917 = vrot.slane %v1078, 4
    %v1918 = vor.u32 %v1917, %v1915
    %v1919 = vrot.slane %v1918, 4
    %v1920 = vrot.slane %v1086, 4
    %v1921 = vrot.slane %v1089, 5
    %v1922 = vor.u32 %v1920, %v1921
    %v1923 = vrot.slane %v1922, 4
    %v1924 = vrot.slane %v1097, 5
    %v1925 = vsel %vm1748, %v1923, %v1924
    %v1926 = vrot.slane %v1094, 4
    %v1927 = vor.u32 %v1926, %v1924
    %v1928 = vrot.slane %v1927, 4
    %v1929 = vrot.slane %v1102, 4
    %v1930 = vrot.slane %v1105, 5
    %v1931 = vor.u32 %v1929, %v1930
    %v1932 = vrot.slane %v1931, 4
    %v1933 = vrot.slane %v1113, 5
    %v1934 = vsel %vm1748, %v1932, %v1933
    %v1935 = vrot.slane %v1110, 4
    %v1936 = vor.u32 %v1935, %v1933
    %v1937 = vrot.slane %v1936, 4
    %v1938 = vrot.slane %v1118, 4
    %v1939 = vrot.slane %v1121, 5
    %v1940 = vor.u32 %v1938, %v1939
    %v1941 = vrot.slane %v1940, 4
    %v1942 = vrot.slane %v1129, 5
    %v1943 = vsel %vm1748, %v1941, %v1942
    %v1944 = vrot.slane %v1126, 4
    %v1945 = vor.u32 %v1944, %v1942
    %v1946 = vrot.slane %v1945, 4
    %v1947 = vrot.slane %v1134, 4
    %v1948 = vrot.slane %v1137, 5
    %v1949 = vor.u32 %v1947, %v1948
    %v1950 = vrot.slane %v1949, 4
    %v1951 = vrot.slane %v1145, 5
    %v1952 = vsel %vm1748, %v1950, %v1951
    %v1953 = vrot.slane %v1142, 4
    %v1954 = vor.u32 %v1953, %v1951
    %v1955 = vrot.slane %v1954, 4
    %v1956 = vrot.slane %v1150, 4
    %v1957 = vrot.slane %v1153, 5
    %v1958 = vor.u32 %v1956, %v1957
    %v1959 = vrot.slane %v1958, 4
    %v1960 = vrot.slane %v1161, 5
    %v1961 = vsel %vm1748, %v1959, %v1960
    %v1962 = vrot.slane %v1158, 4
    %v1963 = vor.u32 %v1962, %v1960
    %v1964 = vrot.slane %v1963, 4
    %v1965 = vrot.slane %v1166, 4
    %v1966 = vrot.slane %v1169, 5
    %v1967 = vor.u32 %v1965, %v1966
    %v1968 = vrot.slane %v1967, 4
    %v1969 = vrot.slane %v1177, 5
    %v1970 = vsel %vm1748, %v1968, %v1969
    %v1971 = vrot.slane %v1174, 4
    %v1972 = vor.u32 %v1971, %v1969
    %v1973 = vrot.slane %v1972, 4
    %v1974 = vrot.slane %v1182, 4
    %v1975 = vrot.slane %v1185, 5
    %v1976 = vor.u32 %v1974, %v1975
    %v1977 = vrot.slane %v1976, 4
    %v1978 = vrot.slane %v1193, 5
    %v1979 = vsel %vm1748, %v1977, %v1978
    %v1980 = vrot.slane %v1190, 4
    %v1981 = vor.u32 %v1980, %v1978
    %v1982 = vrot.slane %v1981, 4
    %v1983 = vrot.slane %v1198, 4
    %v1984 = vrot.slane %v1201, 5
    %v1985 = vor.u32 %v1983, %v1984
    %v1986 = vrot.slane %v1985, 4
    %v1987 = vrot.slane %v1209, 5
    %v1988 = vsel %vm1748, %v1986, %v1987
    %v1989 = vrot.slane %v1206, 4
    %v1990 = vor.u32 %v1989, %v1987
    %v1991 = vrot.slane %v1990, 4
    %v1992 = vrot.slane %v1214, 4
    %v1993 = vrot.slane %v1217, 5
    %v1994 = vor.u32 %v1992, %v1993
    %v1995 = vrot.slane %v1994, 4
    %v1996 = vrot.slane %v1225, 5
    %v1997 = vsel %vm1748, %v1995, %v1996
    %v1998 = vrot.slane %v1222, 4
    %v1999 = vor.u32 %v1998, %v1996
    %v2000 = vrot.slane %v1999, 4
    %v2001 = vrot.slane %v1230, 4
    %v2002 = vrot.slane %v1233, 5
    %v2003 = vor.u32 %v2001, %v2002
    %v2004 = vrot.slane %v2003, 4
    %v2005 = vrot.slane %v1241, 5
    %v2006 = vsel %vm1748, %v2004, %v2005
    %v2007 = vrot.slane %v1238, 4
    %v2008 = vor.u32 %v2007, %v2005
    %v2009 = vrot.slane %v2008, 4
    %v2010 = vrot.slane %v1246, 4
    %v2011 = vrot.slane %v1249, 5
    %v2012 = vor.u32 %v2010, %v2011
    %v2013 = vrot.slane %v2012, 4
    %v2014 = vrot.slane %v1257, 5
    %v2015 = vsel %vm1748, %v2013, %v2014
    %v2016 = vrot.slane %v1254, 4
    %v2017 = vor.u32 %v2016, %v2014
    %v2018 = vrot.slane %v2017, 4
    %2019 = vrot.lane.b32.xlu0 %v1754, 64
    %v2020 = vpop.permute.xlu0 %2019
    %2021 = vrot.lane.b32.xlu0 %v1757, 64
    %v2022 = vpop.permute.xlu0 %2021
    %2023 = vrot.lane.b32.xlu0 %v1763, 64
    %v2024 = vpop.permute.xlu0 %2023
    %2025 = vrot.lane.b32.xlu0 %v1766, 64
    %v2026 = vpop.permute.xlu0 %2025
    %2027 = vrot.lane.b32.xlu0 %v1772, 64
    %v2028 = vpop.permute.xlu0 %2027
    %2029 = vrot.lane.b32.xlu0 %v1775, 64
    %v2030 = vpop.permute.xlu0 %2029
    %2031 = vrot.lane.b32.xlu0 %v1781, 64
    %v2032 = vpop.permute.xlu0 %2031
    %2033 = vrot.lane.b32.xlu0 %v1784, 64
    %v2034 = vpop.permute.xlu0 %2033
    %2035 = vrot.lane.b32.xlu0 %v1790, 64
    %v2036 = vpop.permute.xlu0 %2035
    %2037 = vrot.lane.b32.xlu0 %v1793, 64
    %v2038 = vpop.permute.xlu0 %2037
    %2039 = vrot.lane.b32.xlu0 %v1799, 64
    %v2040 = vpop.permute.xlu0 %2039
    %2041 = vrot.lane.b32.xlu0 %v1802, 64
    %v2042 = vpop.permute.xlu0 %2041
    %2043 = vrot.lane.b32.xlu0 %v1808, 64
    %v2044 = vpop.permute.xlu0 %2043
    %2045 = vrot.lane.b32.xlu0 %v1811, 64
    %v2046 = vpop.permute.xlu0 %2045
    %2047 = vrot.lane.b32.xlu0 %v1817, 64
    %v2048 = vpop.permute.xlu0 %2047
    %2049 = vrot.lane.b32.xlu0 %v1820, 64
    %v2050 = vpop.permute.xlu0 %2049
    %2051 = vrot.lane.b32.xlu0 %v1826, 64
    %v2052 = vpop.permute.xlu0 %2051
    %2053 = vrot.lane.b32.xlu0 %v1829, 64
    %v2054 = vpop.permute.xlu0 %2053
    %2055 = vrot.lane.b32.xlu0 %v1835, 64
    %v2056 = vpop.permute.xlu0 %2055
    %2057 = vrot.lane.b32.xlu0 %v1838, 64
    %v2058 = vpop.permute.xlu0 %2057
    %2059 = vrot.lane.b32.xlu0 %v1844, 64
    %v2060 = vpop.permute.xlu0 %2059
    %2061 = vrot.lane.b32.xlu0 %v1847, 64
    %v2062 = vpop.permute.xlu0 %2061
    %2063 = vrot.lane.b32.xlu0 %v1853, 64
    %v2064 = vpop.permute.xlu0 %2063
    %2065 = vrot.lane.b32.xlu0 %v1856, 64
    %v2066 = vpop.permute.xlu0 %2065
    %2067 = vrot.lane.b32.xlu0 %v1862, 64
    %v2068 = vpop.permute.xlu0 %2067
    %2069 = vrot.lane.b32.xlu0 %v1865, 64
    %v2070 = vpop.permute.xlu0 %2069
    %2071 = vrot.lane.b32.xlu0 %v1871, 64
    %v2072 = vpop.permute.xlu0 %2071
    %2073 = vrot.lane.b32.xlu0 %v1874, 64
    %v2074 = vpop.permute.xlu0 %2073
    %2075 = vrot.lane.b32.xlu0 %v1880, 64
    %v2076 = vpop.permute.xlu0 %2075
    %2077 = vrot.lane.b32.xlu0 %v1883, 64
    %v2078 = vpop.permute.xlu0 %2077
    %2079 = vrot.lane.b32.xlu0 %v1889, 64
    %v2080 = vpop.permute.xlu0 %2079
    %2081 = vrot.lane.b32.xlu0 %v1892, 64
    %v2082 = vpop.permute.xlu0 %2081
    %2083 = vrot.lane.b32.xlu0 %v1898, 64
    %v2084 = vpop.permute.xlu0 %2083
    %2085 = vrot.lane.b32.xlu0 %v1901, 64
    %v2086 = vpop.permute.xlu0 %2085
    %2087 = vrot.lane.b32.xlu0 %v1907, 64
    %v2088 = vpop.permute.xlu0 %2087
    %2089 = vrot.lane.b32.xlu0 %v1910, 64
    %v2090 = vpop.permute.xlu0 %2089
    %2091 = vrot.lane.b32.xlu0 %v1916, 64
    %v2092 = vpop.permute.xlu0 %2091
    %2093 = vrot.lane.b32.xlu0 %v1919, 64
    %v2094 = vpop.permute.xlu0 %2093
    %2095 = vrot.lane.b32.xlu0 %v1925, 64
    %v2096 = vpop.permute.xlu0 %2095
    %2097 = vrot.lane.b32.xlu0 %v1928, 64
    %v2098 = vpop.permute.xlu0 %2097
    %2099 = vrot.lane.b32.xlu0 %v1934, 64
    %v2100 = vpop.permute.xlu0 %2099
    %2101 = vrot.lane.b32.xlu0 %v1937, 64
    %v2102 = vpop.permute.xlu0 %2101
    %2103 = vrot.lane.b32.xlu0 %v1943, 64
    %v2104 = vpop.permute.xlu0 %2103
    %2105 = vrot.lane.b32.xlu0 %v1946, 64
    %v2106 = vpop.permute.xlu0 %2105
    %2107 = vrot.lane.b32.xlu0 %v1952, 64
    %v2108 = vpop.permute.xlu0 %2107
    %2109 = vrot.lane.b32.xlu0 %v1955, 64
    %v2110 = vpop.permute.xlu0 %2109
    %2111 = vrot.lane.b32.xlu0 %v1961, 64
    %v2112 = vpop.permute.xlu0 %2111
    %2113 = vrot.lane.b32.xlu0 %v1964, 64
    %v2114 = vpop.permute.xlu0 %2113
    %2115 = vrot.lane.b32.xlu0 %v1970, 64
    %v2116 = vpop.permute.xlu0 %2115
    %2117 = vrot.lane.b32.xlu0 %v1973, 64
    %v2118 = vpop.permute.xlu0 %2117
    %2119 = vrot.lane.b32.xlu0 %v1979, 64
    %v2120 = vpop.permute.xlu0 %2119
    %2121 = vrot.lane.b32.xlu0 %v1982, 64
    %v2122 = vpop.permute.xlu0 %2121
    %2123 = vrot.lane.b32.xlu0 %v1988, 64
    %v2124 = vpop.permute.xlu0 %2123
    %2125 = vrot.lane.b32.xlu0 %v1991, 64
    %v2126 = vpop.permute.xlu0 %2125
    %2127 = vrot.lane.b32.xlu0 %v1997, 64
    %v2128 = vpop.permute.xlu0 %2127
    %2129 = vrot.lane.b32.xlu0 %v2000, 64
    %v2130 = vpop.permute.xlu0 %2129
    %2131 = vrot.lane.b32.xlu0 %v2006, 64
    %v2132 = vpop.permute.xlu0 %2131
    %2133 = vrot.lane.b32.xlu0 %v2009, 64
    %v2134 = vpop.permute.xlu0 %2133
    %2135 = vrot.lane.b32.xlu0 %v2015, 64
    %v2136 = vpop.permute.xlu0 %2135
    %2137 = vrot.lane.b32.xlu0 %v2018, 64
    %v2138 = vpop.permute.xlu0 %2137
    %vm2199 = vcmask 781824
    %2200 = vst.msk [vmem:[%s1321] sm:$0xf] %vm2199, %v2020
    %vm2201 = vcmask 781824
    %vm2202 = vmand %vm2201, %vm1746
    %v2203 = vld [vmem:[%s1321 + $0xc] sm:$0xf]
    %v2204 = vsel %vm2202, %v2022, %v2203
    %2205 = vst [vmem:[%s1321 + $0xc] sm:$0xf] %v2204
    %2206 = vst.msk [vmem:[%s1321 + $0x18] sm:$0xf] %vm2199, %v2024
    %v2207 = vld [vmem:[%s1321 + $0x24] sm:$0xf]
    %v2208 = vsel %vm2202, %v2026, %v2207
    %2209 = vst [vmem:[%s1321 + $0x24] sm:$0xf] %v2208
    %2210 = vst.msk [vmem:[%s1321 + $0x30] sm:$0xf] %vm2199, %v2028
    %v2211 = vld [vmem:[%s1321 + $0x3c] sm:$0xf]
    %v2212 = vsel %vm2202, %v2030, %v2211
    %2213 = vst [vmem:[%s1321 + $0x3c] sm:$0xf] %v2212
    %2214 = vst.msk [vmem:[%s1321 + $0x48] sm:$0xf] %vm2199, %v2032
    %v2215 = vld [vmem:[%s1321 + $0x54] sm:$0xf]
    %v2216 = vsel %vm2202, %v2034, %v2215
    %2217 = vst [vmem:[%s1321 + $0x54] sm:$0xf] %v2216
    %2218 = vst.msk [vmem:[%s1321 + $0x60] sm:$0xf] %vm2199, %v2036
    %v2219 = vld [vmem:[%s1321 + $0x6c] sm:$0xf]
    %v2220 = vsel %vm2202, %v2038, %v2219
    %2221 = vst [vmem:[%s1321 + $0x6c] sm:$0xf] %v2220
    %2222 = vst.msk [vmem:[%s1321 + $0x78] sm:$0xf] %vm2199, %v2040
    %v2223 = vld [vmem:[%s1321 + $0x84] sm:$0xf]
    %v2224 = vsel %vm2202, %v2042, %v2223
    %2225 = vst [vmem:[%s1321 + $0x84] sm:$0xf] %v2224
    %2226 = vst.msk [vmem:[%s1321 + $0x90] sm:$0xf] %vm2199, %v2044
    %v2227 = vld [vmem:[%s1321 + $0x9c] sm:$0xf]
    %v2228 = vsel %vm2202, %v2046, %v2227
    %2229 = vst [vmem:[%s1321 + $0x9c] sm:$0xf] %v2228
    %2230 = vst.msk [vmem:[%s1321 + $0xa8] sm:$0xf] %vm2199, %v2048
    %v2231 = vld [vmem:[%s1321 + $0xb4] sm:$0xf]
    %v2232 = vsel %vm2202, %v2050, %v2231
    %2233 = vst [vmem:[%s1321 + $0xb4] sm:$0xf] %v2232
    %2234 = vst.msk [vmem:[%s1321 + $0xc0] sm:$0xf] %vm2199, %v2052
    %v2235 = vld [vmem:[%s1321 + $0xcc] sm:$0xf]
    %v2236 = vsel %vm2202, %v2054, %v2235
    %2237 = vst [vmem:[%s1321 + $0xcc] sm:$0xf] %v2236
    %2238 = vst.msk [vmem:[%s1321 + $0xd8] sm:$0xf] %vm2199, %v2056
    %v2239 = vld [vmem:[%s1321 + $0xe4] sm:$0xf]
    %v2240 = vsel %vm2202, %v2058, %v2239
    %2241 = vst [vmem:[%s1321 + $0xe4] sm:$0xf] %v2240
    %2242 = vst.msk [vmem:[%s1321 + $0xf0] sm:$0xf] %vm2199, %v2060
    %v2243 = vld [vmem:[%s1321 + $0xfc] sm:$0xf]
    %v2244 = vsel %vm2202, %v2062, %v2243
    %2245 = vst [vmem:[%s1321 + $0xfc] sm:$0xf] %v2244
    %2246 = vst.msk [vmem:[%s1321 + $0x108] sm:$0xf] %vm2199, %v2064
    %v2247 = vld [vmem:[%s1321 + $0x114] sm:$0xf]
    %v2248 = vsel %vm2202, %v2066, %v2247
    %2249 = vst [vmem:[%s1321 + $0x114] sm:$0xf] %v2248
    %2250 = vst.msk [vmem:[%s1321 + $0x120] sm:$0xf] %vm2199, %v2068
    %v2251 = vld [vmem:[%s1321 + $0x12c] sm:$0xf]
    %v2252 = vsel %vm2202, %v2070, %v2251
    %2253 = vst [vmem:[%s1321 + $0x12c] sm:$0xf] %v2252
    %2254 = vst.msk [vmem:[%s1321 + $0x138] sm:$0xf] %vm2199, %v2072
    %v2255 = vld [vmem:[%s1321 + $0x144] sm:$0xf]
    %v2256 = vsel %vm2202, %v2074, %v2255
    %2257 = vst [vmem:[%s1321 + $0x144] sm:$0xf] %v2256
    %2258 = vst.msk [vmem:[%s1321 + $0x150] sm:$0xf] %vm2199, %v2076
    %v2259 = vld [vmem:[%s1321 + $0x15c] sm:$0xf]
    %v2260 = vsel %vm2202, %v2078, %v2259
    %2261 = vst [vmem:[%s1321 + $0x15c] sm:$0xf] %v2260
    %2262 = vst.msk [vmem:[%s1321 + $0x180] sm:$0xf] %vm2199, %v2080
    %v2263 = vld [vmem:[%s1321 + $0x18c] sm:$0xf]
    %v2264 = vsel %vm2202, %v2082, %v2263
    %2265 = vst [vmem:[%s1321 + $0x18c] sm:$0xf] %v2264
    %2266 = vst.msk [vmem:[%s1321 + $0x198] sm:$0xf] %vm2199, %v2084
    %v2267 = vld [vmem:[%s1321 + $0x1a4] sm:$0xf]
    %v2268 = vsel %vm2202, %v2086, %v2267
    %2269 = vst [vmem:[%s1321 + $0x1a4] sm:$0xf] %v2268
    %2270 = vst.msk [vmem:[%s1321 + $0x1b0] sm:$0xf] %vm2199, %v2088
    %v2271 = vld [vmem:[%s1321 + $0x1bc] sm:$0xf]
    %v2272 = vsel %vm2202, %v2090, %v2271
    %2273 = vst [vmem:[%s1321 + $0x1bc] sm:$0xf] %v2272
    %2274 = vst.msk [vmem:[%s1321 + $0x1c8] sm:$0xf] %vm2199, %v2092
    %v2275 = vld [vmem:[%s1321 + $0x1d4] sm:$0xf]
    %v2276 = vsel %vm2202, %v2094, %v2275
    %2277 = vst [vmem:[%s1321 + $0x1d4] sm:$0xf] %v2276
    %2278 = vst.msk [vmem:[%s1321 + $0x1e0] sm:$0xf] %vm2199, %v2096
    %v2279 = vld [vmem:[%s1321 + $0x1ec] sm:$0xf]
    %v2280 = vsel %vm2202, %v2098, %v2279
    %2281 = vst [vmem:[%s1321 + $0x1ec] sm:$0xf] %v2280
    %2282 = vst.msk [vmem:[%s1321 + $0x1f8] sm:$0xf] %vm2199, %v2100
    %v2283 = vld [vmem:[%s1321 + $0x204] sm:$0xf]
    %v2284 = vsel %vm2202, %v2102, %v2283
    %2285 = vst [vmem:[%s1321 + $0x204] sm:$0xf] %v2284
    %2286 = vst.msk [vmem:[%s1321 + $0x210] sm:$0xf] %vm2199, %v2104
    %v2287 = vld [vmem:[%s1321 + $0x21c] sm:$0xf]
    %v2288 = vsel %vm2202, %v2106, %v2287
    %2289 = vst [vmem:[%s1321 + $0x21c] sm:$0xf] %v2288
    %2290 = vst.msk [vmem:[%s1321 + $0x228] sm:$0xf] %vm2199, %v2108
    %v2291 = vld [vmem:[%s1321 + $0x234] sm:$0xf]
    %v2292 = vsel %vm2202, %v2110, %v2291
    %2293 = vst [vmem:[%s1321 + $0x234] sm:$0xf] %v2292
    %2294 = vst.msk [vmem:[%s1321 + $0x240] sm:$0xf] %vm2199, %v2112
    %v2295 = vld [vmem:[%s1321 + $0x24c] sm:$0xf]
    %v2296 = vsel %vm2202, %v2114, %v2295
    %2297 = vst [vmem:[%s1321 + $0x24c] sm:$0xf] %v2296
    %2298 = vst.msk [vmem:[%s1321 + $0x258] sm:$0xf] %vm2199, %v2116
    %v2299 = vld [vmem:[%s1321 + $0x264] sm:$0xf]
    %v2300 = vsel %vm2202, %v2118, %v2299
    %2301 = vst [vmem:[%s1321 + $0x264] sm:$0xf] %v2300
    %2302 = vst.msk [vmem:[%s1321 + $0x270] sm:$0xf] %vm2199, %v2120
    %v2303 = vld [vmem:[%s1321 + $0x27c] sm:$0xf]
    %v2304 = vsel %vm2202, %v2122, %v2303
    %2305 = vst [vmem:[%s1321 + $0x27c] sm:$0xf] %v2304
    %2306 = vst.msk [vmem:[%s1321 + $0x288] sm:$0xf] %vm2199, %v2124
    %v2307 = vld [vmem:[%s1321 + $0x294] sm:$0xf]
    %v2308 = vsel %vm2202, %v2126, %v2307
    %2309 = vst [vmem:[%s1321 + $0x294] sm:$0xf] %v2308
    %2310 = vst.msk [vmem:[%s1321 + $0x2a0] sm:$0xf] %vm2199, %v2128
    %v2311 = vld [vmem:[%s1321 + $0x2ac] sm:$0xf]
    %v2312 = vsel %vm2202, %v2130, %v2311
    %2313 = vst [vmem:[%s1321 + $0x2ac] sm:$0xf] %v2312
    %2314 = vst.msk [vmem:[%s1321 + $0x2b8] sm:$0xf] %vm2199, %v2132
    %v2315 = vld [vmem:[%s1321 + $0x2c4] sm:$0xf]
    %v2316 = vsel %vm2202, %v2134, %v2315
    %2317 = vst [vmem:[%s1321 + $0x2c4] sm:$0xf] %v2316
    %2318 = vst.msk [vmem:[%s1321 + $0x2d0] sm:$0xf] %vm2199, %v2136
    %v2319 = vld [vmem:[%s1321 + $0x2dc] sm:$0xf]
    %v2320 = vsel %vm2202, %v2138, %v2319
    %2321 = vst [vmem:[%s1321 + $0x2dc] sm:$0xf] %v2320
    %v2323 = vshrl.u32 %v615, 16
    %v2325 = vrot.slane %v2323, 7
    %v2326 = vshll.u32 %v615, 16
    %v2328 = vor.u32 %v2325, %v2326
    %v2329 = vrot.slane %v2325, 4
    %v2331 = vshrl.u32 %v616, 16
    %v2333 = vrot.slane %v2331, 7
    %v2334 = vshll.u32 %v616, 16
    %v2336 = vor.u32 %v2333, %v2334
    %v2337 = vsel %vm780, %v2329, %v2336
    %v2339 = vshrl.u32 %v647, 16
    %v2341 = vrot.slane %v2339, 7
    %v2342 = vshll.u32 %v647, 16
    %v2344 = vor.u32 %v2341, %v2342
    %v2345 = vrot.slane %v2341, 4
    %v2347 = vshrl.u32 %v648, 16
    %v2349 = vrot.slane %v2347, 7
    %v2350 = vshll.u32 %v648, 16
    %v2352 = vor.u32 %v2349, %v2350
    %v2353 = vsel %vm780, %v2345, %v2352
    %2354 = vrot.lane.b32.xlu0 %v787, 96
    %v2355 = vpop.permute.xlu0 %2354
    %2356 = vrot.lane.b32.xlu0 %v796, 96
    %v2357 = vpop.permute.xlu0 %2356
    %2358 = vrot.lane.b32.xlu0 %v803, 96
    %v2359 = vpop.permute.xlu0 %2358
    %2360 = vrot.lane.b32.xlu0 %v812, 96
    %v2361 = vpop.permute.xlu0 %2360
    %2362 = vrot.lane.b32.xlu0 %v819, 96
    %v2363 = vpop.permute.xlu0 %2362
    %2364 = vrot.lane.b32.xlu0 %v828, 96
    %v2365 = vpop.permute.xlu0 %2364
    %2366 = vrot.lane.b32.xlu0 %v835, 96
    %v2367 = vpop.permute.xlu0 %2366
    %2368 = vrot.lane.b32.xlu0 %v844, 96
    %v2369 = vpop.permute.xlu0 %2368
    %2370 = vrot.lane.b32.xlu0 %v851, 96
    %v2371 = vpop.permute.xlu0 %2370
    %2372 = vrot.lane.b32.xlu0 %v860, 96
    %v2373 = vpop.permute.xlu0 %2372
    %2374 = vrot.lane.b32.xlu0 %v867, 96
    %v2375 = vpop.permute.xlu0 %2374
    %2376 = vrot.lane.b32.xlu0 %v876, 96
    %v2377 = vpop.permute.xlu0 %2376
    %2378 = vrot.lane.b32.xlu0 %v883, 96
    %v2379 = vpop.permute.xlu0 %2378
    %2380 = vrot.lane.b32.xlu0 %v892, 96
    %v2381 = vpop.permute.xlu0 %2380
    %2382 = vrot.lane.b32.xlu0 %v899, 96
    %v2383 = vpop.permute.xlu0 %2382
    %2384 = vrot.lane.b32.xlu0 %v908, 96
    %v2385 = vpop.permute.xlu0 %2384
    %2386 = vrot.lane.b32.xlu0 %v915, 96
    %v2387 = vpop.permute.xlu0 %2386
    %2388 = vrot.lane.b32.xlu0 %v924, 96
    %v2389 = vpop.permute.xlu0 %2388
    %2390 = vrot.lane.b32.xlu0 %v931, 96
    %v2391 = vpop.permute.xlu0 %2390
    %2392 = vrot.lane.b32.xlu0 %v940, 96
    %v2393 = vpop.permute.xlu0 %2392
    %2394 = vrot.lane.b32.xlu0 %v947, 96
    %v2395 = vpop.permute.xlu0 %2394
    %2396 = vrot.lane.b32.xlu0 %v956, 96
    %v2397 = vpop.permute.xlu0 %2396
    %2398 = vrot.lane.b32.xlu0 %v963, 96
    %v2399 = vpop.permute.xlu0 %2398
    %2400 = vrot.lane.b32.xlu0 %v972, 96
    %v2401 = vpop.permute.xlu0 %2400
    %2402 = vrot.lane.b32.xlu0 %v979, 96
    %v2403 = vpop.permute.xlu0 %2402
    %2404 = vrot.lane.b32.xlu0 %v988, 96
    %v2405 = vpop.permute.xlu0 %2404
    %2406 = vrot.lane.b32.xlu0 %v995, 96
    %v2407 = vpop.permute.xlu0 %2406
    %2408 = vrot.lane.b32.xlu0 %v1004, 96
    %v2409 = vpop.permute.xlu0 %2408
    %2410 = vrot.lane.b32.xlu0 %v1011, 96
    %v2411 = vpop.permute.xlu0 %2410
    %2412 = vrot.lane.b32.xlu0 %v1020, 96
    %v2413 = vpop.permute.xlu0 %2412
    %2414 = vrot.lane.b32.xlu0 %v2328, 96
    %v2415 = vpop.permute.xlu0 %2414
    %2416 = vrot.lane.b32.xlu0 %v2337, 96
    %v2417 = vpop.permute.xlu0 %2416
    %2418 = vrot.lane.b32.xlu0 %v1027, 96
    %v2419 = vpop.permute.xlu0 %2418
    %2420 = vrot.lane.b32.xlu0 %v1036, 96
    %v2421 = vpop.permute.xlu0 %2420
    %2422 = vrot.lane.b32.xlu0 %v1043, 96
    %v2423 = vpop.permute.xlu0 %2422
    %2424 = vrot.lane.b32.xlu0 %v1052, 96
    %v2425 = vpop.permute.xlu0 %2424
    %2426 = vrot.lane.b32.xlu0 %v1059, 96
    %v2427 = vpop.permute.xlu0 %2426
    %2428 = vrot.lane.b32.xlu0 %v1068, 96
    %v2429 = vpop.permute.xlu0 %2428
    %2430 = vrot.lane.b32.xlu0 %v1075, 96
    %v2431 = vpop.permute.xlu0 %2430
    %2432 = vrot.lane.b32.xlu0 %v1084, 96
    %v2433 = vpop.permute.xlu0 %2432
    %2434 = vrot.lane.b32.xlu0 %v1091, 96
    %v2435 = vpop.permute.xlu0 %2434
    %2436 = vrot.lane.b32.xlu0 %v1100, 96
    %v2437 = vpop.permute.xlu0 %2436
    %2438 = vrot.lane.b32.xlu0 %v1107, 96
    %v2439 = vpop.permute.xlu0 %2438
    %2440 = vrot.lane.b32.xlu0 %v1116, 96
    %v2441 = vpop.permute.xlu0 %2440
    %2442 = vrot.lane.b32.xlu0 %v1123, 96
    %v2443 = vpop.permute.xlu0 %2442
    %2444 = vrot.lane.b32.xlu0 %v1132, 96
    %v2445 = vpop.permute.xlu0 %2444
    %2446 = vrot.lane.b32.xlu0 %v1139, 96
    %v2447 = vpop.permute.xlu0 %2446
    %2448 = vrot.lane.b32.xlu0 %v1148, 96
    %v2449 = vpop.permute.xlu0 %2448
    %2450 = vrot.lane.b32.xlu0 %v1155, 96
    %v2451 = vpop.permute.xlu0 %2450
    %2452 = vrot.lane.b32.xlu0 %v1164, 96
    %v2453 = vpop.permute.xlu0 %2452
    %2454 = vrot.lane.b32.xlu0 %v1171, 96
    %v2455 = vpop.permute.xlu0 %2454
    %2456 = vrot.lane.b32.xlu0 %v1180, 96
    %v2457 = vpop.permute.xlu0 %2456
    %2458 = vrot.lane.b32.xlu0 %v1187, 96
    %v2459 = vpop.permute.xlu0 %2458
    %2460 = vrot.lane.b32.xlu0 %v1196, 96
    %v2461 = vpop.permute.xlu0 %2460
    %2462 = vrot.lane.b32.xlu0 %v1203, 96
    %v2463 = vpop.permute.xlu0 %2462
    %2464 = vrot.lane.b32.xlu0 %v1212, 96
    %v2465 = vpop.permute.xlu0 %2464
    %2466 = vrot.lane.b32.xlu0 %v1219, 96
    %v2467 = vpop.permute.xlu0 %2466
    %2468 = vrot.lane.b32.xlu0 %v1228, 96
    %v2469 = vpop.permute.xlu0 %2468
    %2470 = vrot.lane.b32.xlu0 %v1235, 96
    %v2471 = vpop.permute.xlu0 %2470
    %2472 = vrot.lane.b32.xlu0 %v1244, 96
    %v2473 = vpop.permute.xlu0 %2472
    %2474 = vrot.lane.b32.xlu0 %v1251, 96
    %v2475 = vpop.permute.xlu0 %2474
    %2476 = vrot.lane.b32.xlu0 %v1260, 96
    %v2477 = vpop.permute.xlu0 %2476
    %2478 = vrot.lane.b32.xlu0 %v2344, 96
    %v2479 = vpop.permute.xlu0 %2478
    %2480 = vrot.lane.b32.xlu0 %v2353, 96
    %v2481 = vpop.permute.xlu0 %2480
    %vm2546 = vcmask 1044224
    %vm2547 = vmand %vm2546, %vm1323
    %v2548 = vld [vmem:[#allocation2] sm:$0xf]
    %v2549 = vsel %vm2547, %v2355, %v2548
    %2550 = vst [vmem:[#allocation2] sm:$0xf] %v2549
    %vm2551 = vcmask 1044224
    %2552 = vst.msk [vmem:[#allocation2 + $0xc] sm:$0xf] %vm2551, %v2357
    %v2553 = vld [vmem:[#allocation2 + $0x18] sm:$0xf]
    %v2554 = vsel %vm2547, %v2359, %v2553
    %2555 = vst [vmem:[#allocation2 + $0x18] sm:$0xf] %v2554
    %2556 = vst.msk [vmem:[#allocation2 + $0x24] sm:$0xf] %vm2551, %v2361
    %v2557 = vld [vmem:[#allocation2 + $0x30] sm:$0xf]
    %v2558 = vsel %vm2547, %v2363, %v2557
    %2559 = vst [vmem:[#allocation2 + $0x30] sm:$0xf] %v2558
    %2560 = vst.msk [vmem:[#allocation2 + $0x3c] sm:$0xf] %vm2551, %v2365
    %v2561 = vld [vmem:[#allocation2 + $0x48] sm:$0xf]
    %v2562 = vsel %vm2547, %v2367, %v2561
    %2563 = vst [vmem:[#allocation2 + $0x48] sm:$0xf] %v2562
    %2564 = vst.msk [vmem:[#allocation2 + $0x54] sm:$0xf] %vm2551, %v2369
    %v2565 = vld [vmem:[#allocation2 + $0x60] sm:$0xf]
    %v2566 = vsel %vm2547, %v2371, %v2565
    %2567 = vst [vmem:[#allocation2 + $0x60] sm:$0xf] %v2566
    %2568 = vst.msk [vmem:[#allocation2 + $0x6c] sm:$0xf] %vm2551, %v2373
    %v2569 = vld [vmem:[#allocation2 + $0x78] sm:$0xf]
    %v2570 = vsel %vm2547, %v2375, %v2569
    %2571 = vst [vmem:[#allocation2 + $0x78] sm:$0xf] %v2570
    %2572 = vst.msk [vmem:[#allocation2 + $0x84] sm:$0xf] %vm2551, %v2377
    %v2573 = vld [vmem:[#allocation2 + $0x90] sm:$0xf]
    %v2574 = vsel %vm2547, %v2379, %v2573
    %2575 = vst [vmem:[#allocation2 + $0x90] sm:$0xf] %v2574
    %2576 = vst.msk [vmem:[#allocation2 + $0x9c] sm:$0xf] %vm2551, %v2381
    %v2577 = vld [vmem:[#allocation2 + $0xa8] sm:$0xf]
    %v2578 = vsel %vm2547, %v2383, %v2577
    %2579 = vst [vmem:[#allocation2 + $0xa8] sm:$0xf] %v2578
    %2580 = vst.msk [vmem:[#allocation2 + $0xb4] sm:$0xf] %vm2551, %v2385
    %v2581 = vld [vmem:[#allocation2 + $0xc0] sm:$0xf]
    %v2582 = vsel %vm2547, %v2387, %v2581
    %2583 = vst [vmem:[#allocation2 + $0xc0] sm:$0xf] %v2582
    %2584 = vst.msk [vmem:[#allocation2 + $0xcc] sm:$0xf] %vm2551, %v2389
    %v2585 = vld [vmem:[#allocation2 + $0xd8] sm:$0xf]
    %v2586 = vsel %vm2547, %v2391, %v2585
    %2587 = vst [vmem:[#allocation2 + $0xd8] sm:$0xf] %v2586
    %2588 = vst.msk [vmem:[#allocation2 + $0xe4] sm:$0xf] %vm2551, %v2393
    %v2589 = vld [vmem:[#allocation2 + $0xf0] sm:$0xf]
    %v2590 = vsel %vm2547, %v2395, %v2589
    %2591 = vst [vmem:[#allocation2 + $0xf0] sm:$0xf] %v2590
    %2592 = vst.msk [vmem:[#allocation2 + $0xfc] sm:$0xf] %vm2551, %v2397
    %v2593 = vld [vmem:[#allocation2 + $0x108] sm:$0xf]
    %v2594 = vsel %vm2547, %v2399, %v2593
    %2595 = vst [vmem:[#allocation2 + $0x108] sm:$0xf] %v2594
    %2596 = vst.msk [vmem:[#allocation2 + $0x114] sm:$0xf] %vm2551, %v2401
    %v2597 = vld [vmem:[#allocation2 + $0x120] sm:$0xf]
    %v2598 = vsel %vm2547, %v2403, %v2597
    %2599 = vst [vmem:[#allocation2 + $0x120] sm:$0xf] %v2598
    %2600 = vst.msk [vmem:[#allocation2 + $0x12c] sm:$0xf] %vm2551, %v2405
    %v2601 = vld [vmem:[#allocation2 + $0x138] sm:$0xf]
    %v2602 = vsel %vm2547, %v2407, %v2601
    %2603 = vst [vmem:[#allocation2 + $0x138] sm:$0xf] %v2602
    %2604 = vst.msk [vmem:[#allocation2 + $0x144] sm:$0xf] %vm2551, %v2409
    %v2605 = vld [vmem:[#allocation2 + $0x150] sm:$0xf]
    %v2606 = vsel %vm2547, %v2411, %v2605
    %2607 = vst [vmem:[#allocation2 + $0x150] sm:$0xf] %v2606
    %2608 = vst.msk [vmem:[#allocation2 + $0x15c] sm:$0xf] %vm2551, %v2413
    %v2609 = vld [vmem:[#allocation2 + $0x168] sm:$0xf]
    %v2610 = vsel %vm2547, %v2415, %v2609
    %2611 = vst [vmem:[#allocation2 + $0x168] sm:$0xf] %v2610
    %2612 = vst.msk [vmem:[#allocation2 + $0x174] sm:$0xf] %vm2551, %v2417
    %v2613 = vld [vmem:[#allocation2 + $0x180] sm:$0xf]
    %v2614 = vsel %vm2547, %v2419, %v2613
    %2615 = vst [vmem:[#allocation2 + $0x180] sm:$0xf] %v2614
    %2616 = vst.msk [vmem:[#allocation2 + $0x18c] sm:$0xf] %vm2551, %v2421
    %v2617 = vld [vmem:[#allocation2 + $0x198] sm:$0xf]
    %v2618 = vsel %vm2547, %v2423, %v2617
    %2619 = vst [vmem:[#allocation2 + $0x198] sm:$0xf] %v2618
    %2620 = vst.msk [vmem:[#allocation2 + $0x1a4] sm:$0xf] %vm2551, %v2425
    %v2621 = vld [vmem:[#allocation2 + $0x1b0] sm:$0xf]
    %v2622 = vsel %vm2547, %v2427, %v2621
    %2623 = vst [vmem:[#allocation2 + $0x1b0] sm:$0xf] %v2622
    %2624 = vst.msk [vmem:[#allocation2 + $0x1bc] sm:$0xf] %vm2551, %v2429
    %v2625 = vld [vmem:[#allocation2 + $0x1c8] sm:$0xf]
    %v2626 = vsel %vm2547, %v2431, %v2625
    %2627 = vst [vmem:[#allocation2 + $0x1c8] sm:$0xf] %v2626
    %2628 = vst.msk [vmem:[#allocation2 + $0x1d4] sm:$0xf] %vm2551, %v2433
    %v2629 = vld [vmem:[#allocation2 + $0x1e0] sm:$0xf]
    %v2630 = vsel %vm2547, %v2435, %v2629
    %2631 = vst [vmem:[#allocation2 + $0x1e0] sm:$0xf] %v2630
    %2632 = vst.msk [vmem:[#allocation2 + $0x1ec] sm:$0xf] %vm2551, %v2437
    %v2633 = vld [vmem:[#allocation2 + $0x1f8] sm:$0xf]
    %v2634 = vsel %vm2547, %v2439, %v2633
    %2635 = vst [vmem:[#allocation2 + $0x1f8] sm:$0xf] %v2634
    %2636 = vst.msk [vmem:[#allocation2 + $0x204] sm:$0xf] %vm2551, %v2441
    %v2637 = vld [vmem:[#allocation2 + $0x210] sm:$0xf]
    %v2638 = vsel %vm2547, %v2443, %v2637
    %2639 = vst [vmem:[#allocation2 + $0x210] sm:$0xf] %v2638
    %2640 = vst.msk [vmem:[#allocation2 + $0x21c] sm:$0xf] %vm2551, %v2445
    %v2641 = vld [vmem:[#allocation2 + $0x228] sm:$0xf]
    %v2642 = vsel %vm2547, %v2447, %v2641
    %2643 = vst [vmem:[#allocation2 + $0x228] sm:$0xf] %v2642
    %2644 = vst.msk [vmem:[#allocation2 + $0x234] sm:$0xf] %vm2551, %v2449
    %v2645 = vld [vmem:[#allocation2 + $0x240] sm:$0xf]
    %v2646 = vsel %vm2547, %v2451, %v2645
    %2647 = vst [vmem:[#allocation2 + $0x240] sm:$0xf] %v2646
    %2648 = vst.msk [vmem:[#allocation2 + $0x24c] sm:$0xf] %vm2551, %v2453
    %v2649 = vld [vmem:[#allocation2 + $0x258] sm:$0xf]
    %v2650 = vsel %vm2547, %v2455, %v2649
    %2651 = vst [vmem:[#allocation2 + $0x258] sm:$0xf] %v2650
    %2652 = vst.msk [vmem:[#allocation2 + $0x264] sm:$0xf] %vm2551, %v2457
    %v2653 = vld [vmem:[#allocation2 + $0x270] sm:$0xf]
    %v2654 = vsel %vm2547, %v2459, %v2653
    %2655 = vst [vmem:[#allocation2 + $0x270] sm:$0xf] %v2654
    %2656 = vst.msk [vmem:[#allocation2 + $0x27c] sm:$0xf] %vm2551, %v2461
    %v2657 = vld [vmem:[#allocation2 + $0x288] sm:$0xf]
    %v2658 = vsel %vm2547, %v2463, %v2657
    %2659 = vst [vmem:[#allocation2 + $0x288] sm:$0xf] %v2658
    %2660 = vst.msk [vmem:[#allocation2 + $0x294] sm:$0xf] %vm2551, %v2465
    %v2661 = vld [vmem:[#allocation2 + $0x2a0] sm:$0xf]
    %v2662 = vsel %vm2547, %v2467, %v2661
    %2663 = vst [vmem:[#allocation2 + $0x2a0] sm:$0xf] %v2662
    %2664 = vst.msk [vmem:[#allocation2 + $0x2ac] sm:$0xf] %vm2551, %v2469
    %v2665 = vld [vmem:[#allocation2 + $0x2b8] sm:$0xf]
    %v2666 = vsel %vm2547, %v2471, %v2665
    %2667 = vst [vmem:[#allocation2 + $0x2b8] sm:$0xf] %v2666
    %2668 = vst.msk [vmem:[#allocation2 + $0x2c4] sm:$0xf] %vm2551, %v2473
    %v2669 = vld [vmem:[#allocation2 + $0x2d0] sm:$0xf]
    %v2670 = vsel %vm2547, %v2475, %v2669
    %2671 = vst [vmem:[#allocation2 + $0x2d0] sm:$0xf] %v2670
    %2672 = vst.msk [vmem:[#allocation2 + $0x2dc] sm:$0xf] %vm2551, %v2477
    %v2673 = vld [vmem:[#allocation2 + $0x2e8] sm:$0xf]
    %v2674 = vsel %vm2547, %v2479, %v2673
    %2675 = vst [vmem:[#allocation2 + $0x2e8] sm:$0xf] %v2674
    %2676 = vst.msk [vmem:[#allocation2 + $0x2f4] sm:$0xf] %vm2551, %v2481
    %2677 = vst.msk [vmem:[#allocation2 + $0x4] sm:$0xf] %vm650, %v585
    %2678 = vst.msk [vmem:[#allocation2 + $0x10] sm:$0xf] %vm650, %v586
    %2679 = vst.msk [vmem:[#allocation2 + $0x1c] sm:$0xf] %vm650, %v587
    %2680 = vst.msk [vmem:[#allocation2 + $0x28] sm:$0xf] %vm650, %v588
    %2681 = vst.msk [vmem:[#allocation2 + $0x34] sm:$0xf] %vm650, %v589
    %2682 = vst.msk [vmem:[#allocation2 + $0x40] sm:$0xf] %vm650, %v590
    %2683 = vst.msk [vmem:[#allocation2 + $0x4c] sm:$0xf] %vm650, %v591
    %2684 = vst.msk [vmem:[#allocation2 + $0x58] sm:$0xf] %vm650, %v592
    %2685 = vst.msk [vmem:[#allocation2 + $0x64] sm:$0xf] %vm650, %v593
    %2686 = vst.msk [vmem:[#allocation2 + $0x70] sm:$0xf] %vm650, %v594
    %2687 = vst.msk [vmem:[#allocation2 + $0x7c] sm:$0xf] %vm650, %v595
    %2688 = vst.msk [vmem:[#allocation2 + $0x88] sm:$0xf] %vm650, %v596
    %2689 = vst.msk [vmem:[#allocation2 + $0x94] sm:$0xf] %vm650, %v597
    %2690 = vst.msk [vmem:[#allocation2 + $0xa0] sm:$0xf] %vm650, %v598
    %2691 = vst.msk [vmem:[#allocation2 + $0xac] sm:$0xf] %vm650, %v599
    %2692 = vst.msk [vmem:[#allocation2 + $0xb8] sm:$0xf] %vm650, %v600
    %2693 = vst.msk [vmem:[#allocation2 + $0xc4] sm:$0xf] %vm650, %v601
    %2694 = vst.msk [vmem:[#allocation2 + $0xd0] sm:$0xf] %vm650, %v602
    %2695 = vst.msk [vmem:[#allocation2 + $0xdc] sm:$0xf] %vm650, %v603
    %2696 = vst.msk [vmem:[#allocation2 + $0xe8] sm:$0xf] %vm650, %v604
    %2697 = vst.msk [vmem:[#allocation2 + $0xf4] sm:$0xf] %vm650, %v605
    %2698 = vst.msk [vmem:[#allocation2 + $0x100] sm:$0xf] %vm650, %v606
    %2699 = vst.msk [vmem:[#allocation2 + $0x10c] sm:$0xf] %vm650, %v607
    %2700 = vst.msk [vmem:[#allocation2 + $0x118] sm:$0xf] %vm650, %v608
    %2701 = vst.msk [vmem:[#allocation2 + $0x124] sm:$0xf] %vm650, %v609
    %2702 = vst.msk [vmem:[#allocation2 + $0x130] sm:$0xf] %vm650, %v610
    %2703 = vst.msk [vmem:[#allocation2 + $0x13c] sm:$0xf] %vm650, %v611
    %2704 = vst.msk [vmem:[#allocation2 + $0x148] sm:$0xf] %vm650, %v612
    %2705 = vst.msk [vmem:[#allocation2 + $0x154] sm:$0xf] %vm650, %v613
    %2706 = vst.msk [vmem:[#allocation2 + $0x160] sm:$0xf] %vm650, %v614
    %2707 = vst.msk [vmem:[#allocation2 + $0x16c] sm:$0xf] %vm650, %v615
    %2708 = vst.msk [vmem:[#allocation2 + $0x178] sm:$0xf] %vm650, %v616
    %2709 = vst.msk [vmem:[#allocation2 + $0x184] sm:$0xf] %vm650, %v617
    %2710 = vst.msk [vmem:[#allocation2 + $0x190] sm:$0xf] %vm650, %v618
    %2711 = vst.msk [vmem:[#allocation2 + $0x19c] sm:$0xf] %vm650, %v619
    %2712 = vst.msk [vmem:[#allocation2 + $0x1a8] sm:$0xf] %vm650, %v620
    %2713 = vst.msk [vmem:[#allocation2 + $0x1b4] sm:$0xf] %vm650, %v621
    %2714 = vst.msk [vmem:[#allocation2 + $0x1c0] sm:$0xf] %vm650, %v622
    %2715 = vst.msk [vmem:[#allocation2 + $0x1cc] sm:$0xf] %vm650, %v623
    %2716 = vst.msk [vmem:[#allocation2 + $0x1d8] sm:$0xf] %vm650, %v624
    %2717 = vst.msk [vmem:[#allocation2 + $0x1e4] sm:$0xf] %vm650, %v625
    %2718 = vst.msk [vmem:[#allocation2 + $0x1f0] sm:$0xf] %vm650, %v626
    %2719 = vst.msk [vmem:[#allocation2 + $0x1fc] sm:$0xf] %vm650, %v627
    %2720 = vst.msk [vmem:[#allocation2 + $0x208] sm:$0xf] %vm650, %v628
    %2721 = vst.msk [vmem:[#allocation2 + $0x214] sm:$0xf] %vm650, %v629
    %2722 = vst.msk [vmem:[#allocation2 + $0x220] sm:$0xf] %vm650, %v630
    %2723 = vst.msk [vmem:[#allocation2 + $0x22c] sm:$0xf] %vm650, %v631
    %2724 = vst.msk [vmem:[#allocation2 + $0x238] sm:$0xf] %vm650, %v632
    %2725 = vst.msk [vmem:[#allocation2 + $0x244] sm:$0xf] %vm650, %v633
    %2726 = vst.msk [vmem:[#allocation2 + $0x250] sm:$0xf] %vm650, %v634
    %2727 = vst.msk [vmem:[#allocation2 + $0x25c] sm:$0xf] %vm650, %v635
    %2728 = vst.msk [vmem:[#allocation2 + $0x268] sm:$0xf] %vm650, %v636
    %2729 = vst.msk [vmem:[#allocation2 + $0x274] sm:$0xf] %vm650, %v637
    %2730 = vst.msk [vmem:[#allocation2 + $0x280] sm:$0xf] %vm650, %v638
    %2731 = vst.msk [vmem:[#allocation2 + $0x28c] sm:$0xf] %vm650, %v639
    %2732 = vst.msk [vmem:[#allocation2 + $0x298] sm:$0xf] %vm650, %v640
    %2733 = vst.msk [vmem:[#allocation2 + $0x2a4] sm:$0xf] %vm650, %v641
    %2734 = vst.msk [vmem:[#allocation2 + $0x2b0] sm:$0xf] %vm650, %v642
    %2735 = vst.msk [vmem:[#allocation2 + $0x2bc] sm:$0xf] %vm650, %v643
    %2736 = vst.msk [vmem:[#allocation2 + $0x2c8] sm:$0xf] %vm650, %v644
    %2737 = vst.msk [vmem:[#allocation2 + $0x2d4] sm:$0xf] %vm650, %v645
    %2738 = vst.msk [vmem:[#allocation2 + $0x2e0] sm:$0xf] %vm650, %v646
    %2739 = vst.msk [vmem:[#allocation2 + $0x2ec] sm:$0xf] %vm650, %v647
    %2740 = vst.msk [vmem:[#allocation2 + $0x2f8] sm:$0xf] %vm650, %v648
    %v2741 = vrot.slane %v2323, 4
    %v2742 = vrot.slane %v2326, 5
    %v2743 = vor.u32 %v2741, %v2742
    %v2744 = vrot.slane %v2743, 4
    %v2745 = vrot.slane %v2334, 5
    %v2746 = vsel %vm1748, %v2744, %v2745
    %v2747 = vrot.slane %v2331, 4
    %v2748 = vor.u32 %v2747, %v2745
    %v2749 = vrot.slane %v2748, 4
    %v2750 = vrot.slane %v2339, 4
    %v2751 = vrot.slane %v2342, 5
    %v2752 = vor.u32 %v2750, %v2751
    %v2753 = vrot.slane %v2752, 4
    %v2754 = vrot.slane %v2350, 5
    %v2755 = vsel %vm1748, %v2753, %v2754
    %v2756 = vrot.slane %v2347, 4
    %v2757 = vor.u32 %v2756, %v2754
    %v2758 = vrot.slane %v2757, 4
    %2759 = vrot.lane.b32.xlu0 %v1754, 32
    %v2760 = vpop.permute.xlu0 %2759
    %2761 = vrot.lane.b32.xlu0 %v1757, 32
    %v2762 = vpop.permute.xlu0 %2761
    %2763 = vrot.lane.b32.xlu0 %v1763, 32
    %v2764 = vpop.permute.xlu0 %2763
    %2765 = vrot.lane.b32.xlu0 %v1766, 32
    %v2766 = vpop.permute.xlu0 %2765
    %2767 = vrot.lane.b32.xlu0 %v1772, 32
    %v2768 = vpop.permute.xlu0 %2767
    %2769 = vrot.lane.b32.xlu0 %v1775, 32
    %v2770 = vpop.permute.xlu0 %2769
    %2771 = vrot.lane.b32.xlu0 %v1781, 32
    %v2772 = vpop.permute.xlu0 %2771
    %2773 = vrot.lane.b32.xlu0 %v1784, 32
    %v2774 = vpop.permute.xlu0 %2773
    %2775 = vrot.lane.b32.xlu0 %v1790, 32
    %v2776 = vpop.permute.xlu0 %2775
    %2777 = vrot.lane.b32.xlu0 %v1793, 32
    %v2778 = vpop.permute.xlu0 %2777
    %2779 = vrot.lane.b32.xlu0 %v1799, 32
    %v2780 = vpop.permute.xlu0 %2779
    %2781 = vrot.lane.b32.xlu0 %v1802, 32
    %v2782 = vpop.permute.xlu0 %2781
    %2783 = vrot.lane.b32.xlu0 %v1808, 32
    %v2784 = vpop.permute.xlu0 %2783
    %2785 = vrot.lane.b32.xlu0 %v1811, 32
    %v2786 = vpop.permute.xlu0 %2785
    %2787 = vrot.lane.b32.xlu0 %v1817, 32
    %v2788 = vpop.permute.xlu0 %2787
    %2789 = vrot.lane.b32.xlu0 %v1820, 32
    %v2790 = vpop.permute.xlu0 %2789
    %2791 = vrot.lane.b32.xlu0 %v1826, 32
    %v2792 = vpop.permute.xlu0 %2791
    %2793 = vrot.lane.b32.xlu0 %v1829, 32
    %v2794 = vpop.permute.xlu0 %2793
    %2795 = vrot.lane.b32.xlu0 %v1835, 32
    %v2796 = vpop.permute.xlu0 %2795
    %2797 = vrot.lane.b32.xlu0 %v1838, 32
    %v2798 = vpop.permute.xlu0 %2797
    %2799 = vrot.lane.b32.xlu0 %v1844, 32
    %v2800 = vpop.permute.xlu0 %2799
    %2801 = vrot.lane.b32.xlu0 %v1847, 32
    %v2802 = vpop.permute.xlu0 %2801
    %2803 = vrot.lane.b32.xlu0 %v1853, 32
    %v2804 = vpop.permute.xlu0 %2803
    %2805 = vrot.lane.b32.xlu0 %v1856, 32
    %v2806 = vpop.permute.xlu0 %2805
    %2807 = vrot.lane.b32.xlu0 %v1862, 32
    %v2808 = vpop.permute.xlu0 %2807
    %2809 = vrot.lane.b32.xlu0 %v1865, 32
    %v2810 = vpop.permute.xlu0 %2809
    %2811 = vrot.lane.b32.xlu0 %v1871, 32
    %v2812 = vpop.permute.xlu0 %2811
    %2813 = vrot.lane.b32.xlu0 %v1874, 32
    %v2814 = vpop.permute.xlu0 %2813
    %2815 = vrot.lane.b32.xlu0 %v1880, 32
    %v2816 = vpop.permute.xlu0 %2815
    %2817 = vrot.lane.b32.xlu0 %v1883, 32
    %v2818 = vpop.permute.xlu0 %2817
    %2819 = vrot.lane.b32.xlu0 %v2746, 32
    %v2820 = vpop.permute.xlu0 %2819
    %2821 = vrot.lane.b32.xlu0 %v2749, 32
    %v2822 = vpop.permute.xlu0 %2821
    %2823 = vrot.lane.b32.xlu0 %v1889, 32
    %v2824 = vpop.permute.xlu0 %2823
    %2825 = vrot.lane.b32.xlu0 %v1892, 32
    %v2826 = vpop.permute.xlu0 %2825
    %2827 = vrot.lane.b32.xlu0 %v1898, 32
    %v2828 = vpop.permute.xlu0 %2827
    %2829 = vrot.lane.b32.xlu0 %v1901, 32
    %v2830 = vpop.permute.xlu0 %2829
    %2831 = vrot.lane.b32.xlu0 %v1907, 32
    %v2832 = vpop.permute.xlu0 %2831
    %2833 = vrot.lane.b32.xlu0 %v1910, 32
    %v2834 = vpop.permute.xlu0 %2833
    %2835 = vrot.lane.b32.xlu0 %v1916, 32
    %v2836 = vpop.permute.xlu0 %2835
    %2837 = vrot.lane.b32.xlu0 %v1919, 32
    %v2838 = vpop.permute.xlu0 %2837
    %2839 = vrot.lane.b32.xlu0 %v1925, 32
    %v2840 = vpop.permute.xlu0 %2839
    %2841 = vrot.lane.b32.xlu0 %v1928, 32
    %v2842 = vpop.permute.xlu0 %2841
    %2843 = vrot.lane.b32.xlu0 %v1934, 32
    %v2844 = vpop.permute.xlu0 %2843
    %2845 = vrot.lane.b32.xlu0 %v1937, 32
    %v2846 = vpop.permute.xlu0 %2845
    %2847 = vrot.lane.b32.xlu0 %v1943, 32
    %v2848 = vpop.permute.xlu0 %2847
    %2849 = vrot.lane.b32.xlu0 %v1946, 32
    %v2850 = vpop.permute.xlu0 %2849
    %2851 = vrot.lane.b32.xlu0 %v1952, 32
    %v2852 = vpop.permute.xlu0 %2851
    %2853 = vrot.lane.b32.xlu0 %v1955, 32
    %v2854 = vpop.permute.xlu0 %2853
    %2855 = vrot.lane.b32.xlu0 %v1961, 32
    %v2856 = vpop.permute.xlu0 %2855
    %2857 = vrot.lane.b32.xlu0 %v1964, 32
    %v2858 = vpop.permute.xlu0 %2857
    %2859 = vrot.lane.b32.xlu0 %v1970, 32
    %v2860 = vpop.permute.xlu0 %2859
    %2861 = vrot.lane.b32.xlu0 %v1973, 32
    %v2862 = vpop.permute.xlu0 %2861
    %2863 = vrot.lane.b32.xlu0 %v1979, 32
    %v2864 = vpop.permute.xlu0 %2863
    %2865 = vrot.lane.b32.xlu0 %v1982, 32
    %v2866 = vpop.permute.xlu0 %2865
    %2867 = vrot.lane.b32.xlu0 %v1988, 32
    %v2868 = vpop.permute.xlu0 %2867
    %2869 = vrot.lane.b32.xlu0 %v1991, 32
    %v2870 = vpop.permute.xlu0 %2869
    %2871 = vrot.lane.b32.xlu0 %v1997, 32
    %v2872 = vpop.permute.xlu0 %2871
    %2873 = vrot.lane.b32.xlu0 %v2000, 32
    %v2874 = vpop.permute.xlu0 %2873
    %2875 = vrot.lane.b32.xlu0 %v2006, 32
    %v2876 = vpop.permute.xlu0 %2875
    %2877 = vrot.lane.b32.xlu0 %v2009, 32
    %v2878 = vpop.permute.xlu0 %2877
    %2879 = vrot.lane.b32.xlu0 %v2015, 32
    %v2880 = vpop.permute.xlu0 %2879
    %2881 = vrot.lane.b32.xlu0 %v2018, 32
    %v2882 = vpop.permute.xlu0 %2881
    %2883 = vrot.lane.b32.xlu0 %v2755, 32
    %v2884 = vpop.permute.xlu0 %2883
    %2885 = vrot.lane.b32.xlu0 %v2758, 32
    %v2886 = vpop.permute.xlu0 %2885
    %2951 = vst.msk [vmem:[#allocation2 + $0x4] sm:$0xf] %vm1685, %v2760
    %vm2952 = vcmask 519424
    %vm2953 = vmand %vm2952, %vm1746
    %v2954 = vld [vmem:[#allocation2 + $0x10] sm:$0xf]
    %v2955 = vsel %vm2953, %v2762, %v2954
    %2956 = vst [vmem:[#allocation2 + $0x10] sm:$0xf] %v2955
    %2957 = vst.msk [vmem:[#allocation2 + $0x1c] sm:$0xf] %vm1685, %v2764
    %v2958 = vld [vmem:[#allocation2 + $0x28] sm:$0xf]
    %v2959 = vsel %vm2953, %v2766, %v2958
    %2960 = vst [vmem:[#allocation2 + $0x28] sm:$0xf] %v2959
    %2961 = vst.msk [vmem:[#allocation2 + $0x34] sm:$0xf] %vm1685, %v2768
    %v2962 = vld [vmem:[#allocation2 + $0x40] sm:$0xf]
    %v2963 = vsel %vm2953, %v2770, %v2962
    %2964 = vst [vmem:[#allocation2 + $0x40] sm:$0xf] %v2963
    %2965 = vst.msk [vmem:[#allocation2 + $0x4c] sm:$0xf] %vm1685, %v2772
    %v2966 = vld [vmem:[#allocation2 + $0x58] sm:$0xf]
    %v2967 = vsel %vm2953, %v2774, %v2966
    %2968 = vst [vmem:[#allocation2 + $0x58] sm:$0xf] %v2967
    %2969 = vst.msk [vmem:[#allocation2 + $0x64] sm:$0xf] %vm1685, %v2776
    %v2970 = vld [vmem:[#allocation2 + $0x70] sm:$0xf]
    %v2971 = vsel %vm2953, %v2778, %v2970
    %2972 = vst [vmem:[#allocation2 + $0x70] sm:$0xf] %v2971
    %2973 = vst.msk [vmem:[#allocation2 + $0x7c] sm:$0xf] %vm1685, %v2780
    %v2974 = vld [vmem:[#allocation2 + $0x88] sm:$0xf]
    %v2975 = vsel %vm2953, %v2782, %v2974
    %2976 = vst [vmem:[#allocation2 + $0x88] sm:$0xf] %v2975
    %2977 = vst.msk [vmem:[#allocation2 + $0x94] sm:$0xf] %vm1685, %v2784
    %v2978 = vld [vmem:[#allocation2 + $0xa0] sm:$0xf]
    %v2979 = vsel %vm2953, %v2786, %v2978
    %2980 = vst [vmem:[#allocation2 + $0xa0] sm:$0xf] %v2979
    %2981 = vst.msk [vmem:[#allocation2 + $0xac] sm:$0xf] %vm1685, %v2788
    %v2982 = vld [vmem:[#allocation2 + $0xb8] sm:$0xf]
    %v2983 = vsel %vm2953, %v2790, %v2982
    %2984 = vst [vmem:[#allocation2 + $0xb8] sm:$0xf] %v2983
    %2985 = vst.msk [vmem:[#allocation2 + $0xc4] sm:$0xf] %vm1685, %v2792
    %v2986 = vld [vmem:[#allocation2 + $0xd0] sm:$0xf]
    %v2987 = vsel %vm2953, %v2794, %v2986
    %2988 = vst [vmem:[#allocation2 + $0xd0] sm:$0xf] %v2987
    %2989 = vst.msk [vmem:[#allocation2 + $0xdc] sm:$0xf] %vm1685, %v2796
    %v2990 = vld [vmem:[#allocation2 + $0xe8] sm:$0xf]
    %v2991 = vsel %vm2953, %v2798, %v2990
    %2992 = vst [vmem:[#allocation2 + $0xe8] sm:$0xf] %v2991
    %2993 = vst.msk [vmem:[#allocation2 + $0xf4] sm:$0xf] %vm1685, %v2800
    %v2994 = vld [vmem:[#allocation2 + $0x100] sm:$0xf]
    %v2995 = vsel %vm2953, %v2802, %v2994
    %2996 = vst [vmem:[#allocation2 + $0x100] sm:$0xf] %v2995
    %2997 = vst.msk [vmem:[#allocation2 + $0x10c] sm:$0xf] %vm1685, %v2804
    %v2998 = vld [vmem:[#allocation2 + $0x118] sm:$0xf]
    %v2999 = vsel %vm2953, %v2806, %v2998
    %3000 = vst [vmem:[#allocation2 + $0x118] sm:$0xf] %v2999
    %3001 = vst.msk [vmem:[#allocation2 + $0x124] sm:$0xf] %vm1685, %v2808
    %v3002 = vld [vmem:[#allocation2 + $0x130] sm:$0xf]
    %v3003 = vsel %vm2953, %v2810, %v3002
    %3004 = vst [vmem:[#allocation2 + $0x130] sm:$0xf] %v3003
    %3005 = vst.msk [vmem:[#allocation2 + $0x13c] sm:$0xf] %vm1685, %v2812
    %v3006 = vld [vmem:[#allocation2 + $0x148] sm:$0xf]
    %v3007 = vsel %vm2953, %v2814, %v3006
    %3008 = vst [vmem:[#allocation2 + $0x148] sm:$0xf] %v3007
    %3009 = vst.msk [vmem:[#allocation2 + $0x154] sm:$0xf] %vm1685, %v2816
    %v3010 = vld [vmem:[#allocation2 + $0x160] sm:$0xf]
    %v3011 = vsel %vm2953, %v2818, %v3010
    %3012 = vst [vmem:[#allocation2 + $0x160] sm:$0xf] %v3011
    %3013 = vst.msk [vmem:[#allocation2 + $0x16c] sm:$0xf] %vm1685, %v2820
    %v3014 = vld [vmem:[#allocation2 + $0x178] sm:$0xf]
    %v3015 = vsel %vm2953, %v2822, %v3014
    %3016 = vst [vmem:[#allocation2 + $0x178] sm:$0xf] %v3015
    %3017 = vst.msk [vmem:[#allocation2 + $0x184] sm:$0xf] %vm1685, %v2824
    %v3018 = vld [vmem:[#allocation2 + $0x190] sm:$0xf]
    %v3019 = vsel %vm2953, %v2826, %v3018
    %3020 = vst [vmem:[#allocation2 + $0x190] sm:$0xf] %v3019
    %3021 = vst.msk [vmem:[#allocation2 + $0x19c] sm:$0xf] %vm1685, %v2828
    %v3022 = vld [vmem:[#allocation2 + $0x1a8] sm:$0xf]
    %v3023 = vsel %vm2953, %v2830, %v3022
    %3024 = vst [vmem:[#allocation2 + $0x1a8] sm:$0xf] %v3023
    %3025 = vst.msk [vmem:[#allocation2 + $0x1b4] sm:$0xf] %vm1685, %v2832
    %v3026 = vld [vmem:[#allocation2 + $0x1c0] sm:$0xf]
    %v3027 = vsel %vm2953, %v2834, %v3026
    %3028 = vst [vmem:[#allocation2 + $0x1c0] sm:$0xf] %v3027
    %3029 = vst.msk [vmem:[#allocation2 + $0x1cc] sm:$0xf] %vm1685, %v2836
    %v3030 = vld [vmem:[#allocation2 + $0x1d8] sm:$0xf]
    %v3031 = vsel %vm2953, %v2838, %v3030
    %3032 = vst [vmem:[#allocation2 + $0x1d8] sm:$0xf] %v3031
    %3033 = vst.msk [vmem:[#allocation2 + $0x1e4] sm:$0xf] %vm1685, %v2840
    %v3034 = vld [vmem:[#allocation2 + $0x1f0] sm:$0xf]
    %v3035 = vsel %vm2953, %v2842, %v3034
    %3036 = vst [vmem:[#allocation2 + $0x1f0] sm:$0xf] %v3035
    %3037 = vst.msk [vmem:[#allocation2 + $0x1fc] sm:$0xf] %vm1685, %v2844
    %v3038 = vld [vmem:[#allocation2 + $0x208] sm:$0xf]
    %v3039 = vsel %vm2953, %v2846, %v3038
    %3040 = vst [vmem:[#allocation2 + $0x208] sm:$0xf] %v3039
    %3041 = vst.msk [vmem:[#allocation2 + $0x214] sm:$0xf] %vm1685, %v2848
    %v3042 = vld [vmem:[#allocation2 + $0x220] sm:$0xf]
    %v3043 = vsel %vm2953, %v2850, %v3042
    %3044 = vst [vmem:[#allocation2 + $0x220] sm:$0xf] %v3043
    %3045 = vst.msk [vmem:[#allocation2 + $0x22c] sm:$0xf] %vm1685, %v2852
    %v3046 = vld [vmem:[#allocation2 + $0x238] sm:$0xf]
    %v3047 = vsel %vm2953, %v2854, %v3046
    %3048 = vst [vmem:[#allocation2 + $0x238] sm:$0xf] %v3047
    %3049 = vst.msk [vmem:[#allocation2 + $0x244] sm:$0xf] %vm1685, %v2856
    %v3050 = vld [vmem:[#allocation2 + $0x250] sm:$0xf]
    %v3051 = vsel %vm2953, %v2858, %v3050
    %3052 = vst [vmem:[#allocation2 + $0x250] sm:$0xf] %v3051
    %3053 = vst.msk [vmem:[#allocation2 + $0x25c] sm:$0xf] %vm1685, %v2860
    %v3054 = vld [vmem:[#allocation2 + $0x268] sm:$0xf]
    %v3055 = vsel %vm2953, %v2862, %v3054
    %3056 = vst [vmem:[#allocation2 + $0x268] sm:$0xf] %v3055
    %3057 = vst.msk [vmem:[#allocation2 + $0x274] sm:$0xf] %vm1685, %v2864
    %v3058 = vld [vmem:[#allocation2 + $0x280] sm:$0xf]
    %v3059 = vsel %vm2953, %v2866, %v3058
    %3060 = vst [vmem:[#allocation2 + $0x280] sm:$0xf] %v3059
    %3061 = vst.msk [vmem:[#allocation2 + $0x28c] sm:$0xf] %vm1685, %v2868
    %v3062 = vld [vmem:[#allocation2 + $0x298] sm:$0xf]
    %v3063 = vsel %vm2953, %v2870, %v3062
    %3064 = vst [vmem:[#allocation2 + $0x298] sm:$0xf] %v3063
    %3065 = vst.msk [vmem:[#allocation2 + $0x2a4] sm:$0xf] %vm1685, %v2872
    %v3066 = vld [vmem:[#allocation2 + $0x2b0] sm:$0xf]
    %v3067 = vsel %vm2953, %v2874, %v3066
    %3068 = vst [vmem:[#allocation2 + $0x2b0] sm:$0xf] %v3067
    %3069 = vst.msk [vmem:[#allocation2 + $0x2bc] sm:$0xf] %vm1685, %v2876
    %v3070 = vld [vmem:[#allocation2 + $0x2c8] sm:$0xf]
    %v3071 = vsel %vm2953, %v2878, %v3070
    %3072 = vst [vmem:[#allocation2 + $0x2c8] sm:$0xf] %v3071
    %3073 = vst.msk [vmem:[#allocation2 + $0x2d4] sm:$0xf] %vm1685, %v2880
    %v3074 = vld [vmem:[#allocation2 + $0x2e0] sm:$0xf]
    %v3075 = vsel %vm2953, %v2882, %v3074
    %3076 = vst [vmem:[#allocation2 + $0x2e0] sm:$0xf] %v3075
    %3077 = vst.msk [vmem:[#allocation2 + $0x2ec] sm:$0xf] %vm1685, %v2884
    %v3078 = vld [vmem:[#allocation2 + $0x2f8] sm:$0xf]
    %v3079 = vsel %vm2953, %v2886, %v3078
    %3080 = vst [vmem:[#allocation2 + $0x2f8] sm:$0xf] %v3079
    %3081 = vrot.lane.b32.xlu0 %v803, 64
    %v3082 = vpop.permute.xlu0 %3081
    %3083 = vrot.lane.b32.xlu0 %v812, 64
    %v3084 = vpop.permute.xlu0 %3083
    %3085 = vrot.lane.b32.xlu0 %v819, 64
    %v3086 = vpop.permute.xlu0 %3085
    %3087 = vrot.lane.b32.xlu0 %v828, 64
    %v3088 = vpop.permute.xlu0 %3087
    %3089 = vrot.lane.b32.xlu0 %v835, 64
    %v3090 = vpop.permute.xlu0 %3089
    %3091 = vrot.lane.b32.xlu0 %v844, 64
    %v3092 = vpop.permute.xlu0 %3091
    %3093 = vrot.lane.b32.xlu0 %v851, 64
    %v3094 = vpop.permute.xlu0 %3093
    %3095 = vrot.lane.b32.xlu0 %v860, 64
    %v3096 = vpop.permute.xlu0 %3095
    %3097 = vrot.lane.b32.xlu0 %v867, 64
    %v3098 = vpop.permute.xlu0 %3097
    %3099 = vrot.lane.b32.xlu0 %v876, 64
    %v3100 = vpop.permute.xlu0 %3099
    %3101 = vrot.lane.b32.xlu0 %v883, 64
    %v3102 = vpop.permute.xlu0 %3101
    %3103 = vrot.lane.b32.xlu0 %v892, 64
    %v3104 = vpop.permute.xlu0 %3103
    %3105 = vrot.lane.b32.xlu0 %v899, 64
    %v3106 = vpop.permute.xlu0 %3105
    %3107 = vrot.lane.b32.xlu0 %v908, 64
    %v3108 = vpop.permute.xlu0 %3107
    %3109 = vrot.lane.b32.xlu0 %v915, 64
    %v3110 = vpop.permute.xlu0 %3109
    %3111 = vrot.lane.b32.xlu0 %v924, 64
    %v3112 = vpop.permute.xlu0 %3111
    %3113 = vrot.lane.b32.xlu0 %v931, 64
    %v3114 = vpop.permute.xlu0 %3113
    %3115 = vrot.lane.b32.xlu0 %v940, 64
    %v3116 = vpop.permute.xlu0 %3115
    %3117 = vrot.lane.b32.xlu0 %v947, 64
    %v3118 = vpop.permute.xlu0 %3117
    %3119 = vrot.lane.b32.xlu0 %v956, 64
    %v3120 = vpop.permute.xlu0 %3119
    %3121 = vrot.lane.b32.xlu0 %v963, 64
    %v3122 = vpop.permute.xlu0 %3121
    %3123 = vrot.lane.b32.xlu0 %v972, 64
    %v3124 = vpop.permute.xlu0 %3123
    %3125 = vrot.lane.b32.xlu0 %v979, 64
    %v3126 = vpop.permute.xlu0 %3125
    %3127 = vrot.lane.b32.xlu0 %v988, 64
    %v3128 = vpop.permute.xlu0 %3127
    %3129 = vrot.lane.b32.xlu0 %v995, 64
    %v3130 = vpop.permute.xlu0 %3129
    %3131 = vrot.lane.b32.xlu0 %v1004, 64
    %v3132 = vpop.permute.xlu0 %3131
    %3133 = vrot.lane.b32.xlu0 %v1011, 64
    %v3134 = vpop.permute.xlu0 %3133
    %3135 = vrot.lane.b32.xlu0 %v1020, 64
    %v3136 = vpop.permute.xlu0 %3135
    %3137 = vrot.lane.b32.xlu0 %v2328, 64
    %v3138 = vpop.permute.xlu0 %3137
    %3139 = vrot.lane.b32.xlu0 %v2337, 64
    %v3140 = vpop.permute.xlu0 %3139
    %3141 = vrot.lane.b32.xlu0 %v1043, 64
    %v3142 = vpop.permute.xlu0 %3141
    %3143 = vrot.lane.b32.xlu0 %v1052, 64
    %v3144 = vpop.permute.xlu0 %3143
    %3145 = vrot.lane.b32.xlu0 %v1059, 64
    %v3146 = vpop.permute.xlu0 %3145
    %3147 = vrot.lane.b32.xlu0 %v1068, 64
    %v3148 = vpop.permute.xlu0 %3147
    %3149 = vrot.lane.b32.xlu0 %v1075, 64
    %v3150 = vpop.permute.xlu0 %3149
    %3151 = vrot.lane.b32.xlu0 %v1084, 64
    %v3152 = vpop.permute.xlu0 %3151
    %3153 = vrot.lane.b32.xlu0 %v1091, 64
    %v3154 = vpop.permute.xlu0 %3153
    %3155 = vrot.lane.b32.xlu0 %v1100, 64
    %v3156 = vpop.permute.xlu0 %3155
    %3157 = vrot.lane.b32.xlu0 %v1107, 64
    %v3158 = vpop.permute.xlu0 %3157
    %3159 = vrot.lane.b32.xlu0 %v1116, 64
    %v3160 = vpop.permute.xlu0 %3159
    %3161 = vrot.lane.b32.xlu0 %v1123, 64
    %v3162 = vpop.permute.xlu0 %3161
    %3163 = vrot.lane.b32.xlu0 %v1132, 64
    %v3164 = vpop.permute.xlu0 %3163
    %3165 = vrot.lane.b32.xlu0 %v1139, 64
    %v3166 = vpop.permute.xlu0 %3165
    %3167 = vrot.lane.b32.xlu0 %v1148, 64
    %v3168 = vpop.permute.xlu0 %3167
    %3169 = vrot.lane.b32.xlu0 %v1155, 64
    %v3170 = vpop.permute.xlu0 %3169
    %3171 = vrot.lane.b32.xlu0 %v1164, 64
    %v3172 = vpop.permute.xlu0 %3171
    %3173 = vrot.lane.b32.xlu0 %v1171, 64
    %v3174 = vpop.permute.xlu0 %3173
    %3175 = vrot.lane.b32.xlu0 %v1180, 64
    %v3176 = vpop.permute.xlu0 %3175
    %3177 = vrot.lane.b32.xlu0 %v1187, 64
    %v3178 = vpop.permute.xlu0 %3177
    %3179 = vrot.lane.b32.xlu0 %v1196, 64
    %v3180 = vpop.permute.xlu0 %3179
    %3181 = vrot.lane.b32.xlu0 %v1203, 64
    %v3182 = vpop.permute.xlu0 %3181
    %3183 = vrot.lane.b32.xlu0 %v1212, 64
    %v3184 = vpop.permute.xlu0 %3183
    %3185 = vrot.lane.b32.xlu0 %v1219, 64
    %v3186 = vpop.permute.xlu0 %3185
    %3187 = vrot.lane.b32.xlu0 %v1228, 64
    %v3188 = vpop.permute.xlu0 %3187
    %3189 = vrot.lane.b32.xlu0 %v1235, 64
    %v3190 = vpop.permute.xlu0 %3189
    %3191 = vrot.lane.b32.xlu0 %v1244, 64
    %v3192 = vpop.permute.xlu0 %3191
    %3193 = vrot.lane.b32.xlu0 %v1251, 64
    %v3194 = vpop.permute.xlu0 %3193
    %3195 = vrot.lane.b32.xlu0 %v1260, 64
    %v3196 = vpop.permute.xlu0 %3195
    %3197 = vrot.lane.b32.xlu0 %v2344, 64
    %v3198 = vpop.permute.xlu0 %3197
    %3199 = vrot.lane.b32.xlu0 %v2353, 64
    %v3200 = vpop.permute.xlu0 %3199
    %vm3261 = vmand %vm2201, %vm1323
    %v3262 = vld [vmem:[#allocation2 + $0x4] sm:$0xf]
    %v3263 = vsel %vm3261, %v3082, %v3262
    %3264 = vst [vmem:[#allocation2 + $0x4] sm:$0xf] %v3263
    %3265 = vst.msk [vmem:[#allocation2 + $0x10] sm:$0xf] %vm2199, %v3084
    %v3266 = vld [vmem:[#allocation2 + $0x1c] sm:$0xf]
    %v3267 = vsel %vm3261, %v3086, %v3266
    %3268 = vst [vmem:[#allocation2 + $0x1c] sm:$0xf] %v3267
    %3269 = vst.msk [vmem:[#allocation2 + $0x28] sm:$0xf] %vm2199, %v3088
    %v3270 = vld [vmem:[#allocation2 + $0x34] sm:$0xf]
    %v3271 = vsel %vm3261, %v3090, %v3270
    %3272 = vst [vmem:[#allocation2 + $0x34] sm:$0xf] %v3271
    %3273 = vst.msk [vmem:[#allocation2 + $0x40] sm:$0xf] %vm2199, %v3092
    %v3274 = vld [vmem:[#allocation2 + $0x4c] sm:$0xf]
    %v3275 = vsel %vm3261, %v3094, %v3274
    %3276 = vst [vmem:[#allocation2 + $0x4c] sm:$0xf] %v3275
    %3277 = vst.msk [vmem:[#allocation2 + $0x58] sm:$0xf] %vm2199, %v3096
    %v3278 = vld [vmem:[#allocation2 + $0x64] sm:$0xf]
    %v3279 = vsel %vm3261, %v3098, %v3278
    %3280 = vst [vmem:[#allocation2 + $0x64] sm:$0xf] %v3279
    %3281 = vst.msk [vmem:[#allocation2 + $0x70] sm:$0xf] %vm2199, %v3100
    %v3282 = vld [vmem:[#allocation2 + $0x7c] sm:$0xf]
    %v3283 = vsel %vm3261, %v3102, %v3282
    %3284 = vst [vmem:[#allocation2 + $0x7c] sm:$0xf] %v3283
    %3285 = vst.msk [vmem:[#allocation2 + $0x88] sm:$0xf] %vm2199, %v3104
    %v3286 = vld [vmem:[#allocation2 + $0x94] sm:$0xf]
    %v3287 = vsel %vm3261, %v3106, %v3286
    %3288 = vst [vmem:[#allocation2 + $0x94] sm:$0xf] %v3287
    %3289 = vst.msk [vmem:[#allocation2 + $0xa0] sm:$0xf] %vm2199, %v3108
    %v3290 = vld [vmem:[#allocation2 + $0xac] sm:$0xf]
    %v3291 = vsel %vm3261, %v3110, %v3290
    %3292 = vst [vmem:[#allocation2 + $0xac] sm:$0xf] %v3291
    %3293 = vst.msk [vmem:[#allocation2 + $0xb8] sm:$0xf] %vm2199, %v3112
    %v3294 = vld [vmem:[#allocation2 + $0xc4] sm:$0xf]
    %v3295 = vsel %vm3261, %v3114, %v3294
    %3296 = vst [vmem:[#allocation2 + $0xc4] sm:$0xf] %v3295
    %3297 = vst.msk [vmem:[#allocation2 + $0xd0] sm:$0xf] %vm2199, %v3116
    %v3298 = vld [vmem:[#allocation2 + $0xdc] sm:$0xf]
    %v3299 = vsel %vm3261, %v3118, %v3298
    %3300 = vst [vmem:[#allocation2 + $0xdc] sm:$0xf] %v3299
    %3301 = vst.msk [vmem:[#allocation2 + $0xe8] sm:$0xf] %vm2199, %v3120
    %v3302 = vld [vmem:[#allocation2 + $0xf4] sm:$0xf]
    %v3303 = vsel %vm3261, %v3122, %v3302
    %3304 = vst [vmem:[#allocation2 + $0xf4] sm:$0xf] %v3303
    %3305 = vst.msk [vmem:[#allocation2 + $0x100] sm:$0xf] %vm2199, %v3124
    %v3306 = vld [vmem:[#allocation2 + $0x10c] sm:$0xf]
    %v3307 = vsel %vm3261, %v3126, %v3306
    %3308 = vst [vmem:[#allocation2 + $0x10c] sm:$0xf] %v3307
    %3309 = vst.msk [vmem:[#allocation2 + $0x118] sm:$0xf] %vm2199, %v3128
    %v3310 = vld [vmem:[#allocation2 + $0x124] sm:$0xf]
    %v3311 = vsel %vm3261, %v3130, %v3310
    %3312 = vst [vmem:[#allocation2 + $0x124] sm:$0xf] %v3311
    %3313 = vst.msk [vmem:[#allocation2 + $0x130] sm:$0xf] %vm2199, %v3132
    %v3314 = vld [vmem:[#allocation2 + $0x13c] sm:$0xf]
    %v3315 = vsel %vm3261, %v3134, %v3314
    %3316 = vst [vmem:[#allocation2 + $0x13c] sm:$0xf] %v3315
    %3317 = vst.msk [vmem:[#allocation2 + $0x148] sm:$0xf] %vm2199, %v3136
    %v3318 = vld [vmem:[#allocation2 + $0x154] sm:$0xf]
    %v3319 = vsel %vm3261, %v3138, %v3318
    %3320 = vst [vmem:[#allocation2 + $0x154] sm:$0xf] %v3319
    %3321 = vst.msk [vmem:[#allocation2 + $0x160] sm:$0xf] %vm2199, %v3140
    %v3322 = vld [vmem:[#allocation2 + $0x184] sm:$0xf]
    %v3323 = vsel %vm3261, %v3142, %v3322
    %3324 = vst [vmem:[#allocation2 + $0x184] sm:$0xf] %v3323
    %3325 = vst.msk [vmem:[#allocation2 + $0x190] sm:$0xf] %vm2199, %v3144
    %v3326 = vld [vmem:[#allocation2 + $0x19c] sm:$0xf]
    %v3327 = vsel %vm3261, %v3146, %v3326
    %3328 = vst [vmem:[#allocation2 + $0x19c] sm:$0xf] %v3327
    %3329 = vst.msk [vmem:[#allocation2 + $0x1a8] sm:$0xf] %vm2199, %v3148
    %v3330 = vld [vmem:[#allocation2 + $0x1b4] sm:$0xf]
    %v3331 = vsel %vm3261, %v3150, %v3330
    %3332 = vst [vmem:[#allocation2 + $0x1b4] sm:$0xf] %v3331
    %3333 = vst.msk [vmem:[#allocation2 + $0x1c0] sm:$0xf] %vm2199, %v3152
    %v3334 = vld [vmem:[#allocation2 + $0x1cc] sm:$0xf]
    %v3335 = vsel %vm3261, %v3154, %v3334
    %3336 = vst [vmem:[#allocation2 + $0x1cc] sm:$0xf] %v3335
    %3337 = vst.msk [vmem:[#allocation2 + $0x1d8] sm:$0xf] %vm2199, %v3156
    %v3338 = vld [vmem:[#allocation2 + $0x1e4] sm:$0xf]
    %v3339 = vsel %vm3261, %v3158, %v3338
    %3340 = vst [vmem:[#allocation2 + $0x1e4] sm:$0xf] %v3339
    %3341 = vst.msk [vmem:[#allocation2 + $0x1f0] sm:$0xf] %vm2199, %v3160
    %v3342 = vld [vmem:[#allocation2 + $0x1fc] sm:$0xf]
    %v3343 = vsel %vm3261, %v3162, %v3342
    %3344 = vst [vmem:[#allocation2 + $0x1fc] sm:$0xf] %v3343
    %3345 = vst.msk [vmem:[#allocation2 + $0x208] sm:$0xf] %vm2199, %v3164
    %v3346 = vld [vmem:[#allocation2 + $0x214] sm:$0xf]
    %v3347 = vsel %vm3261, %v3166, %v3346
    %3348 = vst [vmem:[#allocation2 + $0x214] sm:$0xf] %v3347
    %3349 = vst.msk [vmem:[#allocation2 + $0x220] sm:$0xf] %vm2199, %v3168
    %v3350 = vld [vmem:[#allocation2 + $0x22c] sm:$0xf]
    %v3351 = vsel %vm3261, %v3170, %v3350
    %3352 = vst [vmem:[#allocation2 + $0x22c] sm:$0xf] %v3351
    %3353 = vst.msk [vmem:[#allocation2 + $0x238] sm:$0xf] %vm2199, %v3172
    %v3354 = vld [vmem:[#allocation2 + $0x244] sm:$0xf]
    %v3355 = vsel %vm3261, %v3174, %v3354
    %3356 = vst [vmem:[#allocation2 + $0x244] sm:$0xf] %v3355
    %3357 = vst.msk [vmem:[#allocation2 + $0x250] sm:$0xf] %vm2199, %v3176
    %v3358 = vld [vmem:[#allocation2 + $0x25c] sm:$0xf]
    %v3359 = vsel %vm3261, %v3178, %v3358
    %3360 = vst [vmem:[#allocation2 + $0x25c] sm:$0xf] %v3359
    %3361 = vst.msk [vmem:[#allocation2 + $0x268] sm:$0xf] %vm2199, %v3180
    %v3362 = vld [vmem:[#allocation2 + $0x274] sm:$0xf]
    %v3363 = vsel %vm3261, %v3182, %v3362
    %3364 = vst [vmem:[#allocation2 + $0x274] sm:$0xf] %v3363
    %3365 = vst.msk [vmem:[#allocation2 + $0x280] sm:$0xf] %vm2199, %v3184
    %v3366 = vld [vmem:[#allocation2 + $0x28c] sm:$0xf]
    %v3367 = vsel %vm3261, %v3186, %v3366
    %3368 = vst [vmem:[#allocation2 + $0x28c] sm:$0xf] %v3367
    %3369 = vst.msk [vmem:[#allocation2 + $0x298] sm:$0xf] %vm2199, %v3188
    %v3370 = vld [vmem:[#allocation2 + $0x2a4] sm:$0xf]
    %v3371 = vsel %vm3261, %v3190, %v3370
    %3372 = vst [vmem:[#allocation2 + $0x2a4] sm:$0xf] %v3371
    %3373 = vst.msk [vmem:[#allocation2 + $0x2b0] sm:$0xf] %vm2199, %v3192
    %v3374 = vld [vmem:[#allocation2 + $0x2bc] sm:$0xf]
    %v3375 = vsel %vm3261, %v3194, %v3374
    %3376 = vst [vmem:[#allocation2 + $0x2bc] sm:$0xf] %v3375
    %3377 = vst.msk [vmem:[#allocation2 + $0x2c8] sm:$0xf] %vm2199, %v3196
    %v3378 = vld [vmem:[#allocation2 + $0x2d4] sm:$0xf]
    %v3379 = vsel %vm3261, %v3198, %v3378
    %3380 = vst [vmem:[#allocation2 + $0x2d4] sm:$0xf] %v3379
    %3381 = vst.msk [vmem:[#allocation2 + $0x2e0] sm:$0xf] %vm2199, %v3200
    %3386 = vrot.lane.b32.xlu0 %v587, 96
    %v3387 = vpop.permute.xlu0 %3386
    %3388 = vrot.lane.b32.xlu0 %v588, 96
    %v3389 = vpop.permute.xlu0 %3388
    %3390 = vrot.lane.b32.xlu0 %v589, 96
    %v3391 = vpop.permute.xlu0 %3390
    %3392 = vrot.lane.b32.xlu0 %v590, 96
    %v3393 = vpop.permute.xlu0 %3392
    %3394 = vrot.lane.b32.xlu0 %v591, 96
    %v3395 = vpop.permute.xlu0 %3394
    %3396 = vrot.lane.b32.xlu0 %v592, 96
    %v3397 = vpop.permute.xlu0 %3396
    %3398 = vrot.lane.b32.xlu0 %v593, 96
    %v3399 = vpop.permute.xlu0 %3398
    %3400 = vrot.lane.b32.xlu0 %v594, 96
    %v3401 = vpop.permute.xlu0 %3400
    %3402 = vrot.lane.b32.xlu0 %v595, 96
    %v3403 = vpop.permute.xlu0 %3402
    %3404 = vrot.lane.b32.xlu0 %v596, 96
    %v3405 = vpop.permute.xlu0 %3404
    %3406 = vrot.lane.b32.xlu0 %v597, 96
    %v3407 = vpop.permute.xlu0 %3406
    %3408 = vrot.lane.b32.xlu0 %v598, 96
    %v3409 = vpop.permute.xlu0 %3408
    %3410 = vrot.lane.b32.xlu0 %v599, 96
    %v3411 = vpop.permute.xlu0 %3410
    %3412 = vrot.lane.b32.xlu0 %v600, 96
    %v3413 = vpop.permute.xlu0 %3412
    %3414 = vrot.lane.b32.xlu0 %v601, 96
    %v3415 = vpop.permute.xlu0 %3414
    %3416 = vrot.lane.b32.xlu0 %v602, 96
    %v3417 = vpop.permute.xlu0 %3416
    %3418 = vrot.lane.b32.xlu0 %v603, 96
    %v3419 = vpop.permute.xlu0 %3418
    %3420 = vrot.lane.b32.xlu0 %v604, 96
    %v3421 = vpop.permute.xlu0 %3420
    %3422 = vrot.lane.b32.xlu0 %v605, 96
    %v3423 = vpop.permute.xlu0 %3422
    %3424 = vrot.lane.b32.xlu0 %v606, 96
    %v3425 = vpop.permute.xlu0 %3424
    %3426 = vrot.lane.b32.xlu0 %v607, 96
    %v3427 = vpop.permute.xlu0 %3426
    %3428 = vrot.lane.b32.xlu0 %v608, 96
    %v3429 = vpop.permute.xlu0 %3428
    %3430 = vrot.lane.b32.xlu0 %v609, 96
    %v3431 = vpop.permute.xlu0 %3430
    %3432 = vrot.lane.b32.xlu0 %v610, 96
    %v3433 = vpop.permute.xlu0 %3432
    %3434 = vrot.lane.b32.xlu0 %v611, 96
    %v3435 = vpop.permute.xlu0 %3434
    %3436 = vrot.lane.b32.xlu0 %v612, 96
    %v3437 = vpop.permute.xlu0 %3436
    %3438 = vrot.lane.b32.xlu0 %v613, 96
    %v3439 = vpop.permute.xlu0 %3438
    %3440 = vrot.lane.b32.xlu0 %v614, 96
    %v3441 = vpop.permute.xlu0 %3440
    %3442 = vrot.lane.b32.xlu0 %v615, 96
    %v3443 = vpop.permute.xlu0 %3442
    %3444 = vrot.lane.b32.xlu0 %v616, 96
    %v3445 = vpop.permute.xlu0 %3444
    %3446 = vrot.lane.b32.xlu0 %v619, 96
    %v3447 = vpop.permute.xlu0 %3446
    %3448 = vrot.lane.b32.xlu0 %v620, 96
    %v3449 = vpop.permute.xlu0 %3448
    %3450 = vrot.lane.b32.xlu0 %v621, 96
    %v3451 = vpop.permute.xlu0 %3450
    %3452 = vrot.lane.b32.xlu0 %v622, 96
    %v3453 = vpop.permute.xlu0 %3452
    %3454 = vrot.lane.b32.xlu0 %v623, 96
    %v3455 = vpop.permute.xlu0 %3454
    %3456 = vrot.lane.b32.xlu0 %v624, 96
    %v3457 = vpop.permute.xlu0 %3456
    %3458 = vrot.lane.b32.xlu0 %v625, 96
    %v3459 = vpop.permute.xlu0 %3458
    %3460 = vrot.lane.b32.xlu0 %v626, 96
    %v3461 = vpop.permute.xlu0 %3460
    %3462 = vrot.lane.b32.xlu0 %v627, 96
    %v3463 = vpop.permute.xlu0 %3462
    %3464 = vrot.lane.b32.xlu0 %v628, 96
    %v3465 = vpop.permute.xlu0 %3464
    %3466 = vrot.lane.b32.xlu0 %v629, 96
    %v3467 = vpop.permute.xlu0 %3466
    %3468 = vrot.lane.b32.xlu0 %v630, 96
    %v3469 = vpop.permute.xlu0 %3468
    %3470 = vrot.lane.b32.xlu0 %v631, 96
    %v3471 = vpop.permute.xlu0 %3470
    %3472 = vrot.lane.b32.xlu0 %v632, 96
    %v3473 = vpop.permute.xlu0 %3472
    %3474 = vrot.lane.b32.xlu0 %v633, 96
    %v3475 = vpop.permute.xlu0 %3474
    %3476 = vrot.lane.b32.xlu0 %v634, 96
    %v3477 = vpop.permute.xlu0 %3476
    %3478 = vrot.lane.b32.xlu0 %v635, 96
    %v3479 = vpop.permute.xlu0 %3478
    %3480 = vrot.lane.b32.xlu0 %v636, 96
    %v3481 = vpop.permute.xlu0 %3480
    %3482 = vrot.lane.b32.xlu0 %v637, 96
    %v3483 = vpop.permute.xlu0 %3482
    %3484 = vrot.lane.b32.xlu0 %v638, 96
    %v3485 = vpop.permute.xlu0 %3484
    %3486 = vrot.lane.b32.xlu0 %v639, 96
    %v3487 = vpop.permute.xlu0 %3486
    %3488 = vrot.lane.b32.xlu0 %v640, 96
    %v3489 = vpop.permute.xlu0 %3488
    %3490 = vrot.lane.b32.xlu0 %v641, 96
    %v3491 = vpop.permute.xlu0 %3490
    %3492 = vrot.lane.b32.xlu0 %v642, 96
    %v3493 = vpop.permute.xlu0 %3492
    %3494 = vrot.lane.b32.xlu0 %v643, 96
    %v3495 = vpop.permute.xlu0 %3494
    %3496 = vrot.lane.b32.xlu0 %v644, 96
    %v3497 = vpop.permute.xlu0 %3496
    %3498 = vrot.lane.b32.xlu0 %v645, 96
    %v3499 = vpop.permute.xlu0 %3498
    %3500 = vrot.lane.b32.xlu0 %v646, 96
    %v3501 = vpop.permute.xlu0 %3500
    %3502 = vrot.lane.b32.xlu0 %v647, 96
    %v3503 = vpop.permute.xlu0 %3502
    %3504 = vrot.lane.b32.xlu0 %v648, 96
    %v3505 = vpop.permute.xlu0 %3504
    %3566 = vst.msk [vmem:[#allocation2 + $0x4] sm:$0xf] %vm2551, %v3387
    %3567 = vst.msk [vmem:[#allocation2 + $0x10] sm:$0xf] %vm2551, %v3389
    %3568 = vst.msk [vmem:[#allocation2 + $0x1c] sm:$0xf] %vm2551, %v3391
    %3569 = vst.msk [vmem:[#allocation2 + $0x28] sm:$0xf] %vm2551, %v3393
    %3570 = vst.msk [vmem:[#allocation2 + $0x34] sm:$0xf] %vm2551, %v3395
    %3571 = vst.msk [vmem:[#allocation2 + $0x40] sm:$0xf] %vm2551, %v3397
    %3572 = vst.msk [vmem:[#allocation2 + $0x4c] sm:$0xf] %vm2551, %v3399
    %3573 = vst.msk [vmem:[#allocation2 + $0x58] sm:$0xf] %vm2551, %v3401
    %3574 = vst.msk [vmem:[#allocation2 + $0x64] sm:$0xf] %vm2551, %v3403
    %3575 = vst.msk [vmem:[#allocation2 + $0x70] sm:$0xf] %vm2551, %v3405
    %3576 = vst.msk [vmem:[#allocation2 + $0x7c] sm:$0xf] %vm2551, %v3407
    %3577 = vst.msk [vmem:[#allocation2 + $0x88] sm:$0xf] %vm2551, %v3409
    %3578 = vst.msk [vmem:[#allocation2 + $0x94] sm:$0xf] %vm2551, %v3411
    %3579 = vst.msk [vmem:[#allocation2 + $0xa0] sm:$0xf] %vm2551, %v3413
    %3580 = vst.msk [vmem:[#allocation2 + $0xac] sm:$0xf] %vm2551, %v3415
    %3581 = vst.msk [vmem:[#allocation2 + $0xb8] sm:$0xf] %vm2551, %v3417
    %3582 = vst.msk [vmem:[#allocation2 + $0xc4] sm:$0xf] %vm2551, %v3419
    %3583 = vst.msk [vmem:[#allocation2 + $0xd0] sm:$0xf] %vm2551, %v3421
    %3584 = vst.msk [vmem:[#allocation2 + $0xdc] sm:$0xf] %vm2551, %v3423
    %3585 = vst.msk [vmem:[#allocation2 + $0xe8] sm:$0xf] %vm2551, %v3425
    %3586 = vst.msk [vmem:[#allocation2 + $0xf4] sm:$0xf] %vm2551, %v3427
    %3587 = vst.msk [vmem:[#allocation2 + $0x100] sm:$0xf] %vm2551, %v3429
    %3588 = vst.msk [vmem:[#allocation2 + $0x10c] sm:$0xf] %vm2551, %v3431
    %3589 = vst.msk [vmem:[#allocation2 + $0x118] sm:$0xf] %vm2551, %v3433
    %3590 = vst.msk [vmem:[#allocation2 + $0x124] sm:$0xf] %vm2551, %v3435
    %3591 = vst.msk [vmem:[#allocation2 + $0x130] sm:$0xf] %vm2551, %v3437
    %3592 = vst.msk [vmem:[#allocation2 + $0x13c] sm:$0xf] %vm2551, %v3439
    %3593 = vst.msk [vmem:[#allocation2 + $0x148] sm:$0xf] %vm2551, %v3441
    %3594 = vst.msk [vmem:[#allocation2 + $0x154] sm:$0xf] %vm2551, %v3443
    %3595 = vst.msk [vmem:[#allocation2 + $0x160] sm:$0xf] %vm2551, %v3445
    %3596 = vst.msk [vmem:[#allocation2 + $0x184] sm:$0xf] %vm2551, %v3447
    %3597 = vst.msk [vmem:[#allocation2 + $0x190] sm:$0xf] %vm2551, %v3449
    %3598 = vst.msk [vmem:[#allocation2 + $0x19c] sm:$0xf] %vm2551, %v3451
    %3599 = vst.msk [vmem:[#allocation2 + $0x1a8] sm:$0xf] %vm2551, %v3453
    %3600 = vst.msk [vmem:[#allocation2 + $0x1b4] sm:$0xf] %vm2551, %v3455
    %3601 = vst.msk [vmem:[#allocation2 + $0x1c0] sm:$0xf] %vm2551, %v3457
    %3602 = vst.msk [vmem:[#allocation2 + $0x1cc] sm:$0xf] %vm2551, %v3459
    %3603 = vst.msk [vmem:[#allocation2 + $0x1d8] sm:$0xf] %vm2551, %v3461
    %3604 = vst.msk [vmem:[#allocation2 + $0x1e4] sm:$0xf] %vm2551, %v3463
    %3605 = vst.msk [vmem:[#allocation2 + $0x1f0] sm:$0xf] %vm2551, %v3465
    %3606 = vst.msk [vmem:[#allocation2 + $0x1fc] sm:$0xf] %vm2551, %v3467
    %3607 = vst.msk [vmem:[#allocation2 + $0x208] sm:$0xf] %vm2551, %v3469
    %3608 = vst.msk [vmem:[#allocation2 + $0x214] sm:$0xf] %vm2551, %v3471
    %3609 = vst.msk [vmem:[#allocation2 + $0x220] sm:$0xf] %vm2551, %v3473
    %3610 = vst.msk [vmem:[#allocation2 + $0x22c] sm:$0xf] %vm2551, %v3475
    %3611 = vst.msk [vmem:[#allocation2 + $0x238] sm:$0xf] %vm2551, %v3477
    %3612 = vst.msk [vmem:[#allocation2 + $0x244] sm:$0xf] %vm2551, %v3479
    %3613 = vst.msk [vmem:[#allocation2 + $0x250] sm:$0xf] %vm2551, %v3481
    %3614 = vst.msk [vmem:[#allocation2 + $0x25c] sm:$0xf] %vm2551, %v3483
    %3615 = vst.msk [vmem:[#allocation2 + $0x268] sm:$0xf] %vm2551, %v3485
    %3616 = vst.msk [vmem:[#allocation2 + $0x274] sm:$0xf] %vm2551, %v3487
    %3617 = vst.msk [vmem:[#allocation2 + $0x280] sm:$0xf] %vm2551, %v3489
    %3618 = vst.msk [vmem:[#allocation2 + $0x28c] sm:$0xf] %vm2551, %v3491
    %3619 = vst.msk [vmem:[#allocation2 + $0x298] sm:$0xf] %vm2551, %v3493
    %3620 = vst.msk [vmem:[#allocation2 + $0x2a4] sm:$0xf] %vm2551, %v3495
    %3621 = vst.msk [vmem:[#allocation2 + $0x2b0] sm:$0xf] %vm2551, %v3497
    %3622 = vst.msk [vmem:[#allocation2 + $0x2bc] sm:$0xf] %vm2551, %v3499
    %3623 = vst.msk [vmem:[#allocation2 + $0x2c8] sm:$0xf] %vm2551, %v3501
    %3624 = vst.msk [vmem:[#allocation2 + $0x2d4] sm:$0xf] %vm2551, %v3503
    %3625 = vst.msk [vmem:[#allocation2 + $0x2e0] sm:$0xf] %vm2551, %v3505
    %3686 = vst.msk [vmem:[#allocation2 + $0x8] sm:$0xf] %vm650, %v1763
    %vm3687 = vmand %vm1322, %vm1746
    %v3688 = vld [vmem:[#allocation2 + $0x14] sm:$0xf]
    %v3689 = vsel %vm3687, %v1766, %v3688
    %3690 = vst [vmem:[#allocation2 + $0x14] sm:$0xf] %v3689
    %3691 = vst.msk [vmem:[#allocation2 + $0x20] sm:$0xf] %vm650, %v1772
    %v3692 = vld [vmem:[#allocation2 + $0x2c] sm:$0xf]
    %v3693 = vsel %vm3687, %v1775, %v3692
    %3694 = vst [vmem:[#allocation2 + $0x2c] sm:$0xf] %v3693
    %3695 = vst.msk [vmem:[#allocation2 + $0x38] sm:$0xf] %vm650, %v1781
    %v3696 = vld [vmem:[#allocation2 + $0x44] sm:$0xf]
    %v3697 = vsel %vm3687, %v1784, %v3696
    %3698 = vst [vmem:[#allocation2 + $0x44] sm:$0xf] %v3697
    %3699 = vst.msk [vmem:[#allocation2 + $0x50] sm:$0xf] %vm650, %v1790
    %v3700 = vld [vmem:[#allocation2 + $0x5c] sm:$0xf]
    %v3701 = vsel %vm3687, %v1793, %v3700
    %3702 = vst [vmem:[#allocation2 + $0x5c] sm:$0xf] %v3701
    %3703 = vst.msk [vmem:[#allocation2 + $0x68] sm:$0xf] %vm650, %v1799
    %v3704 = vld [vmem:[#allocation2 + $0x74] sm:$0xf]
    %v3705 = vsel %vm3687, %v1802, %v3704
    %3706 = vst [vmem:[#allocation2 + $0x74] sm:$0xf] %v3705
    %3707 = vst.msk [vmem:[#allocation2 + $0x80] sm:$0xf] %vm650, %v1808
    %v3708 = vld [vmem:[#allocation2 + $0x8c] sm:$0xf]
    %v3709 = vsel %vm3687, %v1811, %v3708
    %3710 = vst [vmem:[#allocation2 + $0x8c] sm:$0xf] %v3709
    %3711 = vst.msk [vmem:[#allocation2 + $0x98] sm:$0xf] %vm650, %v1817
    %v3712 = vld [vmem:[#allocation2 + $0xa4] sm:$0xf]
    %v3713 = vsel %vm3687, %v1820, %v3712
    %3714 = vst [vmem:[#allocation2 + $0xa4] sm:$0xf] %v3713
    %3715 = vst.msk [vmem:[#allocation2 + $0xb0] sm:$0xf] %vm650, %v1826
    %v3716 = vld [vmem:[#allocation2 + $0xbc] sm:$0xf]
    %v3717 = vsel %vm3687, %v1829, %v3716
    %3718 = vst [vmem:[#allocation2 + $0xbc] sm:$0xf] %v3717
    %3719 = vst.msk [vmem:[#allocation2 + $0xc8] sm:$0xf] %vm650, %v1835
    %v3720 = vld [vmem:[#allocation2 + $0xd4] sm:$0xf]
    %v3721 = vsel %vm3687, %v1838, %v3720
    %3722 = vst [vmem:[#allocation2 + $0xd4] sm:$0xf] %v3721
    %3723 = vst.msk [vmem:[#allocation2 + $0xe0] sm:$0xf] %vm650, %v1844
    %v3724 = vld [vmem:[#allocation2 + $0xec] sm:$0xf]
    %v3725 = vsel %vm3687, %v1847, %v3724
    %3726 = vst [vmem:[#allocation2 + $0xec] sm:$0xf] %v3725
    %3727 = vst.msk [vmem:[#allocation2 + $0xf8] sm:$0xf] %vm650, %v1853
    %v3728 = vld [vmem:[#allocation2 + $0x104] sm:$0xf]
    %v3729 = vsel %vm3687, %v1856, %v3728
    %3730 = vst [vmem:[#allocation2 + $0x104] sm:$0xf] %v3729
    %3731 = vst.msk [vmem:[#allocation2 + $0x110] sm:$0xf] %vm650, %v1862
    %v3732 = vld [vmem:[#allocation2 + $0x11c] sm:$0xf]
    %v3733 = vsel %vm3687, %v1865, %v3732
    %3734 = vst [vmem:[#allocation2 + $0x11c] sm:$0xf] %v3733
    %3735 = vst.msk [vmem:[#allocation2 + $0x128] sm:$0xf] %vm650, %v1871
    %v3736 = vld [vmem:[#allocation2 + $0x134] sm:$0xf]
    %v3737 = vsel %vm3687, %v1874, %v3736
    %3738 = vst [vmem:[#allocation2 + $0x134] sm:$0xf] %v3737
    %3739 = vst.msk [vmem:[#allocation2 + $0x140] sm:$0xf] %vm650, %v1880
    %v3740 = vld [vmem:[#allocation2 + $0x14c] sm:$0xf]
    %v3741 = vsel %vm3687, %v1883, %v3740
    %3742 = vst [vmem:[#allocation2 + $0x14c] sm:$0xf] %v3741
    %3743 = vst.msk [vmem:[#allocation2 + $0x158] sm:$0xf] %vm650, %v2746
    %v3744 = vld [vmem:[#allocation2 + $0x164] sm:$0xf]
    %v3745 = vsel %vm3687, %v2749, %v3744
    %3746 = vst [vmem:[#allocation2 + $0x164] sm:$0xf] %v3745
    %3747 = vst.msk [vmem:[#allocation2 + $0x188] sm:$0xf] %vm650, %v1898
    %v3748 = vld [vmem:[#allocation2 + $0x194] sm:$0xf]
    %v3749 = vsel %vm3687, %v1901, %v3748
    %3750 = vst [vmem:[#allocation2 + $0x194] sm:$0xf] %v3749
    %3751 = vst.msk [vmem:[#allocation2 + $0x1a0] sm:$0xf] %vm650, %v1907
    %v3752 = vld [vmem:[#allocation2 + $0x1ac] sm:$0xf]
    %v3753 = vsel %vm3687, %v1910, %v3752
    %3754 = vst [vmem:[#allocation2 + $0x1ac] sm:$0xf] %v3753
    %3755 = vst.msk [vmem:[#allocation2 + $0x1b8] sm:$0xf] %vm650, %v1916
    %v3756 = vld [vmem:[#allocation2 + $0x1c4] sm:$0xf]
    %v3757 = vsel %vm3687, %v1919, %v3756
    %3758 = vst [vmem:[#allocation2 + $0x1c4] sm:$0xf] %v3757
    %3759 = vst.msk [vmem:[#allocation2 + $0x1d0] sm:$0xf] %vm650, %v1925
    %v3760 = vld [vmem:[#allocation2 + $0x1dc] sm:$0xf]
    %v3761 = vsel %vm3687, %v1928, %v3760
    %3762 = vst [vmem:[#allocation2 + $0x1dc] sm:$0xf] %v3761
    %3763 = vst.msk [vmem:[#allocation2 + $0x1e8] sm:$0xf] %vm650, %v1934
    %v3764 = vld [vmem:[#allocation2 + $0x1f4] sm:$0xf]
    %v3765 = vsel %vm3687, %v1937, %v3764
    %3766 = vst [vmem:[#allocation2 + $0x1f4] sm:$0xf] %v3765
    %3767 = vst.msk [vmem:[#allocation2 + $0x200] sm:$0xf] %vm650, %v1943
    %v3768 = vld [vmem:[#allocation2 + $0x20c] sm:$0xf]
    %v3769 = vsel %vm3687, %v1946, %v3768
    %3770 = vst [vmem:[#allocation2 + $0x20c] sm:$0xf] %v3769
    %3771 = vst.msk [vmem:[#allocation2 + $0x218] sm:$0xf] %vm650, %v1952
    %v3772 = vld [vmem:[#allocation2 + $0x224] sm:$0xf]
    %v3773 = vsel %vm3687, %v1955, %v3772
    %3774 = vst [vmem:[#allocation2 + $0x224] sm:$0xf] %v3773
    %3775 = vst.msk [vmem:[#allocation2 + $0x230] sm:$0xf] %vm650, %v1961
    %v3776 = vld [vmem:[#allocation2 + $0x23c] sm:$0xf]
    %v3777 = vsel %vm3687, %v1964, %v3776
    %3778 = vst [vmem:[#allocation2 + $0x23c] sm:$0xf] %v3777
    %3779 = vst.msk [vmem:[#allocation2 + $0x248] sm:$0xf] %vm650, %v1970
    %v3780 = vld [vmem:[#allocation2 + $0x254] sm:$0xf]
    %v3781 = vsel %vm3687, %v1973, %v3780
    %3782 = vst [vmem:[#allocation2 + $0x254] sm:$0xf] %v3781
    %3783 = vst.msk [vmem:[#allocation2 + $0x260] sm:$0xf] %vm650, %v1979
    %v3784 = vld [vmem:[#allocation2 + $0x26c] sm:$0xf]
    %v3785 = vsel %vm3687, %v1982, %v3784
    %3786 = vst [vmem:[#allocation2 + $0x26c] sm:$0xf] %v3785
    %3787 = vst.msk [vmem:[#allocation2 + $0x278] sm:$0xf] %vm650, %v1988
    %v3788 = vld [vmem:[#allocation2 + $0x284] sm:$0xf]
    %v3789 = vsel %vm3687, %v1991, %v3788
    %3790 = vst [vmem:[#allocation2 + $0x284] sm:$0xf] %v3789
    %3791 = vst.msk [vmem:[#allocation2 + $0x290] sm:$0xf] %vm650, %v1997
    %v3792 = vld [vmem:[#allocation2 + $0x29c] sm:$0xf]
    %v3793 = vsel %vm3687, %v2000, %v3792
    %3794 = vst [vmem:[#allocation2 + $0x29c] sm:$0xf] %v3793
    %3795 = vst.msk [vmem:[#allocation2 + $0x2a8] sm:$0xf] %vm650, %v2006
    %v3796 = vld [vmem:[#allocation2 + $0x2b4] sm:$0xf]
    %v3797 = vsel %vm3687, %v2009, %v3796
    %3798 = vst [vmem:[#allocation2 + $0x2b4] sm:$0xf] %v3797
    %3799 = vst.msk [vmem:[#allocation2 + $0x2c0] sm:$0xf] %vm650, %v2015
    %v3800 = vld [vmem:[#allocation2 + $0x2cc] sm:$0xf]
    %v3801 = vsel %vm3687, %v2018, %v3800
    %3802 = vst [vmem:[#allocation2 + $0x2cc] sm:$0xf] %v3801
    %3803 = vst.msk [vmem:[#allocation2 + $0x2d8] sm:$0xf] %vm650, %v2755
    %v3804 = vld [vmem:[#allocation2 + $0x2e4] sm:$0xf]
    %v3805 = vsel %vm3687, %v2758, %v3804
    %3806 = vst [vmem:[#allocation2 + $0x2e4] sm:$0xf] %v3805
    %v3807 = vld [vmem:[#allocation2] sm:$0xff]
    %v3808 = vld [vmem:[#allocation2 + $0x8] sm:$0xf]
    %v3809 = vld [vmem:[#allocation2 + $0xc] sm:$0xff]
    %v3810 = vld [vmem:[#allocation2 + $0x14] sm:$0xf]
    %v3811 = vld [vmem:[#allocation2 + $0x18] sm:$0xff]
    %v3812 = vld [vmem:[#allocation2 + $0x20] sm:$0xf]
    %v3813 = vld [vmem:[#allocation2 + $0x24] sm:$0xff]
    %v3814 = vld [vmem:[#allocation2 + $0x2c] sm:$0xf]
    %v3815 = vld [vmem:[#allocation2 + $0x30] sm:$0xff]
    %v3816 = vld [vmem:[#allocation2 + $0x38] sm:$0xf]
    %v3817 = vld [vmem:[#allocation2 + $0x3c] sm:$0xff]
    %v3818 = vld [vmem:[#allocation2 + $0x44] sm:$0xf]
    %v3819 = vld [vmem:[#allocation2 + $0x48] sm:$0xff]
    %v3820 = vld [vmem:[#allocation2 + $0x50] sm:$0xf]
    %v3821 = vld [vmem:[#allocation2 + $0x54] sm:$0xff]
    %v3822 = vld [vmem:[#allocation2 + $0x5c] sm:$0xf]
    %v3823 = vld [vmem:[#allocation2 + $0x60] sm:$0xff]
    %v3824 = vld [vmem:[#allocation2 + $0x68] sm:$0xf]
    %v3825 = vld [vmem:[#allocation2 + $0x6c] sm:$0xff]
    %v3826 = vld [vmem:[#allocation2 + $0x74] sm:$0xf]
    %v3827 = vld [vmem:[#allocation2 + $0x78] sm:$0xff]
    %v3828 = vld [vmem:[#allocation2 + $0x80] sm:$0xf]
    %v3829 = vld [vmem:[#allocation2 + $0x84] sm:$0xff]
    %v3830 = vld [vmem:[#allocation2 + $0x8c] sm:$0xf]
    %v3831 = vld [vmem:[#allocation2 + $0x90] sm:$0xff]
    %v3832 = vld [vmem:[#allocation2 + $0x98] sm:$0xf]
    %v3833 = vld [vmem:[#allocation2 + $0x9c] sm:$0xff]
    %v3834 = vld [vmem:[#allocation2 + $0xa4] sm:$0xf]
    %v3835 = vld [vmem:[#allocation2 + $0xa8] sm:$0xff]
    %v3836 = vld [vmem:[#allocation2 + $0xb0] sm:$0xf]
    %v3837 = vld [vmem:[#allocation2 + $0xb4] sm:$0xff]
    %v3838 = vld [vmem:[#allocation2 + $0xbc] sm:$0xf]
    %v3839 = vld [vmem:[#allocation2 + $0xc0] sm:$0xff]
    %v3840 = vld [vmem:[#allocation2 + $0xc8] sm:$0xf]
    %v3841 = vld [vmem:[#allocation2 + $0xcc] sm:$0xff]
    %v3842 = vld [vmem:[#allocation2 + $0xd4] sm:$0xf]
    %v3843 = vld [vmem:[#allocation2 + $0xd8] sm:$0xff]
    %v3844 = vld [vmem:[#allocation2 + $0xe0] sm:$0xf]
    %v3845 = vld [vmem:[#allocation2 + $0xe4] sm:$0xff]
    %v3846 = vld [vmem:[#allocation2 + $0xec] sm:$0xf]
    %v3847 = vld [vmem:[#allocation2 + $0xf0] sm:$0xff]
    %v3848 = vld [vmem:[#allocation2 + $0xf8] sm:$0xf]
    %v3849 = vld [vmem:[#allocation2 + $0xfc] sm:$0xff]
    %v3850 = vld [vmem:[#allocation2 + $0x104] sm:$0xf]
    %v3851 = vld [vmem:[#allocation2 + $0x108] sm:$0xff]
    %v3852 = vld [vmem:[#allocation2 + $0x110] sm:$0xf]
    %v3853 = vld [vmem:[#allocation2 + $0x114] sm:$0xff]
    %v3854 = vld [vmem:[#allocation2 + $0x11c] sm:$0xf]
    %v3855 = vld [vmem:[#allocation2 + $0x120] sm:$0xff]
    %v3856 = vld [vmem:[#allocation2 + $0x128] sm:$0xf]
    %v3857 = vld [vmem:[#allocation2 + $0x12c] sm:$0xff]
    %v3858 = vld [vmem:[#allocation2 + $0x134] sm:$0xf]
    %v3859 = vld [vmem:[#allocation2 + $0x138] sm:$0xff]
    %v3860 = vld [vmem:[#allocation2 + $0x140] sm:$0xf]
    %v3861 = vld [vmem:[#allocation2 + $0x144] sm:$0xff]
    %v3862 = vld [vmem:[#allocation2 + $0x14c] sm:$0xf]
    %v3863 = vld [vmem:[#allocation2 + $0x150] sm:$0xff]
    %v3864 = vld [vmem:[#allocation2 + $0x158] sm:$0xf]
    %v3865 = vld [vmem:[#allocation2 + $0x15c] sm:$0xff]
    %v3866 = vld [vmem:[#allocation2 + $0x164] sm:$0xf]
    %v3867 = vld [vmem:[#allocation2 + $0x168] sm:$0xff]
    %v3868 = vld [vmem:[#allocation2 + $0x170] sm:$0xf]
    %v3869 = vld [vmem:[#allocation2 + $0x174] sm:$0xff]
    %v3870 = vld [vmem:[#allocation2 + $0x17c] sm:$0xf]
    %v3871 = vld [vmem:[#allocation2 + $0x180] sm:$0xff]
    %v3872 = vld [vmem:[#allocation2 + $0x188] sm:$0xf]
    %v3873 = vld [vmem:[#allocation2 + $0x18c] sm:$0xff]
    %v3874 = vld [vmem:[#allocation2 + $0x194] sm:$0xf]
    %v3875 = vld [vmem:[#allocation2 + $0x198] sm:$0xff]
    %v3876 = vld [vmem:[#allocation2 + $0x1a0] sm:$0xf]
    %v3877 = vld [vmem:[#allocation2 + $0x1a4] sm:$0xff]
    %v3878 = vld [vmem:[#allocation2 + $0x1ac] sm:$0xf]
    %v3879 = vld [vmem:[#allocation2 + $0x1b0] sm:$0xff]
    %v3880 = vld [vmem:[#allocation2 + $0x1b8] sm:$0xf]
    %v3881 = vld [vmem:[#allocation2 + $0x1bc] sm:$0xff]
    %v3882 = vld [vmem:[#allocation2 + $0x1c4] sm:$0xf]
    %v3883 = vld [vmem:[#allocation2 + $0x1c8] sm:$0xff]
    %v3884 = vld [vmem:[#allocation2 + $0x1d0] sm:$0xf]
    %v3885 = vld [vmem:[#allocation2 + $0x1d4] sm:$0xff]
    %v3886 = vld [vmem:[#allocation2 + $0x1dc] sm:$0xf]
    %v3887 = vld [vmem:[#allocation2 + $0x1e0] sm:$0xff]
    %v3888 = vld [vmem:[#allocation2 + $0x1e8] sm:$0xf]
    %v3889 = vld [vmem:[#allocation2 + $0x1ec] sm:$0xff]
    %v3890 = vld [vmem:[#allocation2 + $0x1f4] sm:$0xf]
    %v3891 = vld [vmem:[#allocation2 + $0x1f8] sm:$0xff]
    %v3892 = vld [vmem:[#allocation2 + $0x200] sm:$0xf]
    %v3893 = vld [vmem:[#allocation2 + $0x204] sm:$0xff]
    %v3894 = vld [vmem:[#allocation2 + $0x20c] sm:$0xf]
    %v3895 = vld [vmem:[#allocation2 + $0x210] sm:$0xff]
    %v3896 = vld [vmem:[#allocation2 + $0x218] sm:$0xf]
    %v3897 = vld [vmem:[#allocation2 + $0x21c] sm:$0xff]
    %v3898 = vld [vmem:[#allocation2 + $0x224] sm:$0xf]
    %v3899 = vld [vmem:[#allocation2 + $0x228] sm:$0xff]
    %v3900 = vld [vmem:[#allocation2 + $0x230] sm:$0xf]
    %v3901 = vld [vmem:[#allocation2 + $0x234] sm:$0xff]
    %v3902 = vld [vmem:[#allocation2 + $0x23c] sm:$0xf]
    %v3903 = vld [vmem:[#allocation2 + $0x240] sm:$0xff]
    %v3904 = vld [vmem:[#allocation2 + $0x248] sm:$0xf]
    %v3905 = vld [vmem:[#allocation2 + $0x24c] sm:$0xff]
    %v3906 = vld [vmem:[#allocation2 + $0x254] sm:$0xf]
    %v3907 = vld [vmem:[#allocation2 + $0x258] sm:$0xff]
    %v3908 = vld [vmem:[#allocation2 + $0x260] sm:$0xf]
    %v3909 = vld [vmem:[#allocation2 + $0x264] sm:$0xff]
    %v3910 = vld [vmem:[#allocation2 + $0x26c] sm:$0xf]
    %v3911 = vld [vmem:[#allocation2 + $0x270] sm:$0xff]
    %v3912 = vld [vmem:[#allocation2 + $0x278] sm:$0xf]
    %v3913 = vld [vmem:[#allocation2 + $0x27c] sm:$0xff]
    %v3914 = vld [vmem:[#allocation2 + $0x284] sm:$0xf]
    %v3915 = vld [vmem:[#allocation2 + $0x288] sm:$0xff]
    %v3916 = vld [vmem:[#allocation2 + $0x290] sm:$0xf]
    %v3917 = vld [vmem:[#allocation2 + $0x294] sm:$0xff]
    %v3918 = vld [vmem:[#allocation2 + $0x29c] sm:$0xf]
    %v3919 = vld [vmem:[#allocation2 + $0x2a0] sm:$0xff]
    %v3920 = vld [vmem:[#allocation2 + $0x2a8] sm:$0xf]
    %v3921 = vld [vmem:[#allocation2 + $0x2ac] sm:$0xff]
    %v3922 = vld [vmem:[#allocation2 + $0x2b4] sm:$0xf]
    %v3923 = vld [vmem:[#allocation2 + $0x2b8] sm:$0xff]
    %v3924 = vld [vmem:[#allocation2 + $0x2c0] sm:$0xf]
    %v3925 = vld [vmem:[#allocation2 + $0x2c4] sm:$0xff]
    %v3926 = vld [vmem:[#allocation2 + $0x2cc] sm:$0xf]
    %v3927 = vld [vmem:[#allocation2 + $0x2d0] sm:$0xff]
    %v3928 = vld [vmem:[#allocation2 + $0x2d8] sm:$0xf]
    %v3929 = vld [vmem:[#allocation2 + $0x2dc] sm:$0xff]
    %v3930 = vld [vmem:[#allocation2 + $0x2e4] sm:$0xf]
    %v3931 = vld [vmem:[#allocation2 + $0x2e8] sm:$0xff]
    %v3932 = vld [vmem:[#allocation2 + $0x2f0] sm:$0xf]
    %v3933 = vld [vmem:[#allocation2 + $0x2f4] sm:$0xff]
    %v3934 = vld [vmem:[#allocation2 + $0x2fc] sm:$0xf]
    %v3935 = vld [vmem:[%s3] sm:$0xf]
    %v3936 = vld [vmem:[%s3 + $0x4] sm:$0xf]
    %v3937 = vld [vmem:[%s3 + $0x8] sm:$0xf]
    %v3938 = vld [vmem:[%s3 + $0xc] sm:$0xf]
    %v3939 = vld [vmem:[%s3 + $0x10] sm:$0xf]
    %v3940 = vld [vmem:[%s3 + $0x14] sm:$0xf]
    %v3941 = vld [vmem:[%s3 + $0x18] sm:$0xf]
    %v3942 = vld [vmem:[%s3 + $0x1c] sm:$0xf]
    %v3943 = vld [vmem:[%s3 + $0x20] sm:$0xf]
    %v3944 = vld [vmem:[%s3 + $0x24] sm:$0xf]
    %v3945 = vld [vmem:[%s3 + $0x28] sm:$0xf]
    %v3946 = vld [vmem:[%s3 + $0x2c] sm:$0xf]
    %v3947 = vld [vmem:[%s3 + $0x30] sm:$0xf]
    %v3948 = vld [vmem:[%s3 + $0x34] sm:$0xf]
    %v3949 = vld [vmem:[%s3 + $0x38] sm:$0xf]
    %v3950 = vld [vmem:[%s3 + $0x3c] sm:$0xf]
    %v3951 = vld [vmem:[%s3 + $0x40] sm:$0xf]
    %v3952 = vld [vmem:[%s3 + $0x44] sm:$0xf]
    %v3953 = vld [vmem:[%s3 + $0x48] sm:$0xf]
    %v3954 = vld [vmem:[%s3 + $0x4c] sm:$0xf]
    %v3955 = vld [vmem:[%s3 + $0x50] sm:$0xf]
    %v3956 = vld [vmem:[%s3 + $0x54] sm:$0xf]
    %v3957 = vld [vmem:[%s3 + $0x58] sm:$0xf]
    %v3958 = vld [vmem:[%s3 + $0x5c] sm:$0xf]
    %v3959 = vld [vmem:[%s3 + $0x60] sm:$0xf]
    %v3960 = vld [vmem:[%s3 + $0x64] sm:$0xf]
    %v3961 = vld [vmem:[%s3 + $0x68] sm:$0xf]
    %v3962 = vld [vmem:[%s3 + $0x6c] sm:$0xf]
    %v3963 = vld [vmem:[%s3 + $0x70] sm:$0xf]
    %v3964 = vld [vmem:[%s3 + $0x74] sm:$0xf]
    %v3965 = vld [vmem:[%s3 + $0x78] sm:$0xf]
    %v3966 = vld [vmem:[%s3 + $0x7c] sm:$0xf]
    %v3967 = vld [vmem:[%s3 + $0x80] sm:$0xf]
    %v3968 = vld [vmem:[%s3 + $0x84] sm:$0xf]
    %v3969 = vld [vmem:[%s3 + $0x88] sm:$0xf]
    %v3970 = vld [vmem:[%s3 + $0x8c] sm:$0xf]
    %v3971 = vld [vmem:[%s4] sm:$0x1]
    %v3973 = vperm.slane %v3971, 0
    %v4103 = vunpack.c.l.b16 %v3807
    %v4104 = vunpack.c.h.b16 %v3807
    %v4105 = vunpack.c.l.b16 %v3808
    %v4106 = vunpack.c.l.b16 %v3809
    %v4107 = vunpack.c.h.b16 %v3809
    %v4108 = vunpack.c.l.b16 %v3810
    %v4109 = vunpack.c.l.b16 %v3811
    %v4110 = vunpack.c.h.b16 %v3811
    %v4111 = vunpack.c.l.b16 %v3812
    %v4112 = vunpack.c.l.b16 %v3813
    %v4113 = vunpack.c.h.b16 %v3813
    %v4114 = vunpack.c.l.b16 %v3814
    %v4115 = vunpack.c.l.b16 %v3815
    %v4116 = vunpack.c.h.b16 %v3815
    %v4117 = vunpack.c.l.b16 %v3816
    %v4118 = vunpack.c.l.b16 %v3817
    %v4119 = vunpack.c.h.b16 %v3817
    %v4120 = vunpack.c.l.b16 %v3818
    %v4121 = vunpack.c.l.b16 %v3819
    %v4122 = vunpack.c.h.b16 %v3819
    %v4123 = vunpack.c.l.b16 %v3820
    %v4124 = vunpack.c.l.b16 %v3821
    %v4125 = vunpack.c.h.b16 %v3821
    %v4126 = vunpack.c.l.b16 %v3822
    %v4127 = vunpack.c.l.b16 %v3823
    %v4128 = vunpack.c.h.b16 %v3823
    %v4129 = vunpack.c.l.b16 %v3824
    %v4130 = vunpack.c.l.b16 %v3825
    %v4131 = vunpack.c.h.b16 %v3825
    %v4132 = vunpack.c.l.b16 %v3826
    %v4133 = vunpack.c.l.b16 %v3827
    %v4134 = vunpack.c.h.b16 %v3827
    %v4135 = vunpack.c.l.b16 %v3828
    %v4136 = vunpack.c.l.b16 %v3829
    %v4137 = vunpack.c.h.b16 %v3829
    %v4138 = vunpack.c.l.b16 %v3830
    %v4139 = vunpack.c.l.b16 %v3831
    %v4140 = vunpack.c.h.b16 %v3831
    %v4141 = vunpack.c.l.b16 %v3832
    %v4142 = vunpack.c.l.b16 %v3833
    %v4143 = vunpack.c.h.b16 %v3833
    %v4144 = vunpack.c.l.b16 %v3834
    %v4145 = vunpack.c.l.b16 %v3835
    %v4146 = vunpack.c.h.b16 %v3835
    %v4147 = vunpack.c.l.b16 %v3836
    %v4148 = vunpack.c.l.b16 %v3837
    %v4149 = vunpack.c.h.b16 %v3837
    %v4150 = vunpack.c.l.b16 %v3838
    %v4151 = vunpack.c.l.b16 %v3839
    %v4152 = vunpack.c.h.b16 %v3839
    %v4153 = vunpack.c.l.b16 %v3840
    %v4154 = vunpack.c.l.b16 %v3841
    %v4155 = vunpack.c.h.b16 %v3841
    %v4156 = vunpack.c.l.b16 %v3842
    %v4157 = vunpack.c.l.b16 %v3843
    %v4158 = vunpack.c.h.b16 %v3843
    %v4159 = vunpack.c.l.b16 %v3844
    %v4160 = vunpack.c.l.b16 %v3845
    %v4161 = vunpack.c.h.b16 %v3845
    %v4162 = vunpack.c.l.b16 %v3846
    %v4163 = vunpack.c.l.b16 %v3847
    %v4164 = vunpack.c.h.b16 %v3847
    %v4165 = vunpack.c.l.b16 %v3848
    %v4166 = vunpack.c.l.b16 %v3849
    %v4167 = vunpack.c.h.b16 %v3849
    %v4168 = vunpack.c.l.b16 %v3850
    %v4169 = vunpack.c.l.b16 %v3851
    %v4170 = vunpack.c.h.b16 %v3851
    %v4171 = vunpack.c.l.b16 %v3852
    %v4172 = vunpack.c.l.b16 %v3853
    %v4173 = vunpack.c.h.b16 %v3853
    %v4174 = vunpack.c.l.b16 %v3854
    %v4175 = vunpack.c.l.b16 %v3855
    %v4176 = vunpack.c.h.b16 %v3855
    %v4177 = vunpack.c.l.b16 %v3856
    %v4178 = vunpack.c.l.b16 %v3857
    %v4179 = vunpack.c.h.b16 %v3857
    %v4180 = vunpack.c.l.b16 %v3858
    %v4181 = vunpack.c.l.b16 %v3859
    %v4182 = vunpack.c.h.b16 %v3859
    %v4183 = vunpack.c.l.b16 %v3860
    %v4184 = vunpack.c.l.b16 %v3861
    %v4185 = vunpack.c.h.b16 %v3861
    %v4186 = vunpack.c.l.b16 %v3862
    %v4187 = vunpack.c.l.b16 %v3863
    %v4188 = vunpack.c.h.b16 %v3863
    %v4189 = vunpack.c.l.b16 %v3864
    %v4190 = vunpack.c.l.b16 %v3865
    %v4191 = vunpack.c.h.b16 %v3865
    %v4192 = vunpack.c.l.b16 %v3866
    %v4193 = vunpack.c.l.b16 %v3867
    %v4194 = vunpack.c.h.b16 %v3867
    %v4195 = vunpack.c.l.b16 %v3868
    %v4196 = vunpack.c.l.b16 %v3869
    %v4197 = vunpack.c.h.b16 %v3869
    %v4198 = vunpack.c.l.b16 %v3870
    %v4199 = vunpack.c.l.b16 %v3871
    %v4200 = vunpack.c.h.b16 %v3871
    %v4201 = vunpack.c.l.b16 %v3872
    %v4202 = vunpack.c.l.b16 %v3873
    %v4203 = vunpack.c.h.b16 %v3873
    %v4204 = vunpack.c.l.b16 %v3874
    %v4205 = vunpack.c.l.b16 %v3875
    %v4206 = vunpack.c.h.b16 %v3875
    %v4207 = vunpack.c.l.b16 %v3876
    %v4208 = vunpack.c.l.b16 %v3877
    %v4209 = vunpack.c.h.b16 %v3877
    %v4210 = vunpack.c.l.b16 %v3878
    %v4211 = vunpack.c.l.b16 %v3879
    %v4212 = vunpack.c.h.b16 %v3879
    %v4213 = vunpack.c.l.b16 %v3880
    %v4214 = vunpack.c.l.b16 %v3881
    %v4215 = vunpack.c.h.b16 %v3881
    %v4216 = vunpack.c.l.b16 %v3882
    %v4217 = vunpack.c.l.b16 %v3883
    %v4218 = vunpack.c.h.b16 %v3883
    %v4219 = vunpack.c.l.b16 %v3884
    %v4220 = vunpack.c.l.b16 %v3885
    %v4221 = vunpack.c.h.b16 %v3885
    %v4222 = vunpack.c.l.b16 %v3886
    %v4223 = vunpack.c.l.b16 %v3887
    %v4224 = vunpack.c.h.b16 %v3887
    %v4225 = vunpack.c.l.b16 %v3888
    %v4226 = vunpack.c.l.b16 %v3889
    %v4227 = vunpack.c.h.b16 %v3889
    %v4228 = vunpack.c.l.b16 %v3890
    %v4229 = vunpack.c.l.b16 %v3891
    %v4230 = vunpack.c.h.b16 %v3891
    %v4231 = vunpack.c.l.b16 %v3892
    %v4232 = vunpack.c.l.b16 %v3893
    %v4233 = vunpack.c.h.b16 %v3893
    %v4234 = vunpack.c.l.b16 %v3894
    %v4235 = vunpack.c.l.b16 %v3895
    %v4236 = vunpack.c.h.b16 %v3895
    %v4237 = vunpack.c.l.b16 %v3896
    %v4238 = vunpack.c.l.b16 %v3897
    %v4239 = vunpack.c.h.b16 %v3897
    %v4240 = vunpack.c.l.b16 %v3898
    %v4241 = vunpack.c.l.b16 %v3899
    %v4242 = vunpack.c.h.b16 %v3899
    %v4243 = vunpack.c.l.b16 %v3900
    %v4244 = vunpack.c.l.b16 %v3901
    %v4245 = vunpack.c.h.b16 %v3901
    %v4246 = vunpack.c.l.b16 %v3902
    %v4247 = vunpack.c.l.b16 %v3903
    %v4248 = vunpack.c.h.b16 %v3903
    %v4249 = vunpack.c.l.b16 %v3904
    %v4250 = vunpack.c.l.b16 %v3905
    %v4251 = vunpack.c.h.b16 %v3905
    %v4252 = vunpack.c.l.b16 %v3906
    %v4253 = vunpack.c.l.b16 %v3907
    %v4254 = vunpack.c.h.b16 %v3907
    %v4255 = vunpack.c.l.b16 %v3908
    %v4256 = vunpack.c.l.b16 %v3909
    %v4257 = vunpack.c.h.b16 %v3909
    %v4258 = vunpack.c.l.b16 %v3910
    %v4259 = vunpack.c.l.b16 %v3911
    %v4260 = vunpack.c.h.b16 %v3911
    %v4261 = vunpack.c.l.b16 %v3912
    %v4262 = vunpack.c.l.b16 %v3913
    %v4263 = vunpack.c.h.b16 %v3913
    %v4264 = vunpack.c.l.b16 %v3914
    %v4265 = vunpack.c.l.b16 %v3915
    %v4266 = vunpack.c.h.b16 %v3915
    %v4267 = vunpack.c.l.b16 %v3916
    %v4268 = vunpack.c.l.b16 %v3917
    %v4269 = vunpack.c.h.b16 %v3917
    %v4270 = vunpack.c.l.b16 %v3918
    %v4271 = vunpack.c.l.b16 %v3919
    %v4272 = vunpack.c.h.b16 %v3919
    %v4273 = vunpack.c.l.b16 %v3920
    %v4274 = vunpack.c.l.b16 %v3921
    %v4275 = vunpack.c.h.b16 %v3921
    %v4276 = vunpack.c.l.b16 %v3922
    %v4277 = vunpack.c.l.b16 %v3923
    %v4278 = vunpack.c.h.b16 %v3923
    %v4279 = vunpack.c.l.b16 %v3924
    %v4280 = vunpack.c.l.b16 %v3925
    %v4281 = vunpack.c.h.b16 %v3925
    %v4282 = vunpack.c.l.b16 %v3926
    %v4283 = vunpack.c.l.b16 %v3927
    %v4284 = vunpack.c.h.b16 %v3927
    %v4285 = vunpack.c.l.b16 %v3928
    %v4286 = vunpack.c.l.b16 %v3929
    %v4287 = vunpack.c.h.b16 %v3929
    %v4288 = vunpack.c.l.b16 %v3930
    %v4289 = vunpack.c.l.b16 %v3931
    %v4290 = vunpack.c.h.b16 %v3931
    %v4291 = vunpack.c.l.b16 %v3932
    %v4292 = vunpack.c.l.b16 %v3933
    %v4293 = vunpack.c.h.b16 %v3933
    %v4294 = vunpack.c.l.b16 %v3934
    %v4295 = vpack.c.b16 %v4106, %v4103
    %v4296 = vpack.c.b16 %v4107, %v4104
    %v4297 = vpack.c.b16 %v4108, %v4105
    %v4298 = vpack.c.b16 %v4112, %v4109
    %v4299 = vpack.c.b16 %v4113, %v4110
    %v4300 = vpack.c.b16 %v4114, %v4111
    %v4301 = vpack.c.b16 %v4118, %v4115
    %v4302 = vpack.c.b16 %v4119, %v4116
    %v4303 = vpack.c.b16 %v4120, %v4117
    %v4304 = vpack.c.b16 %v4124, %v4121
    %v4305 = vpack.c.b16 %v4125, %v4122
    %v4306 = vpack.c.b16 %v4126, %v4123
    %v4307 = vpack.c.b16 %v4130, %v4127
    %v4308 = vpack.c.b16 %v4131, %v4128
    %v4309 = vpack.c.b16 %v4132, %v4129
    %v4310 = vpack.c.b16 %v4136, %v4133
    %v4311 = vpack.c.b16 %v4137, %v4134
    %v4312 = vpack.c.b16 %v4138, %v4135
    %v4313 = vpack.c.b16 %v4142, %v4139
    %v4314 = vpack.c.b16 %v4143, %v4140
    %v4315 = vpack.c.b16 %v4144, %v4141
    %v4316 = vpack.c.b16 %v4148, %v4145
    %v4317 = vpack.c.b16 %v4149, %v4146
    %v4318 = vpack.c.b16 %v4150, %v4147
    %v4319 = vpack.c.b16 %v4154, %v4151
    %v4320 = vpack.c.b16 %v4155, %v4152
    %v4321 = vpack.c.b16 %v4156, %v4153
    %v4322 = vpack.c.b16 %v4160, %v4157
    %v4323 = vpack.c.b16 %v4161, %v4158
    %v4324 = vpack.c.b16 %v4162, %v4159
    %v4325 = vpack.c.b16 %v4166, %v4163
    %v4326 = vpack.c.b16 %v4167, %v4164
    %v4327 = vpack.c.b16 %v4168, %v4165
    %v4328 = vpack.c.b16 %v4172, %v4169
    %v4329 = vpack.c.b16 %v4173, %v4170
    %v4330 = vpack.c.b16 %v4174, %v4171
    %v4331 = vpack.c.b16 %v4178, %v4175
    %v4332 = vpack.c.b16 %v4179, %v4176
    %v4333 = vpack.c.b16 %v4180, %v4177
    %v4334 = vpack.c.b16 %v4184, %v4181
    %v4335 = vpack.c.b16 %v4185, %v4182
    %v4336 = vpack.c.b16 %v4186, %v4183
    %v4337 = vpack.c.b16 %v4190, %v4187
    %v4338 = vpack.c.b16 %v4191, %v4188
    %v4339 = vpack.c.b16 %v4192, %v4189
    %v4340 = vpack.c.b16 %v4196, %v4193
    %v4341 = vpack.c.b16 %v4197, %v4194
    %v4342 = vpack.c.b16 %v4198, %v4195
    %v4343 = vpack.c.b16 %v4202, %v4199
    %v4344 = vpack.c.b16 %v4203, %v4200
    %v4345 = vpack.c.b16 %v4204, %v4201
    %v4346 = vpack.c.b16 %v4208, %v4205
    %v4347 = vpack.c.b16 %v4209, %v4206
    %v4348 = vpack.c.b16 %v4210, %v4207
    %v4349 = vpack.c.b16 %v4214, %v4211
    %v4350 = vpack.c.b16 %v4215, %v4212
    %v4351 = vpack.c.b16 %v4216, %v4213
    %v4352 = vpack.c.b16 %v4220, %v4217
    %v4353 = vpack.c.b16 %v4221, %v4218
    %v4354 = vpack.c.b16 %v4222, %v4219
    %v4355 = vpack.c.b16 %v4226, %v4223
    %v4356 = vpack.c.b16 %v4227, %v4224
    %v4357 = vpack.c.b16 %v4228, %v4225
    %v4358 = vpack.c.b16 %v4232, %v4229
    %v4359 = vpack.c.b16 %v4233, %v4230
    %v4360 = vpack.c.b16 %v4234, %v4231
    %v4361 = vpack.c.b16 %v4238, %v4235
    %v4362 = vpack.c.b16 %v4239, %v4236
    %v4363 = vpack.c.b16 %v4240, %v4237
    %v4364 = vpack.c.b16 %v4244, %v4241
    %v4365 = vpack.c.b16 %v4245, %v4242
    %v4366 = vpack.c.b16 %v4246, %v4243
    %v4367 = vpack.c.b16 %v4250, %v4247
    %v4368 = vpack.c.b16 %v4251, %v4248
    %v4369 = vpack.c.b16 %v4252, %v4249
    %v4370 = vpack.c.b16 %v4256, %v4253
    %v4371 = vpack.c.b16 %v4257, %v4254
    %v4372 = vpack.c.b16 %v4258, %v4255
    %v4373 = vpack.c.b16 %v4262, %v4259
    %v4374 = vpack.c.b16 %v4263, %v4260
    %v4375 = vpack.c.b16 %v4264, %v4261
    %v4376 = vpack.c.b16 %v4268, %v4265
    %v4377 = vpack.c.b16 %v4269, %v4266
    %v4378 = vpack.c.b16 %v4270, %v4267
    %v4379 = vpack.c.b16 %v4274, %v4271
    %v4380 = vpack.c.b16 %v4275, %v4272
    %v4381 = vpack.c.b16 %v4276, %v4273
    %v4382 = vpack.c.b16 %v4280, %v4277
    %v4383 = vpack.c.b16 %v4281, %v4278
    %v4384 = vpack.c.b16 %v4282, %v4279
    %v4385 = vpack.c.b16 %v4286, %v4283
    %v4386 = vpack.c.b16 %v4287, %v4284
    %v4387 = vpack.c.b16 %v4288, %v4285
    %v4388 = vpack.c.b16 %v4292, %v4289
    %v4389 = vpack.c.b16 %v4293, %v4290
    %v4390 = vpack.c.b16 %v4294, %v4291
    %v4491 = vunpack.c.l.b16 %v3935
    %v4492 = vunpack.c.l.b16 %v3936
    %v4493 = vunpack.c.l.b16 %v3937
    %v4494 = vunpack.c.l.b16 %v3938
    %v4495 = vunpack.c.l.b16 %v3939
    %v4496 = vunpack.c.l.b16 %v3940
    %v4497 = vunpack.c.l.b16 %v3941
    %v4498 = vunpack.c.l.b16 %v3942
    %v4499 = vunpack.c.l.b16 %v3943
    %v4500 = vunpack.c.l.b16 %v3944
    %v4501 = vunpack.c.l.b16 %v3945
    %v4502 = vunpack.c.l.b16 %v3946
    %v4503 = vunpack.c.l.b16 %v3947
    %v4504 = vunpack.c.l.b16 %v3948
    %v4505 = vunpack.c.l.b16 %v3949
    %v4506 = vunpack.c.l.b16 %v3950
    %v4507 = vunpack.c.l.b16 %v3951
    %v4508 = vunpack.c.l.b16 %v3952
    %v4509 = vunpack.c.l.b16 %v3953
    %v4510 = vunpack.c.l.b16 %v3954
    %v4511 = vunpack.c.l.b16 %v3955
    %v4512 = vunpack.c.l.b16 %v3956
    %v4513 = vunpack.c.l.b16 %v3957
    %v4514 = vunpack.c.l.b16 %v3958
    %v4515 = vunpack.c.l.b16 %v3959
    %v4516 = vunpack.c.l.b16 %v3960
    %v4517 = vunpack.c.l.b16 %v3961
    %v4518 = vunpack.c.l.b16 %v3962
    %v4519 = vunpack.c.l.b16 %v3963
    %v4520 = vunpack.c.l.b16 %v3964
    %v4521 = vunpack.c.l.b16 %v3965
    %v4522 = vunpack.c.l.b16 %v3966
    %v4523 = vunpack.c.l.b16 %v3967
    %v4524 = vunpack.c.l.b16 %v3968
    %v4525 = vunpack.c.l.b16 %v3969
    %v4526 = vunpack.c.l.b16 %v3970
    %v4527 = vpack.c.b16 %v4492, %v4491
    %v4528 = vpack.c.b16 %v4494, %v4493
    %v4529 = vpack.c.b16 %v4496, %v4495
    %v4530 = vpack.c.b16 %v4498, %v4497
    %v4531 = vpack.c.b16 %v4500, %v4499
    %v4532 = vpack.c.b16 %v4502, %v4501
    %v4533 = vpack.c.b16 %v4504, %v4503
    %v4534 = vpack.c.b16 %v4506, %v4505
    %v4535 = vpack.c.b16 %v4508, %v4507
    %v4536 = vpack.c.b16 %v4510, %v4509
    %v4537 = vpack.c.b16 %v4512, %v4511
    %v4538 = vpack.c.b16 %v4514, %v4513
    %v4539 = vpack.c.b16 %v4516, %v4515
    %v4540 = vpack.c.b16 %v4518, %v4517
    %v4541 = vpack.c.b16 %v4520, %v4519
    %v4542 = vpack.c.b16 %v4522, %v4521
    %v4543 = vpack.c.b16 %v4524, %v4523
    %v4544 = vpack.c.b16 %v4526, %v4525
    %vm4563 = vcmask 261120
    %v4565 = vsel %vm4563, %v4297, 0
    %v4568 = vsel %vm4563, %v4300, 0
    %v4571 = vsel %vm4563, %v4303, 0
    %v4574 = vsel %vm4563, %v4306, 0
    %v4577 = vsel %vm4563, %v4309, 0
    %v4580 = vsel %vm4563, %v4312, 0
    %v4583 = vsel %vm4563, %v4315, 0
    %v4586 = vsel %vm4563, %v4318, 0
    %v4589 = vsel %vm4563, %v4321, 0
    %v4592 = vsel %vm4563, %v4324, 0
    %v4595 = vsel %vm4563, %v4327, 0
    %v4598 = vsel %vm4563, %v4330, 0
    %v4601 = vsel %vm4563, %v4333, 0
    %v4604 = vsel %vm4563, %v4336, 0
    %v4607 = vsel %vm4563, %v4339, 0
    %v4610 = vsel %vm4563, %v4342, 0
    %v4613 = vsel %vm4563, %v4345, 0
    %v4616 = vsel %vm4563, %v4348, 0
    %v4619 = vsel %vm4563, %v4351, 0
    %v4622 = vsel %vm4563, %v4354, 0
    %v4625 = vsel %vm4563, %v4357, 0
    %v4628 = vsel %vm4563, %v4360, 0
    %v4631 = vsel %vm4563, %v4363, 0
    %v4634 = vsel %vm4563, %v4366, 0
    %v4637 = vsel %vm4563, %v4369, 0
    %v4640 = vsel %vm4563, %v4372, 0
    %v4643 = vsel %vm4563, %v4375, 0
    %v4646 = vsel %vm4563, %v4378, 0
    %v4649 = vsel %vm4563, %v4381, 0
    %v4652 = vsel %vm4563, %v4384, 0
    %v4655 = vsel %vm4563, %v4387, 0
    %v4658 = vsel %vm4563, %v4390, 0
    %4660 = vmatpush.bf16.msra.mxu0 %v4534
    %4661 = vmatpush.bf16.msra.mxu0 %v4533
    %4662 = vmatpush.bf16.msra.mxu0 %v4532
    %4663 = vmatpush.bf16.msra.mxu0 %v4531
    %4664 = vmatpush.bf16.msra.mxu0 %v4530
    %4665 = vmatpush.bf16.msra.mxu0 %v4529
    %4666 = vmatpush.bf16.msra.mxu0 %v4528
    %4667 = vmatpush.bf16.msra.mxu0 %v4527
    %4668 = vmatmul.bf16.gmra.mxu0 %v4295
    %v4669 = vpop.f32.mrf.mxu0
    %v4670 = vadd.f32 %v3973, %v4669
    %v4671 = vpop.f32.mrf.mxu0
    %v4672 = vadd.f32 %v3973, %v4671
    %4673 = vmatmul.bf16.gmra.mxu0 %v4298
    %v4674 = vpop.f32.mrf.mxu0
    %v4675 = vadd.f32 %v3973, %v4674
    %v4676 = vpop.f32.mrf.mxu0
    %v4677 = vadd.f32 %v3973, %v4676
    %4678 = vmatmul.bf16.gmra.mxu0 %v4301
    %v4679 = vpop.f32.mrf.mxu0
    %v4680 = vadd.f32 %v3973, %v4679
    %v4681 = vpop.f32.mrf.mxu0
    %v4682 = vadd.f32 %v3973, %v4681
    %4683 = vmatmul.bf16.gmra.mxu0 %v4304
    %v4684 = vpop.f32.mrf.mxu0
    %v4685 = vadd.f32 %v3973, %v4684
    %v4686 = vpop.f32.mrf.mxu0
    %v4687 = vadd.f32 %v3973, %v4686
    %4688 = vmatmul.bf16.gmra.mxu0 %v4307
    %v4689 = vpop.f32.mrf.mxu0
    %v4690 = vadd.f32 %v3973, %v4689
    %v4691 = vpop.f32.mrf.mxu0
    %v4692 = vadd.f32 %v3973, %v4691
    %4693 = vmatmul.bf16.gmra.mxu0 %v4310
    %v4694 = vpop.f32.mrf.mxu0
    %v4695 = vadd.f32 %v3973, %v4694
    %v4696 = vpop.f32.mrf.mxu0
    %v4697 = vadd.f32 %v3973, %v4696
    %4698 = vmatmul.bf16.gmra.mxu0 %v4313
    %v4699 = vpop.f32.mrf.mxu0
    %v4700 = vadd.f32 %v3973, %v4699
    %v4701 = vpop.f32.mrf.mxu0
    %v4702 = vadd.f32 %v3973, %v4701
    %4703 = vmatmul.bf16.gmra.mxu0 %v4316
    %v4704 = vpop.f32.mrf.mxu0
    %v4705 = vadd.f32 %v3973, %v4704
    %v4706 = vpop.f32.mrf.mxu0
    %v4707 = vadd.f32 %v3973, %v4706
    %4708 = vmatmul.bf16.gmra.mxu0 %v4319
    %v4709 = vpop.f32.mrf.mxu0
    %v4710 = vadd.f32 %v3973, %v4709
    %v4711 = vpop.f32.mrf.mxu0
    %v4712 = vadd.f32 %v3973, %v4711
    %4713 = vmatmul.bf16.gmra.mxu0 %v4322
    %v4714 = vpop.f32.mrf.mxu0
    %v4715 = vadd.f32 %v3973, %v4714
    %v4716 = vpop.f32.mrf.mxu0
    %v4717 = vadd.f32 %v3973, %v4716
    %4718 = vmatmul.bf16.gmra.mxu0 %v4325
    %v4719 = vpop.f32.mrf.mxu0
    %v4720 = vadd.f32 %v3973, %v4719
    %v4721 = vpop.f32.mrf.mxu0
    %v4722 = vadd.f32 %v3973, %v4721
    %4723 = vmatmul.bf16.gmra.mxu0 %v4328
    %v4724 = vpop.f32.mrf.mxu0
    %v4725 = vadd.f32 %v3973, %v4724
    %v4726 = vpop.f32.mrf.mxu0
    %v4727 = vadd.f32 %v3973, %v4726
    %4728 = vmatmul.bf16.gmra.mxu0 %v4331
    %v4729 = vpop.f32.mrf.mxu0
    %v4730 = vadd.f32 %v3973, %v4729
    %v4731 = vpop.f32.mrf.mxu0
    %v4732 = vadd.f32 %v3973, %v4731
    %4733 = vmatmul.bf16.gmra.mxu0 %v4334
    %v4734 = vpop.f32.mrf.mxu0
    %v4735 = vadd.f32 %v3973, %v4734
    %v4736 = vpop.f32.mrf.mxu0
    %v4737 = vadd.f32 %v3973, %v4736
    %4738 = vmatmul.bf16.gmra.mxu0 %v4337
    %v4739 = vpop.f32.mrf.mxu0
    %v4740 = vadd.f32 %v3973, %v4739
    %v4741 = vpop.f32.mrf.mxu0
    %v4742 = vadd.f32 %v3973, %v4741
    %4743 = vmatmul.bf16.gmra.mxu0 %v4340
    %v4744 = vpop.f32.mrf.mxu0
    %v4745 = vadd.f32 %v3973, %v4744
    %v4746 = vpop.f32.mrf.mxu0
    %v4747 = vadd.f32 %v3973, %v4746
    %4748 = vmatmul.bf16.gmra.mxu0 %v4343
    %v4749 = vpop.f32.mrf.mxu0
    %v4750 = vadd.f32 %v3973, %v4749
    %v4751 = vpop.f32.mrf.mxu0
    %v4752 = vadd.f32 %v3973, %v4751
    %4753 = vmatmul.bf16.gmra.mxu0 %v4346
    %v4754 = vpop.f32.mrf.mxu0
    %v4755 = vadd.f32 %v3973, %v4754
    %v4756 = vpop.f32.mrf.mxu0
    %v4757 = vadd.f32 %v3973, %v4756
    %4758 = vmatmul.bf16.gmra.mxu0 %v4349
    %v4759 = vpop.f32.mrf.mxu0
    %v4760 = vadd.f32 %v3973, %v4759
    %v4761 = vpop.f32.mrf.mxu0
    %v4762 = vadd.f32 %v3973, %v4761
    %4763 = vmatmul.bf16.gmra.mxu0 %v4352
    %v4764 = vpop.f32.mrf.mxu0
    %v4765 = vadd.f32 %v3973, %v4764
    %v4766 = vpop.f32.mrf.mxu0
    %v4767 = vadd.f32 %v3973, %v4766
    %4768 = vmatmul.bf16.gmra.mxu0 %v4355
    %v4769 = vpop.f32.mrf.mxu0
    %v4770 = vadd.f32 %v3973, %v4769
    %v4771 = vpop.f32.mrf.mxu0
    %v4772 = vadd.f32 %v3973, %v4771
    %4773 = vmatmul.bf16.gmra.mxu0 %v4358
    %v4774 = vpop.f32.mrf.mxu0
    %v4775 = vadd.f32 %v3973, %v4774
    %v4776 = vpop.f32.mrf.mxu0
    %v4777 = vadd.f32 %v3973, %v4776
    %4778 = vmatmul.bf16.gmra.mxu0 %v4361
    %v4779 = vpop.f32.mrf.mxu0
    %v4780 = vadd.f32 %v3973, %v4779
    %v4781 = vpop.f32.mrf.mxu0
    %v4782 = vadd.f32 %v3973, %v4781
    %4783 = vmatmul.bf16.gmra.mxu0 %v4364
    %v4784 = vpop.f32.mrf.mxu0
    %v4785 = vadd.f32 %v3973, %v4784
    %v4786 = vpop.f32.mrf.mxu0
    %v4787 = vadd.f32 %v3973, %v4786
    %4788 = vmatmul.bf16.gmra.mxu0 %v4367
    %v4789 = vpop.f32.mrf.mxu0
    %v4790 = vadd.f32 %v3973, %v4789
    %v4791 = vpop.f32.mrf.mxu0
    %v4792 = vadd.f32 %v3973, %v4791
    %4793 = vmatmul.bf16.gmra.mxu0 %v4370
    %v4794 = vpop.f32.mrf.mxu0
    %v4795 = vadd.f32 %v3973, %v4794
    %v4796 = vpop.f32.mrf.mxu0
    %v4797 = vadd.f32 %v3973, %v4796
    %4798 = vmatmul.bf16.gmra.mxu0 %v4373
    %v4799 = vpop.f32.mrf.mxu0
    %v4800 = vadd.f32 %v3973, %v4799
    %v4801 = vpop.f32.mrf.mxu0
    %v4802 = vadd.f32 %v3973, %v4801
    %4803 = vmatmul.bf16.gmra.mxu0 %v4376
    %v4804 = vpop.f32.mrf.mxu0
    %v4805 = vadd.f32 %v3973, %v4804
    %v4806 = vpop.f32.mrf.mxu0
    %v4807 = vadd.f32 %v3973, %v4806
    %4808 = vmatmul.bf16.gmra.mxu0 %v4379
    %v4809 = vpop.f32.mrf.mxu0
    %v4810 = vadd.f32 %v3973, %v4809
    %v4811 = vpop.f32.mrf.mxu0
    %v4812 = vadd.f32 %v3973, %v4811
    %4813 = vmatmul.bf16.gmra.mxu0 %v4382
    %v4814 = vpop.f32.mrf.mxu0
    %v4815 = vadd.f32 %v3973, %v4814
    %v4816 = vpop.f32.mrf.mxu0
    %v4817 = vadd.f32 %v3973, %v4816
    %4818 = vmatmul.bf16.gmra.mxu0 %v4385
    %v4819 = vpop.f32.mrf.mxu0
    %v4820 = vadd.f32 %v3973, %v4819
    %v4821 = vpop.f32.mrf.mxu0
    %v4822 = vadd.f32 %v3973, %v4821
    %4823 = vmatmul.bf16.gmra.mxu0 %v4388
    %v4824 = vpop.f32.mrf.mxu0
    %v4825 = vadd.f32 %v3973, %v4824
    %v4826 = vpop.f32.mrf.mxu0
    %v4827 = vadd.f32 %v3973, %v4826
    %4828 = vdwg.mxu0
    %4829 = vmatpush.bf16.msra.mxu0 %v4542
    %4830 = vmatpush.bf16.msra.mxu0 %v4541
    %4831 = vmatpush.bf16.msra.mxu0 %v4540
    %4832 = vmatpush.bf16.msra.mxu0 %v4539
    %4833 = vmatpush.bf16.msra.mxu0 %v4538
    %4834 = vmatpush.bf16.msra.mxu0 %v4537
    %4835 = vmatpush.bf16.msra.mxu0 %v4536
    %4836 = vmatpush.bf16.msra.mxu0 %v4535
    %4837 = vmatmul.bf16.gmra.mxu0 %v4296
    %v4838 = vpop.f32.mrf.mxu0
    %v4839 = vadd.f32 %v4670, %v4838
    %v4840 = vpop.f32.mrf.mxu0
    %v4841 = vadd.f32 %v4672, %v4840
    %4842 = vmatmul.bf16.gmra.mxu0 %v4299
    %v4843 = vpop.f32.mrf.mxu0
    %v4844 = vadd.f32 %v4675, %v4843
    %v4845 = vpop.f32.mrf.mxu0
    %v4846 = vadd.f32 %v4677, %v4845
    %4847 = vmatmul.bf16.gmra.mxu0 %v4302
    %v4848 = vpop.f32.mrf.mxu0
    %v4849 = vadd.f32 %v4680, %v4848
    %v4850 = vpop.f32.mrf.mxu0
    %v4851 = vadd.f32 %v4682, %v4850
    %4852 = vmatmul.bf16.gmra.mxu0 %v4305
    %v4853 = vpop.f32.mrf.mxu0
    %v4854 = vadd.f32 %v4685, %v4853
    %v4855 = vpop.f32.mrf.mxu0
    %v4856 = vadd.f32 %v4687, %v4855
    %4857 = vmatmul.bf16.gmra.mxu0 %v4308
    %v4858 = vpop.f32.mrf.mxu0
    %v4859 = vadd.f32 %v4690, %v4858
    %v4860 = vpop.f32.mrf.mxu0
    %v4861 = vadd.f32 %v4692, %v4860
    %4862 = vmatmul.bf16.gmra.mxu0 %v4311
    %v4863 = vpop.f32.mrf.mxu0
    %v4864 = vadd.f32 %v4695, %v4863
    %v4865 = vpop.f32.mrf.mxu0
    %v4866 = vadd.f32 %v4697, %v4865
    %4867 = vmatmul.bf16.gmra.mxu0 %v4314
    %v4868 = vpop.f32.mrf.mxu0
    %v4869 = vadd.f32 %v4700, %v4868
    %v4870 = vpop.f32.mrf.mxu0
    %v4871 = vadd.f32 %v4702, %v4870
    %4872 = vmatmul.bf16.gmra.mxu0 %v4317
    %v4873 = vpop.f32.mrf.mxu0
    %v4874 = vadd.f32 %v4705, %v4873
    %v4875 = vpop.f32.mrf.mxu0
    %v4876 = vadd.f32 %v4707, %v4875
    %4877 = vmatmul.bf16.gmra.mxu0 %v4320
    %v4878 = vpop.f32.mrf.mxu0
    %v4879 = vadd.f32 %v4710, %v4878
    %v4880 = vpop.f32.mrf.mxu0
    %v4881 = vadd.f32 %v4712, %v4880
    %4882 = vmatmul.bf16.gmra.mxu0 %v4323
    %v4883 = vpop.f32.mrf.mxu0
    %v4884 = vadd.f32 %v4715, %v4883
    %v4885 = vpop.f32.mrf.mxu0
    %v4886 = vadd.f32 %v4717, %v4885
    %4887 = vmatmul.bf16.gmra.mxu0 %v4326
    %v4888 = vpop.f32.mrf.mxu0
    %v4889 = vadd.f32 %v4720, %v4888
    %v4890 = vpop.f32.mrf.mxu0
    %v4891 = vadd.f32 %v4722, %v4890
    %4892 = vmatmul.bf16.gmra.mxu0 %v4329
    %v4893 = vpop.f32.mrf.mxu0
    %v4894 = vadd.f32 %v4725, %v4893
    %v4895 = vpop.f32.mrf.mxu0
    %v4896 = vadd.f32 %v4727, %v4895
    %4897 = vmatmul.bf16.gmra.mxu0 %v4332
    %v4898 = vpop.f32.mrf.mxu0
    %v4899 = vadd.f32 %v4730, %v4898
    %v4900 = vpop.f32.mrf.mxu0
    %v4901 = vadd.f32 %v4732, %v4900
    %4902 = vmatmul.bf16.gmra.mxu0 %v4335
    %v4903 = vpop.f32.mrf.mxu0
    %v4904 = vadd.f32 %v4735, %v4903
    %v4905 = vpop.f32.mrf.mxu0
    %v4906 = vadd.f32 %v4737, %v4905
    %4907 = vmatmul.bf16.gmra.mxu0 %v4338
    %v4908 = vpop.f32.mrf.mxu0
    %v4909 = vadd.f32 %v4740, %v4908
    %v4910 = vpop.f32.mrf.mxu0
    %v4911 = vadd.f32 %v4742, %v4910
    %4912 = vmatmul.bf16.gmra.mxu0 %v4341
    %v4913 = vpop.f32.mrf.mxu0
    %v4914 = vadd.f32 %v4745, %v4913
    %v4915 = vpop.f32.mrf.mxu0
    %v4916 = vadd.f32 %v4747, %v4915
    %4917 = vmatmul.bf16.gmra.mxu0 %v4344
    %v4918 = vpop.f32.mrf.mxu0
    %v4919 = vadd.f32 %v4750, %v4918
    %v4920 = vpop.f32.mrf.mxu0
    %v4921 = vadd.f32 %v4752, %v4920
    %4922 = vmatmul.bf16.gmra.mxu0 %v4347
    %v4923 = vpop.f32.mrf.mxu0
    %v4924 = vadd.f32 %v4755, %v4923
    %v4925 = vpop.f32.mrf.mxu0
    %v4926 = vadd.f32 %v4757, %v4925
    %4927 = vmatmul.bf16.gmra.mxu0 %v4350
    %v4928 = vpop.f32.mrf.mxu0
    %v4929 = vadd.f32 %v4760, %v4928
    %v4930 = vpop.f32.mrf.mxu0
    %v4931 = vadd.f32 %v4762, %v4930
    %4932 = vmatmul.bf16.gmra.mxu0 %v4353
    %v4933 = vpop.f32.mrf.mxu0
    %v4934 = vadd.f32 %v4765, %v4933
    %v4935 = vpop.f32.mrf.mxu0
    %v4936 = vadd.f32 %v4767, %v4935
    %4937 = vmatmul.bf16.gmra.mxu0 %v4356
    %v4938 = vpop.f32.mrf.mxu0
    %v4939 = vadd.f32 %v4770, %v4938
    %v4940 = vpop.f32.mrf.mxu0
    %v4941 = vadd.f32 %v4772, %v4940
    %4942 = vmatmul.bf16.gmra.mxu0 %v4359
    %v4943 = vpop.f32.mrf.mxu0
    %v4944 = vadd.f32 %v4775, %v4943
    %v4945 = vpop.f32.mrf.mxu0
    %v4946 = vadd.f32 %v4777, %v4945
    %4947 = vmatmul.bf16.gmra.mxu0 %v4362
    %v4948 = vpop.f32.mrf.mxu0
    %v4949 = vadd.f32 %v4780, %v4948
    %v4950 = vpop.f32.mrf.mxu0
    %v4951 = vadd.f32 %v4782, %v4950
    %4952 = vmatmul.bf16.gmra.mxu0 %v4365
    %v4953 = vpop.f32.mrf.mxu0
    %v4954 = vadd.f32 %v4785, %v4953
    %v4955 = vpop.f32.mrf.mxu0
    %v4956 = vadd.f32 %v4787, %v4955
    %4957 = vmatmul.bf16.gmra.mxu0 %v4368
    %v4958 = vpop.f32.mrf.mxu0
    %v4959 = vadd.f32 %v4790, %v4958
    %v4960 = vpop.f32.mrf.mxu0
    %v4961 = vadd.f32 %v4792, %v4960
    %4962 = vmatmul.bf16.gmra.mxu0 %v4371
    %v4963 = vpop.f32.mrf.mxu0
    %v4964 = vadd.f32 %v4795, %v4963
    %v4965 = vpop.f32.mrf.mxu0
    %v4966 = vadd.f32 %v4797, %v4965
    %4967 = vmatmul.bf16.gmra.mxu0 %v4374
    %v4968 = vpop.f32.mrf.mxu0
    %v4969 = vadd.f32 %v4800, %v4968
    %v4970 = vpop.f32.mrf.mxu0
    %v4971 = vadd.f32 %v4802, %v4970
    %4972 = vmatmul.bf16.gmra.mxu0 %v4377
    %v4973 = vpop.f32.mrf.mxu0
    %v4974 = vadd.f32 %v4805, %v4973
    %v4975 = vpop.f32.mrf.mxu0
    %v4976 = vadd.f32 %v4807, %v4975
    %4977 = vmatmul.bf16.gmra.mxu0 %v4380
    %v4978 = vpop.f32.mrf.mxu0
    %v4979 = vadd.f32 %v4810, %v4978
    %v4980 = vpop.f32.mrf.mxu0
    %v4981 = vadd.f32 %v4812, %v4980
    %4982 = vmatmul.bf16.gmra.mxu0 %v4383
    %v4983 = vpop.f32.mrf.mxu0
    %v4984 = vadd.f32 %v4815, %v4983
    %v4985 = vpop.f32.mrf.mxu0
    %v4986 = vadd.f32 %v4817, %v4985
    %4987 = vmatmul.bf16.gmra.mxu0 %v4386
    %v4988 = vpop.f32.mrf.mxu0
    %v4989 = vadd.f32 %v4820, %v4988
    %v4990 = vpop.f32.mrf.mxu0
    %v4991 = vadd.f32 %v4822, %v4990
    %4992 = vmatmul.bf16.gmra.mxu0 %v4389
    %v4993 = vpop.f32.mrf.mxu0
    %v4994 = vadd.f32 %v4825, %v4993
    %v4995 = vpop.f32.mrf.mxu0
    %v4996 = vadd.f32 %v4827, %v4995
    %4997 = vdwg.mxu0
    %4998 = vmatpush.bf16.msra.mxu0 0
    %4999 = vmatpush.bf16.msra.mxu0 0
    %5000 = vmatpush.bf16.msra.mxu0 0
    %5001 = vmatpush.bf16.msra.mxu0 0
    %5002 = vmatpush.bf16.msra.mxu0 0
    %5003 = vmatpush.bf16.msra.mxu0 0
    %5004 = vmatpush.bf16.msra.mxu0 %v4544
    %5005 = vmatpush.bf16.msra.mxu0 %v4543
    %5006 = vmatmul.bf16.gmra.mxu0 %v4565
    %v5007 = vpop.f32.mrf.mxu0
    %v5008 = vadd.f32 %v4839, %v5007
    %v5009 = vpop.f32.mrf.mxu0
    %v5010 = vadd.f32 %v4841, %v5009
    %5011 = vmatmul.bf16.gmra.mxu0 %v4568
    %v5012 = vpop.f32.mrf.mxu0
    %v5013 = vadd.f32 %v4844, %v5012
    %v5014 = vpop.f32.mrf.mxu0
    %v5015 = vadd.f32 %v4846, %v5014
    %5016 = vmatmul.bf16.gmra.mxu0 %v4571
    %v5017 = vpop.f32.mrf.mxu0
    %v5018 = vadd.f32 %v4849, %v5017
    %v5019 = vpop.f32.mrf.mxu0
    %v5020 = vadd.f32 %v4851, %v5019
    %5021 = vmatmul.bf16.gmra.mxu0 %v4574
    %v5022 = vpop.f32.mrf.mxu0
    %v5023 = vadd.f32 %v4854, %v5022
    %v5024 = vpop.f32.mrf.mxu0
    %v5025 = vadd.f32 %v4856, %v5024
    %5026 = vmatmul.bf16.gmra.mxu0 %v4577
    %v5027 = vpop.f32.mrf.mxu0
    %v5028 = vadd.f32 %v4859, %v5027
    %v5029 = vpop.f32.mrf.mxu0
    %v5030 = vadd.f32 %v4861, %v5029
    %5031 = vmatmul.bf16.gmra.mxu0 %v4580
    %v5032 = vpop.f32.mrf.mxu0
    %v5033 = vadd.f32 %v4864, %v5032
    %v5034 = vpop.f32.mrf.mxu0
    %v5035 = vadd.f32 %v4866, %v5034
    %5036 = vmatmul.bf16.gmra.mxu0 %v4583
    %v5037 = vpop.f32.mrf.mxu0
    %v5038 = vadd.f32 %v4869, %v5037
    %v5039 = vpop.f32.mrf.mxu0
    %v5040 = vadd.f32 %v4871, %v5039
    %5041 = vmatmul.bf16.gmra.mxu0 %v4586
    %v5042 = vpop.f32.mrf.mxu0
    %v5043 = vadd.f32 %v4874, %v5042
    %v5044 = vpop.f32.mrf.mxu0
    %v5045 = vadd.f32 %v4876, %v5044
    %5046 = vmatmul.bf16.gmra.mxu0 %v4589
    %v5047 = vpop.f32.mrf.mxu0
    %v5048 = vadd.f32 %v4879, %v5047
    %v5049 = vpop.f32.mrf.mxu0
    %v5050 = vadd.f32 %v4881, %v5049
    %5051 = vmatmul.bf16.gmra.mxu0 %v4592
    %v5052 = vpop.f32.mrf.mxu0
    %v5053 = vadd.f32 %v4884, %v5052
    %v5054 = vpop.f32.mrf.mxu0
    %v5055 = vadd.f32 %v4886, %v5054
    %5056 = vmatmul.bf16.gmra.mxu0 %v4595
    %v5057 = vpop.f32.mrf.mxu0
    %v5058 = vadd.f32 %v4889, %v5057
    %v5059 = vpop.f32.mrf.mxu0
    %v5060 = vadd.f32 %v4891, %v5059
    %5061 = vmatmul.bf16.gmra.mxu0 %v4598
    %v5062 = vpop.f32.mrf.mxu0
    %v5063 = vadd.f32 %v4894, %v5062
    %v5064 = vpop.f32.mrf.mxu0
    %v5065 = vadd.f32 %v4896, %v5064
    %5066 = vmatmul.bf16.gmra.mxu0 %v4601
    %v5067 = vpop.f32.mrf.mxu0
    %v5068 = vadd.f32 %v4899, %v5067
    %v5069 = vpop.f32.mrf.mxu0
    %v5070 = vadd.f32 %v4901, %v5069
    %5071 = vmatmul.bf16.gmra.mxu0 %v4604
    %v5072 = vpop.f32.mrf.mxu0
    %v5073 = vadd.f32 %v4904, %v5072
    %v5074 = vpop.f32.mrf.mxu0
    %v5075 = vadd.f32 %v4906, %v5074
    %5076 = vmatmul.bf16.gmra.mxu0 %v4607
    %v5077 = vpop.f32.mrf.mxu0
    %v5078 = vadd.f32 %v4909, %v5077
    %v5079 = vpop.f32.mrf.mxu0
    %v5080 = vadd.f32 %v4911, %v5079
    %5081 = vmatmul.bf16.gmra.mxu0 %v4610
    %v5082 = vpop.f32.mrf.mxu0
    %v5083 = vadd.f32 %v4914, %v5082
    %v5084 = vpop.f32.mrf.mxu0
    %v5085 = vadd.f32 %v4916, %v5084
    %5086 = vmatmul.bf16.gmra.mxu0 %v4613
    %v5087 = vpop.f32.mrf.mxu0
    %v5088 = vadd.f32 %v4919, %v5087
    %v5089 = vpop.f32.mrf.mxu0
    %v5090 = vadd.f32 %v4921, %v5089
    %5091 = vmatmul.bf16.gmra.mxu0 %v4616
    %v5092 = vpop.f32.mrf.mxu0
    %v5093 = vadd.f32 %v4924, %v5092
    %v5094 = vpop.f32.mrf.mxu0
    %v5095 = vadd.f32 %v4926, %v5094
    %5096 = vmatmul.bf16.gmra.mxu0 %v4619
    %v5097 = vpop.f32.mrf.mxu0
    %v5098 = vadd.f32 %v4929, %v5097
    %v5099 = vpop.f32.mrf.mxu0
    %v5100 = vadd.f32 %v4931, %v5099
    %5101 = vmatmul.bf16.gmra.mxu0 %v4622
    %v5102 = vpop.f32.mrf.mxu0
    %v5103 = vadd.f32 %v4934, %v5102
    %v5104 = vpop.f32.mrf.mxu0
    %v5105 = vadd.f32 %v4936, %v5104
    %5106 = vmatmul.bf16.gmra.mxu0 %v4625
    %v5107 = vpop.f32.mrf.mxu0
    %v5108 = vadd.f32 %v4939, %v5107
    %v5109 = vpop.f32.mrf.mxu0
    %v5110 = vadd.f32 %v4941, %v5109
    %5111 = vmatmul.bf16.gmra.mxu0 %v4628
    %v5112 = vpop.f32.mrf.mxu0
    %v5113 = vadd.f32 %v4944, %v5112
    %v5114 = vpop.f32.mrf.mxu0
    %v5115 = vadd.f32 %v4946, %v5114
    %5116 = vmatmul.bf16.gmra.mxu0 %v4631
    %v5117 = vpop.f32.mrf.mxu0
    %v5118 = vadd.f32 %v4949, %v5117
    %v5119 = vpop.f32.mrf.mxu0
    %v5120 = vadd.f32 %v4951, %v5119
    %5121 = vmatmul.bf16.gmra.mxu0 %v4634
    %v5122 = vpop.f32.mrf.mxu0
    %v5123 = vadd.f32 %v4954, %v5122
    %v5124 = vpop.f32.mrf.mxu0
    %v5125 = vadd.f32 %v4956, %v5124
    %5126 = vmatmul.bf16.gmra.mxu0 %v4637
    %v5127 = vpop.f32.mrf.mxu0
    %v5128 = vadd.f32 %v4959, %v5127
    %v5129 = vpop.f32.mrf.mxu0
    %v5130 = vadd.f32 %v4961, %v5129
    %5131 = vmatmul.bf16.gmra.mxu0 %v4640
    %v5132 = vpop.f32.mrf.mxu0
    %v5133 = vadd.f32 %v4964, %v5132
    %v5134 = vpop.f32.mrf.mxu0
    %v5135 = vadd.f32 %v4966, %v5134
    %5136 = vmatmul.bf16.gmra.mxu0 %v4643
    %v5137 = vpop.f32.mrf.mxu0
    %v5138 = vadd.f32 %v4969, %v5137
    %v5139 = vpop.f32.mrf.mxu0
    %v5140 = vadd.f32 %v4971, %v5139
    %5141 = vmatmul.bf16.gmra.mxu0 %v4646
    %v5142 = vpop.f32.mrf.mxu0
    %v5143 = vadd.f32 %v4974, %v5142
    %v5144 = vpop.f32.mrf.mxu0
    %v5145 = vadd.f32 %v4976, %v5144
    %5146 = vmatmul.bf16.gmra.mxu0 %v4649
    %v5147 = vpop.f32.mrf.mxu0
    %v5148 = vadd.f32 %v4979, %v5147
    %v5149 = vpop.f32.mrf.mxu0
    %v5150 = vadd.f32 %v4981, %v5149
    %5151 = vmatmul.bf16.gmra.mxu0 %v4652
    %v5152 = vpop.f32.mrf.mxu0
    %v5153 = vadd.f32 %v4984, %v5152
    %v5154 = vpop.f32.mrf.mxu0
    %v5155 = vadd.f32 %v4986, %v5154
    %5156 = vmatmul.bf16.gmra.mxu0 %v4655
    %v5157 = vpop.f32.mrf.mxu0
    %v5158 = vadd.f32 %v4989, %v5157
    %v5159 = vpop.f32.mrf.mxu0
    %v5160 = vadd.f32 %v4991, %v5159
    %5161 = vmatmul.bf16.gmra.mxu0 %v4658
    %v5162 = vpop.f32.mrf.mxu0
    %v5163 = vadd.f32 %v4994, %v5162
    %v5164 = vpop.f32.mrf.mxu0
    %v5165 = vadd.f32 %v4996, %v5164
    %5166 = vdwg.mxu0
    %v5167 = vmax.f32 %v5008, 0.0
    %v5168 = vmax.f32 %v5010, 0.0
    %v5169 = vmax.f32 %v5013, 0.0
    %v5170 = vmax.f32 %v5015, 0.0
    %v5171 = vmax.f32 %v5018, 0.0
    %v5172 = vmax.f32 %v5020, 0.0
    %v5173 = vmax.f32 %v5023, 0.0
    %v5174 = vmax.f32 %v5025, 0.0
    %v5175 = vmax.f32 %v5028, 0.0
    %v5176 = vmax.f32 %v5030, 0.0
    %v5177 = vmax.f32 %v5033, 0.0
    %v5178 = vmax.f32 %v5035, 0.0
    %v5179 = vmax.f32 %v5038, 0.0
    %v5180 = vmax.f32 %v5040, 0.0
    %v5181 = vmax.f32 %v5043, 0.0
    %v5182 = vmax.f32 %v5045, 0.0
    %v5183 = vmax.f32 %v5048, 0.0
    %v5184 = vmax.f32 %v5050, 0.0
    %v5185 = vmax.f32 %v5053, 0.0
    %v5186 = vmax.f32 %v5055, 0.0
    %v5187 = vmax.f32 %v5058, 0.0
    %v5188 = vmax.f32 %v5060, 0.0
    %v5189 = vmax.f32 %v5063, 0.0
    %v5190 = vmax.f32 %v5065, 0.0
    %v5191 = vmax.f32 %v5068, 0.0
    %v5192 = vmax.f32 %v5070, 0.0
    %v5193 = vmax.f32 %v5073, 0.0
    %v5194 = vmax.f32 %v5075, 0.0
    %v5195 = vmax.f32 %v5078, 0.0
    %v5196 = vmax.f32 %v5080, 0.0
    %v5197 = vmax.f32 %v5083, 0.0
    %v5198 = vmax.f32 %v5085, 0.0
    %v5199 = vmax.f32 %v5088, 0.0
    %v5200 = vmax.f32 %v5090, 0.0
    %v5201 = vmax.f32 %v5093, 0.0
    %v5202 = vmax.f32 %v5095, 0.0
    %v5203 = vmax.f32 %v5098, 0.0
    %v5204 = vmax.f32 %v5100, 0.0
    %v5205 = vmax.f32 %v5103, 0.0
    %v5206 = vmax.f32 %v5105, 0.0
    %v5207 = vmax.f32 %v5108, 0.0
    %v5208 = vmax.f32 %v5110, 0.0
    %v5209 = vmax.f32 %v5113, 0.0
    %v5210 = vmax.f32 %v5115, 0.0
    %v5211 = vmax.f32 %v5118, 0.0
    %v5212 = vmax.f32 %v5120, 0.0
    %v5213 = vmax.f32 %v5123, 0.0
    %v5214 = vmax.f32 %v5125, 0.0
    %v5215 = vmax.f32 %v5128, 0.0
    %v5216 = vmax.f32 %v5130, 0.0
    %v5217 = vmax.f32 %v5133, 0.0
    %v5218 = vmax.f32 %v5135, 0.0
    %v5219 = vmax.f32 %v5138, 0.0
    %v5220 = vmax.f32 %v5140, 0.0
    %v5221 = vmax.f32 %v5143, 0.0
    %v5222 = vmax.f32 %v5145, 0.0
    %v5223 = vmax.f32 %v5148, 0.0
    %v5224 = vmax.f32 %v5150, 0.0
    %v5225 = vmax.f32 %v5153, 0.0
    %v5226 = vmax.f32 %v5155, 0.0
    %v5227 = vmax.f32 %v5158, 0.0
    %v5228 = vmax.f32 %v5160, 0.0
    %v5229 = vmax.f32 %v5163, 0.0
    %v5230 = vmax.f32 %v5165, 0.0
    %v5231 = vpack.c.bf16 %v5168, %v5167
    %v5232 = vpack.c.bf16 %v5170, %v5169
    %v5233 = vpack.c.bf16 %v5172, %v5171
    %v5234 = vpack.c.bf16 %v5174, %v5173
    %v5235 = vpack.c.bf16 %v5176, %v5175
    %v5236 = vpack.c.bf16 %v5178, %v5177
    %v5237 = vpack.c.bf16 %v5180, %v5179
    %v5238 = vpack.c.bf16 %v5182, %v5181
    %v5239 = vpack.c.bf16 %v5184, %v5183
    %v5240 = vpack.c.bf16 %v5186, %v5185
    %v5241 = vpack.c.bf16 %v5188, %v5187
    %v5242 = vpack.c.bf16 %v5190, %v5189
    %v5243 = vpack.c.bf16 %v5192, %v5191
    %v5244 = vpack.c.bf16 %v5194, %v5193
    %v5245 = vpack.c.bf16 %v5196, %v5195
    %v5246 = vpack.c.bf16 %v5198, %v5197
    %v5247 = vpack.c.bf16 %v5200, %v5199
    %v5248 = vpack.c.bf16 %v5202, %v5201
    %v5249 = vpack.c.bf16 %v5204, %v5203
    %v5250 = vpack.c.bf16 %v5206, %v5205
    %v5251 = vpack.c.bf16 %v5208, %v5207
    %v5252 = vpack.c.bf16 %v5210, %v5209
    %v5253 = vpack.c.bf16 %v5212, %v5211
    %v5254 = vpack.c.bf16 %v5214, %v5213
    %v5255 = vpack.c.bf16 %v5216, %v5215
    %v5256 = vpack.c.bf16 %v5218, %v5217
    %v5257 = vpack.c.bf16 %v5220, %v5219
    %v5258 = vpack.c.bf16 %v5222, %v5221
    %v5259 = vpack.c.bf16 %v5224, %v5223
    %v5260 = vpack.c.bf16 %v5226, %v5225
    %v5261 = vpack.c.bf16 %v5228, %v5227
    %v5262 = vpack.c.bf16 %v5230, %v5229
    %v5263 = vld [vmem:[%s5] sm:$0xf]
    %v5264 = vld [vmem:[%s5 + $0x4] sm:$0xf]
    %v5265 = vld [vmem:[%s5 + $0x8] sm:$0xf]
    %v5266 = vld [vmem:[%s5 + $0xc] sm:$0xf]
    %v5267 = vld [vmem:[%s6] sm:$0x1]
    %v5269 = vperm.slane %v5267, 0
    %v5275 = vunpack.c.l.b16 %v5263
    %v5276 = vunpack.c.l.b16 %v5264
    %v5277 = vunpack.c.l.b16 %v5265
    %v5278 = vunpack.c.l.b16 %v5266
    %v5279 = vpack.c.b16 %v5276, %v5275
    %v5280 = vpack.c.b16 %v5278, %v5277
    %v5284 = vsel %vm4563, %v5231, 0
    %v5287 = vsel %vm4563, %v5232, 0
    %v5290 = vsel %vm4563, %v5233, 0
    %v5293 = vsel %vm4563, %v5234, 0
    %v5296 = vsel %vm4563, %v5235, 0
    %v5299 = vsel %vm4563, %v5236, 0
    %v5302 = vsel %vm4563, %v5237, 0
    %v5305 = vsel %vm4563, %v5238, 0
    %v5308 = vsel %vm4563, %v5239, 0
    %v5311 = vsel %vm4563, %v5240, 0
    %v5314 = vsel %vm4563, %v5241, 0
    %v5317 = vsel %vm4563, %v5242, 0
    %v5320 = vsel %vm4563, %v5243, 0
    %v5323 = vsel %vm4563, %v5244, 0
    %v5326 = vsel %vm4563, %v5245, 0
    %v5329 = vsel %vm4563, %v5246, 0
    %v5332 = vsel %vm4563, %v5247, 0
    %v5335 = vsel %vm4563, %v5248, 0
    %v5338 = vsel %vm4563, %v5249, 0
    %v5341 = vsel %vm4563, %v5250, 0
    %v5344 = vsel %vm4563, %v5251, 0
    %v5347 = vsel %vm4563, %v5252, 0
    %v5350 = vsel %vm4563, %v5253, 0
    %v5353 = vsel %vm4563, %v5254, 0
    %v5356 = vsel %vm4563, %v5255, 0
    %v5359 = vsel %vm4563, %v5256, 0
    %v5362 = vsel %vm4563, %v5257, 0
    %v5365 = vsel %vm4563, %v5258, 0
    %v5368 = vsel %vm4563, %v5259, 0
    %v5371 = vsel %vm4563, %v5260, 0
    %v5374 = vsel %vm4563, %v5261, 0
    %v5377 = vsel %vm4563, %v5262, 0
    %5379 = vmatpush.bf16.msra.mxu0 0
    %5380 = vmatpush.bf16.msra.mxu0 0
    %5381 = vmatpush.bf16.msra.mxu0 0
    %5382 = vmatpush.bf16.msra.mxu0 0
    %5383 = vmatpush.bf16.msra.mxu0 0
    %5384 = vmatpush.bf16.msra.mxu0 0
    %5385 = vmatpush.bf16.msra.mxu0 %v5280
    %5386 = vmatpush.bf16.msra.mxu0 %v5279
    %5387 = vmatmul.bf16.gmra.mxu0 %v5284
    %v5388 = vpop.f32.mrf.mxu0
    %v5389 = vadd.f32 %v5269, %v5388
    %v5390 = vpop.f32.mrf.mxu0
    %v5391 = vadd.f32 %v5269, %v5390
    %5392 = vmatmul.bf16.gmra.mxu0 %v5287
    %v5393 = vpop.f32.mrf.mxu0
    %v5394 = vadd.f32 %v5269, %v5393
    %v5395 = vpop.f32.mrf.mxu0
    %v5396 = vadd.f32 %v5269, %v5395
    %5397 = vmatmul.bf16.gmra.mxu0 %v5290
    %v5398 = vpop.f32.mrf.mxu0
    %v5399 = vadd.f32 %v5269, %v5398
    %v5400 = vpop.f32.mrf.mxu0
    %v5401 = vadd.f32 %v5269, %v5400
    %5402 = vmatmul.bf16.gmra.mxu0 %v5293
    %v5403 = vpop.f32.mrf.mxu0
    %v5404 = vadd.f32 %v5269, %v5403
    %v5405 = vpop.f32.mrf.mxu0
    %v5406 = vadd.f32 %v5269, %v5405
    %5407 = vmatmul.bf16.gmra.mxu0 %v5296
    %v5408 = vpop.f32.mrf.mxu0
    %v5409 = vadd.f32 %v5269, %v5408
    %v5410 = vpop.f32.mrf.mxu0
    %v5411 = vadd.f32 %v5269, %v5410
    %5412 = vmatmul.bf16.gmra.mxu0 %v5299
    %v5413 = vpop.f32.mrf.mxu0
    %v5414 = vadd.f32 %v5269, %v5413
    %v5415 = vpop.f32.mrf.mxu0
    %v5416 = vadd.f32 %v5269, %v5415
    %5417 = vmatmul.bf16.gmra.mxu0 %v5302
    %v5418 = vpop.f32.mrf.mxu0
    %v5419 = vadd.f32 %v5269, %v5418
    %v5420 = vpop.f32.mrf.mxu0
    %v5421 = vadd.f32 %v5269, %v5420
    %5422 = vmatmul.bf16.gmra.mxu0 %v5305
    %v5423 = vpop.f32.mrf.mxu0
    %v5424 = vadd.f32 %v5269, %v5423
    %v5425 = vpop.f32.mrf.mxu0
    %v5426 = vadd.f32 %v5269, %v5425
    %5427 = vmatmul.bf16.gmra.mxu0 %v5308
    %v5428 = vpop.f32.mrf.mxu0
    %v5429 = vadd.f32 %v5269, %v5428
    %v5430 = vpop.f32.mrf.mxu0
    %v5431 = vadd.f32 %v5269, %v5430
    %5432 = vmatmul.bf16.gmra.mxu0 %v5311
    %v5433 = vpop.f32.mrf.mxu0
    %v5434 = vadd.f32 %v5269, %v5433
    %v5435 = vpop.f32.mrf.mxu0
    %v5436 = vadd.f32 %v5269, %v5435
    %5437 = vmatmul.bf16.gmra.mxu0 %v5314
    %v5438 = vpop.f32.mrf.mxu0
    %v5439 = vadd.f32 %v5269, %v5438
    %v5440 = vpop.f32.mrf.mxu0
    %v5441 = vadd.f32 %v5269, %v5440
    %5442 = vmatmul.bf16.gmra.mxu0 %v5317
    %v5443 = vpop.f32.mrf.mxu0
    %v5444 = vadd.f32 %v5269, %v5443
    %v5445 = vpop.f32.mrf.mxu0
    %v5446 = vadd.f32 %v5269, %v5445
    %5447 = vmatmul.bf16.gmra.mxu0 %v5320
    %v5448 = vpop.f32.mrf.mxu0
    %v5449 = vadd.f32 %v5269, %v5448
    %v5450 = vpop.f32.mrf.mxu0
    %v5451 = vadd.f32 %v5269, %v5450
    %5452 = vmatmul.bf16.gmra.mxu0 %v5323
    %v5453 = vpop.f32.mrf.mxu0
    %v5454 = vadd.f32 %v5269, %v5453
    %v5455 = vpop.f32.mrf.mxu0
    %v5456 = vadd.f32 %v5269, %v5455
    %5457 = vmatmul.bf16.gmra.mxu0 %v5326
    %v5458 = vpop.f32.mrf.mxu0
    %v5459 = vadd.f32 %v5269, %v5458
    %v5460 = vpop.f32.mrf.mxu0
    %v5461 = vadd.f32 %v5269, %v5460
    %5462 = vmatmul.bf16.gmra.mxu0 %v5329
    %v5463 = vpop.f32.mrf.mxu0
    %v5464 = vadd.f32 %v5269, %v5463
    %v5465 = vpop.f32.mrf.mxu0
    %v5466 = vadd.f32 %v5269, %v5465
    %5467 = vmatmul.bf16.gmra.mxu0 %v5332
    %v5468 = vpop.f32.mrf.mxu0
    %v5469 = vadd.f32 %v5269, %v5468
    %v5470 = vpop.f32.mrf.mxu0
    %v5471 = vadd.f32 %v5269, %v5470
    %5472 = vmatmul.bf16.gmra.mxu0 %v5335
    %v5473 = vpop.f32.mrf.mxu0
    %v5474 = vadd.f32 %v5269, %v5473
    %v5475 = vpop.f32.mrf.mxu0
    %v5476 = vadd.f32 %v5269, %v5475
    %5477 = vmatmul.bf16.gmra.mxu0 %v5338
    %v5478 = vpop.f32.mrf.mxu0
    %v5479 = vadd.f32 %v5269, %v5478
    %v5480 = vpop.f32.mrf.mxu0
    %v5481 = vadd.f32 %v5269, %v5480
    %5482 = vmatmul.bf16.gmra.mxu0 %v5341
    %v5483 = vpop.f32.mrf.mxu0
    %v5484 = vadd.f32 %v5269, %v5483
    %v5485 = vpop.f32.mrf.mxu0
    %v5486 = vadd.f32 %v5269, %v5485
    %5487 = vmatmul.bf16.gmra.mxu0 %v5344
    %v5488 = vpop.f32.mrf.mxu0
    %v5489 = vadd.f32 %v5269, %v5488
    %v5490 = vpop.f32.mrf.mxu0
    %v5491 = vadd.f32 %v5269, %v5490
    %5492 = vmatmul.bf16.gmra.mxu0 %v5347
    %v5493 = vpop.f32.mrf.mxu0
    %v5494 = vadd.f32 %v5269, %v5493
    %v5495 = vpop.f32.mrf.mxu0
    %v5496 = vadd.f32 %v5269, %v5495
    %5497 = vmatmul.bf16.gmra.mxu0 %v5350
    %v5498 = vpop.f32.mrf.mxu0
    %v5499 = vadd.f32 %v5269, %v5498
    %v5500 = vpop.f32.mrf.mxu0
    %v5501 = vadd.f32 %v5269, %v5500
    %5502 = vmatmul.bf16.gmra.mxu0 %v5353
    %v5503 = vpop.f32.mrf.mxu0
    %v5504 = vadd.f32 %v5269, %v5503
    %v5505 = vpop.f32.mrf.mxu0
    %v5506 = vadd.f32 %v5269, %v5505
    %5507 = vmatmul.bf16.gmra.mxu0 %v5356
    %v5508 = vpop.f32.mrf.mxu0
    %v5509 = vadd.f32 %v5269, %v5508
    %v5510 = vpop.f32.mrf.mxu0
    %v5511 = vadd.f32 %v5269, %v5510
    %5512 = vmatmul.bf16.gmra.mxu0 %v5359
    %v5513 = vpop.f32.mrf.mxu0
    %v5514 = vadd.f32 %v5269, %v5513
    %v5515 = vpop.f32.mrf.mxu0
    %v5516 = vadd.f32 %v5269, %v5515
    %5517 = vmatmul.bf16.gmra.mxu0 %v5362
    %v5518 = vpop.f32.mrf.mxu0
    %v5519 = vadd.f32 %v5269, %v5518
    %v5520 = vpop.f32.mrf.mxu0
    %v5521 = vadd.f32 %v5269, %v5520
    %5522 = vmatmul.bf16.gmra.mxu0 %v5365
    %v5523 = vpop.f32.mrf.mxu0
    %v5524 = vadd.f32 %v5269, %v5523
    %v5525 = vpop.f32.mrf.mxu0
    %v5526 = vadd.f32 %v5269, %v5525
    %5527 = vmatmul.bf16.gmra.mxu0 %v5368
    %v5528 = vpop.f32.mrf.mxu0
    %v5529 = vadd.f32 %v5269, %v5528
    %v5530 = vpop.f32.mrf.mxu0
    %v5531 = vadd.f32 %v5269, %v5530
    %5532 = vmatmul.bf16.gmra.mxu0 %v5371
    %v5533 = vpop.f32.mrf.mxu0
    %v5534 = vadd.f32 %v5269, %v5533
    %v5535 = vpop.f32.mrf.mxu0
    %v5536 = vadd.f32 %v5269, %v5535
    %5537 = vmatmul.bf16.gmra.mxu0 %v5374
    %v5538 = vpop.f32.mrf.mxu0
    %v5539 = vadd.f32 %v5269, %v5538
    %v5540 = vpop.f32.mrf.mxu0
    %v5541 = vadd.f32 %v5269, %v5540
    %5542 = vmatmul.bf16.gmra.mxu0 %v5377
    %v5543 = vpop.f32.mrf.mxu0
    %v5544 = vadd.f32 %v5269, %v5543
    %v5545 = vpop.f32.mrf.mxu0
    %v5546 = vadd.f32 %v5269, %v5545
    %5547 = vdwg.mxu0
    %v5548 = vld [vmem:[%s0] sm:$0xf]
    %v5549 = vld [vmem:[%s0 + $0x4] sm:$0xf]
    %v5550 = vld [vmem:[%s0 + $0x8] sm:$0xf]
    %v5551 = vld [vmem:[%s0 + $0xc] sm:$0xf]
    %v5552 = vld [vmem:[%s0 + $0x10] sm:$0xf]
    %v5553 = vld [vmem:[%s0 + $0x14] sm:$0xf]
    %v5554 = vld [vmem:[%s0 + $0x18] sm:$0xf]
    %v5555 = vld [vmem:[%s0 + $0x1c] sm:$0xf]
    %v5556 = vld [vmem:[%s0 + $0x20] sm:$0xf]
    %v5557 = vld [vmem:[%s0 + $0x24] sm:$0xf]
    %v5558 = vld [vmem:[%s0 + $0x28] sm:$0xf]
    %v5559 = vld [vmem:[%s0 + $0x2c] sm:$0xf]
    %v5560 = vld [vmem:[%s0 + $0x30] sm:$0xf]
    %v5561 = vld [vmem:[%s0 + $0x34] sm:$0xf]
    %v5562 = vld [vmem:[%s0 + $0x38] sm:$0xf]
    %v5563 = vld [vmem:[%s0 + $0x3c] sm:$0xf]
    %v5564 = vld [vmem:[%s0 + $0x40] sm:$0xf]
    %v5565 = vld [vmem:[%s0 + $0x44] sm:$0xf]
    %v5566 = vld [vmem:[%s0 + $0x48] sm:$0xf]
    %v5567 = vld [vmem:[%s0 + $0x4c] sm:$0xf]
    %v5568 = vld [vmem:[%s0 + $0x50] sm:$0xf]
    %v5569 = vld [vmem:[%s0 + $0x54] sm:$0xf]
    %v5570 = vld [vmem:[%s0 + $0x58] sm:$0xf]
    %v5571 = vld [vmem:[%s0 + $0x5c] sm:$0xf]
    %v5572 = vld [vmem:[%s0 + $0x60] sm:$0xf]
    %v5573 = vld [vmem:[%s0 + $0x64] sm:$0xf]
    %v5574 = vld [vmem:[%s0 + $0x68] sm:$0xf]
    %v5575 = vld [vmem:[%s0 + $0x6c] sm:$0xf]
    %v5576 = vld [vmem:[%s0 + $0x70] sm:$0xf]
    %v5577 = vld [vmem:[%s0 + $0x74] sm:$0xf]
    %v5578 = vld [vmem:[%s0 + $0x78] sm:$0xf]
    %v5579 = vld [vmem:[%s0 + $0x7c] sm:$0xf]
    %v5580 = vld [vmem:[%s0 + $0x80] sm:$0xf]
    %v5581 = vld [vmem:[%s0 + $0x84] sm:$0xf]
    %v5582 = vld [vmem:[%s0 + $0x88] sm:$0xf]
    %v5583 = vld [vmem:[%s0 + $0x8c] sm:$0xf]
    %v5584 = vld [vmem:[%s0 + $0x90] sm:$0xf]
    %v5585 = vld [vmem:[%s0 + $0x94] sm:$0xf]
    %v5586 = vld [vmem:[%s0 + $0x98] sm:$0xf]
    %v5587 = vld [vmem:[%s0 + $0x9c] sm:$0xf]
    %v5588 = vld [vmem:[%s0 + $0xa0] sm:$0xf]
    %v5589 = vld [vmem:[%s0 + $0xa4] sm:$0xf]
    %v5590 = vld [vmem:[%s0 + $0xa8] sm:$0xf]
    %v5591 = vld [vmem:[%s0 + $0xac] sm:$0xf]
    %v5592 = vld [vmem:[%s0 + $0xb0] sm:$0xf]
    %v5593 = vld [vmem:[%s0 + $0xb4] sm:$0xf]
    %v5594 = vld [vmem:[%s0 + $0xb8] sm:$0xf]
    %v5595 = vld [vmem:[%s0 + $0xbc] sm:$0xf]
    %v5596 = vld [vmem:[%s0 + $0xc0] sm:$0xf]
    %v5597 = vld [vmem:[%s0 + $0xc4] sm:$0xf]
    %v5598 = vld [vmem:[%s0 + $0xc8] sm:$0xf]
    %v5599 = vld [vmem:[%s0 + $0xcc] sm:$0xf]
    %v5600 = vld [vmem:[%s0 + $0xd0] sm:$0xf]
    %v5601 = vld [vmem:[%s0 + $0xd4] sm:$0xf]
    %v5602 = vld [vmem:[%s0 + $0xd8] sm:$0xf]
    %v5603 = vld [vmem:[%s0 + $0xdc] sm:$0xf]
    %v5604 = vld [vmem:[%s0 + $0xe0] sm:$0xf]
    %v5605 = vld [vmem:[%s0 + $0xe4] sm:$0xf]
    %v5606 = vld [vmem:[%s0 + $0xe8] sm:$0xf]
    %v5607 = vld [vmem:[%s0 + $0xec] sm:$0xf]
    %v5608 = vld [vmem:[%s0 + $0xf0] sm:$0xf]
    %v5609 = vld [vmem:[%s0 + $0xf4] sm:$0xf]
    %v5610 = vld [vmem:[%s0 + $0xf8] sm:$0xf]
    %v5611 = vld [vmem:[%s0 + $0xfc] sm:$0xf]
    %v5612 = vunpack.c.l.bf16 %v5548
    %v5613 = vunpack.c.l.bf16 %v5549
    %v5614 = vunpack.c.l.bf16 %v5550
    %v5615 = vunpack.c.l.bf16 %v5551
    %v5616 = vunpack.c.l.bf16 %v5552
    %v5617 = vunpack.c.l.bf16 %v5553
    %v5618 = vunpack.c.l.bf16 %v5554
    %v5619 = vunpack.c.l.bf16 %v5555
    %v5620 = vunpack.c.l.bf16 %v5556
    %v5621 = vunpack.c.l.bf16 %v5557
    %v5622 = vunpack.c.l.bf16 %v5558
    %v5623 = vunpack.c.l.bf16 %v5559
    %v5624 = vunpack.c.l.bf16 %v5560
    %v5625 = vunpack.c.l.bf16 %v5561
    %v5626 = vunpack.c.l.bf16 %v5562
    %v5627 = vunpack.c.l.bf16 %v5563
    %v5628 = vunpack.c.l.bf16 %v5564
    %v5629 = vunpack.c.l.bf16 %v5565
    %v5630 = vunpack.c.l.bf16 %v5566
    %v5631 = vunpack.c.l.bf16 %v5567
    %v5632 = vunpack.c.l.bf16 %v5568
    %v5633 = vunpack.c.l.bf16 %v5569
    %v5634 = vunpack.c.l.bf16 %v5570
    %v5635 = vunpack.c.l.bf16 %v5571
    %v5636 = vunpack.c.l.bf16 %v5572
    %v5637 = vunpack.c.l.bf16 %v5573
    %v5638 = vunpack.c.l.bf16 %v5574
    %v5639 = vunpack.c.l.bf16 %v5575
    %v5640 = vunpack.c.l.bf16 %v5576
    %v5641 = vunpack.c.l.bf16 %v5577
    %v5642 = vunpack.c.l.bf16 %v5578
    %v5643 = vunpack.c.l.bf16 %v5579
    %v5644 = vunpack.c.l.bf16 %v5580
    %v5645 = vunpack.c.l.bf16 %v5581
    %v5646 = vunpack.c.l.bf16 %v5582
    %v5647 = vunpack.c.l.bf16 %v5583
    %v5648 = vunpack.c.l.bf16 %v5584
    %v5649 = vunpack.c.l.bf16 %v5585
    %v5650 = vunpack.c.l.bf16 %v5586
    %v5651 = vunpack.c.l.bf16 %v5587
    %v5652 = vunpack.c.l.bf16 %v5588
    %v5653 = vunpack.c.l.bf16 %v5589
    %v5654 = vunpack.c.l.bf16 %v5590
    %v5655 = vunpack.c.l.bf16 %v5591
    %v5656 = vunpack.c.l.bf16 %v5592
    %v5657 = vunpack.c.l.bf16 %v5593
    %v5658 = vunpack.c.l.bf16 %v5594
    %v5659 = vunpack.c.l.bf16 %v5595
    %v5660 = vunpack.c.l.bf16 %v5596
    %v5661 = vunpack.c.l.bf16 %v5597
    %v5662 = vunpack.c.l.bf16 %v5598
    %v5663 = vunpack.c.l.bf16 %v5599
    %v5664 = vunpack.c.l.bf16 %v5600
    %v5665 = vunpack.c.l.bf16 %v5601
    %v5666 = vunpack.c.l.bf16 %v5602
    %v5667 = vunpack.c.l.bf16 %v5603
    %v5668 = vunpack.c.l.bf16 %v5604
    %v5669 = vunpack.c.l.bf16 %v5605
    %v5670 = vunpack.c.l.bf16 %v5606
    %v5671 = vunpack.c.l.bf16 %v5607
    %v5672 = vunpack.c.l.bf16 %v5608
    %v5673 = vunpack.c.l.bf16 %v5609
    %v5674 = vunpack.c.l.bf16 %v5610
    %v5675 = vunpack.c.l.bf16 %v5611
    %v5676 = vadd.f32 %v5389, %v5612
    %v5677 = vadd.f32 %v5391, %v5613
    %v5678 = vadd.f32 %v5394, %v5614
    %v5679 = vadd.f32 %v5396, %v5615
    %v5680 = vadd.f32 %v5399, %v5616
    %v5681 = vadd.f32 %v5401, %v5617
    %v5682 = vadd.f32 %v5404, %v5618
    %v5683 = vadd.f32 %v5406, %v5619
    %v5684 = vadd.f32 %v5409, %v5620
    %v5685 = vadd.f32 %v5411, %v5621
    %v5686 = vadd.f32 %v5414, %v5622
    %v5687 = vadd.f32 %v5416, %v5623
    %v5688 = vadd.f32 %v5419, %v5624
    %v5689 = vadd.f32 %v5421, %v5625
    %v5690 = vadd.f32 %v5424, %v5626
    %v5691 = vadd.f32 %v5426, %v5627
    %v5692 = vadd.f32 %v5429, %v5628
    %v5693 = vadd.f32 %v5431, %v5629
    %v5694 = vadd.f32 %v5434, %v5630
    %v5695 = vadd.f32 %v5436, %v5631
    %v5696 = vadd.f32 %v5439, %v5632
    %v5697 = vadd.f32 %v5441, %v5633
    %v5698 = vadd.f32 %v5444, %v5634
    %v5699 = vadd.f32 %v5446, %v5635
    %v5700 = vadd.f32 %v5449, %v5636
    %v5701 = vadd.f32 %v5451, %v5637
    %v5702 = vadd.f32 %v5454, %v5638
    %v5703 = vadd.f32 %v5456, %v5639
    %v5704 = vadd.f32 %v5459, %v5640
    %v5705 = vadd.f32 %v5461, %v5641
    %v5706 = vadd.f32 %v5464, %v5642
    %v5707 = vadd.f32 %v5466, %v5643
    %v5708 = vadd.f32 %v5469, %v5644
    %v5709 = vadd.f32 %v5471, %v5645
    %v5710 = vadd.f32 %v5474, %v5646
    %v5711 = vadd.f32 %v5476, %v5647
    %v5712 = vadd.f32 %v5479, %v5648
    %v5713 = vadd.f32 %v5481, %v5649
    %v5714 = vadd.f32 %v5484, %v5650
    %v5715 = vadd.f32 %v5486, %v5651
    %v5716 = vadd.f32 %v5489, %v5652
    %v5717 = vadd.f32 %v5491, %v5653
    %v5718 = vadd.f32 %v5494, %v5654
    %v5719 = vadd.f32 %v5496, %v5655
    %v5720 = vadd.f32 %v5499, %v5656
    %v5721 = vadd.f32 %v5501, %v5657
    %v5722 = vadd.f32 %v5504, %v5658
    %v5723 = vadd.f32 %v5506, %v5659
    %v5724 = vadd.f32 %v5509, %v5660
    %v5725 = vadd.f32 %v5511, %v5661
    %v5726 = vadd.f32 %v5514, %v5662
    %v5727 = vadd.f32 %v5516, %v5663
    %v5728 = vadd.f32 %v5519, %v5664
    %v5729 = vadd.f32 %v5521, %v5665
    %v5730 = vadd.f32 %v5524, %v5666
    %v5731 = vadd.f32 %v5526, %v5667
    %v5732 = vadd.f32 %v5529, %v5668
    %v5733 = vadd.f32 %v5531, %v5669
    %v5734 = vadd.f32 %v5534, %v5670
    %v5735 = vadd.f32 %v5536, %v5671
    %v5736 = vadd.f32 %v5539, %v5672
    %v5737 = vadd.f32 %v5541, %v5673
    %v5738 = vadd.f32 %v5544, %v5674
    %v5739 = vadd.f32 %v5546, %v5675
    %v5740 = vmax.f32 %v5676, 0.0
    %v5741 = vmax.f32 %v5677, 0.0
    %v5742 = vmax.f32 %v5678, 0.0
    %v5743 = vmax.f32 %v5679, 0.0
    %v5744 = vmax.f32 %v5680, 0.0
    %v5745 = vmax.f32 %v5681, 0.0
    %v5746 = vmax.f32 %v5682, 0.0
    %v5747 = vmax.f32 %v5683, 0.0
    %v5748 = vmax.f32 %v5684, 0.0
    %v5749 = vmax.f32 %v5685, 0.0
    %v5750 = vmax.f32 %v5686, 0.0
    %v5751 = vmax.f32 %v5687, 0.0
    %v5752 = vmax.f32 %v5688, 0.0
    %v5753 = vmax.f32 %v5689, 0.0
    %v5754 = vmax.f32 %v5690, 0.0
    %v5755 = vmax.f32 %v5691, 0.0
    %v5756 = vmax.f32 %v5692, 0.0
    %v5757 = vmax.f32 %v5693, 0.0
    %v5758 = vmax.f32 %v5694, 0.0
    %v5759 = vmax.f32 %v5695, 0.0
    %v5760 = vmax.f32 %v5696, 0.0
    %v5761 = vmax.f32 %v5697, 0.0
    %v5762 = vmax.f32 %v5698, 0.0
    %v5763 = vmax.f32 %v5699, 0.0
    %v5764 = vmax.f32 %v5700, 0.0
    %v5765 = vmax.f32 %v5701, 0.0
    %v5766 = vmax.f32 %v5702, 0.0
    %v5767 = vmax.f32 %v5703, 0.0
    %v5768 = vmax.f32 %v5704, 0.0
    %v5769 = vmax.f32 %v5705, 0.0
    %v5770 = vmax.f32 %v5706, 0.0
    %v5771 = vmax.f32 %v5707, 0.0
    %v5772 = vmax.f32 %v5708, 0.0
    %v5773 = vmax.f32 %v5709, 0.0
    %v5774 = vmax.f32 %v5710, 0.0
    %v5775 = vmax.f32 %v5711, 0.0
    %v5776 = vmax.f32 %v5712, 0.0
    %v5777 = vmax.f32 %v5713, 0.0
    %v5778 = vmax.f32 %v5714, 0.0
    %v5779 = vmax.f32 %v5715, 0.0
    %v5780 = vmax.f32 %v5716, 0.0
    %v5781 = vmax.f32 %v5717, 0.0
    %v5782 = vmax.f32 %v5718, 0.0
    %v5783 = vmax.f32 %v5719, 0.0
    %v5784 = vmax.f32 %v5720, 0.0
    %v5785 = vmax.f32 %v5721, 0.0
    %v5786 = vmax.f32 %v5722, 0.0
    %v5787 = vmax.f32 %v5723, 0.0
    %v5788 = vmax.f32 %v5724, 0.0
    %v5789 = vmax.f32 %v5725, 0.0
    %v5790 = vmax.f32 %v5726, 0.0
    %v5791 = vmax.f32 %v5727, 0.0
    %v5792 = vmax.f32 %v5728, 0.0
    %v5793 = vmax.f32 %v5729, 0.0
    %v5794 = vmax.f32 %v5730, 0.0
    %v5795 = vmax.f32 %v5731, 0.0
    %v5796 = vmax.f32 %v5732, 0.0
    %v5797 = vmax.f32 %v5733, 0.0
    %v5798 = vmax.f32 %v5734, 0.0
    %v5799 = vmax.f32 %v5735, 0.0
    %v5800 = vmax.f32 %v5736, 0.0
    %v5801 = vmax.f32 %v5737, 0.0
    %v5802 = vmax.f32 %v5738, 0.0
    %v5803 = vmax.f32 %v5739, 0.0
    %v5804 = vpack.c.bf16 %v5740, %v5740
    %v5805 = vpack.c.bf16 %v5741, %v5741
    %v5806 = vpack.c.bf16 %v5742, %v5742
    %v5807 = vpack.c.bf16 %v5743, %v5743
    %v5808 = vpack.c.bf16 %v5744, %v5744
    %v5809 = vpack.c.bf16 %v5745, %v5745
    %v5810 = vpack.c.bf16 %v5746, %v5746
    %v5811 = vpack.c.bf16 %v5747, %v5747
    %v5812 = vpack.c.bf16 %v5748, %v5748
    %v5813 = vpack.c.bf16 %v5749, %v5749
    %v5814 = vpack.c.bf16 %v5750, %v5750
    %v5815 = vpack.c.bf16 %v5751, %v5751
    %v5816 = vpack.c.bf16 %v5752, %v5752
    %v5817 = vpack.c.bf16 %v5753, %v5753
    %v5818 = vpack.c.bf16 %v5754, %v5754
    %v5819 = vpack.c.bf16 %v5755, %v5755
    %v5820 = vpack.c.bf16 %v5756, %v5756
    %v5821 = vpack.c.bf16 %v5757, %v5757
    %v5822 = vpack.c.bf16 %v5758, %v5758
    %v5823 = vpack.c.bf16 %v5759, %v5759
    %v5824 = vpack.c.bf16 %v5760, %v5760
    %v5825 = vpack.c.bf16 %v5761, %v5761
    %v5826 = vpack.c.bf16 %v5762, %v5762
    %v5827 = vpack.c.bf16 %v5763, %v5763
    %v5828 = vpack.c.bf16 %v5764, %v5764
    %v5829 = vpack.c.bf16 %v5765, %v5765
    %v5830 = vpack.c.bf16 %v5766, %v5766
    %v5831 = vpack.c.bf16 %v5767, %v5767
    %v5832 = vpack.c.bf16 %v5768, %v5768
    %v5833 = vpack.c.bf16 %v5769, %v5769
    %v5834 = vpack.c.bf16 %v5770, %v5770
    %v5835 = vpack.c.bf16 %v5771, %v5771
    %v5836 = vpack.c.bf16 %v5772, %v5772
    %v5837 = vpack.c.bf16 %v5773, %v5773
    %v5838 = vpack.c.bf16 %v5774, %v5774
    %v5839 = vpack.c.bf16 %v5775, %v5775
    %v5840 = vpack.c.bf16 %v5776, %v5776
    %v5841 = vpack.c.bf16 %v5777, %v5777
    %v5842 = vpack.c.bf16 %v5778, %v5778
    %v5843 = vpack.c.bf16 %v5779, %v5779
    %v5844 = vpack.c.bf16 %v5780, %v5780
    %v5845 = vpack.c.bf16 %v5781, %v5781
    %v5846 = vpack.c.bf16 %v5782, %v5782
    %v5847 = vpack.c.bf16 %v5783, %v5783
    %v5848 = vpack.c.bf16 %v5784, %v5784
    %v5849 = vpack.c.bf16 %v5785, %v5785
    %v5850 = vpack.c.bf16 %v5786, %v5786
    %v5851 = vpack.c.bf16 %v5787, %v5787
    %v5852 = vpack.c.bf16 %v5788, %v5788
    %v5853 = vpack.c.bf16 %v5789, %v5789
    %v5854 = vpack.c.bf16 %v5790, %v5790
    %v5855 = vpack.c.bf16 %v5791, %v5791
    %v5856 = vpack.c.bf16 %v5792, %v5792
    %v5857 = vpack.c.bf16 %v5793, %v5793
    %v5858 = vpack.c.bf16 %v5794, %v5794
    %v5859 = vpack.c.bf16 %v5795, %v5795
    %v5860 = vpack.c.bf16 %v5796, %v5796
    %v5861 = vpack.c.bf16 %v5797, %v5797
    %v5862 = vpack.c.bf16 %v5798, %v5798
    %v5863 = vpack.c.bf16 %v5799, %v5799
    %v5864 = vpack.c.bf16 %v5800, %v5800
    %v5865 = vpack.c.bf16 %v5801, %v5801
    %v5866 = vpack.c.bf16 %v5802, %v5802
    %v5867 = vpack.c.bf16 %v5803, %v5803
    %5868 = vst [vmem:[#allocation3] sm:$0xf] %v5804
    %5869 = vst [vmem:[#allocation3 + $0x4] sm:$0xf] %v5805
    %5870 = vst [vmem:[#allocation3 + $0x8] sm:$0xf] %v5806
    %5871 = vst [vmem:[#allocation3 + $0xc] sm:$0xf] %v5807
    %5872 = vst [vmem:[#allocation3 + $0x10] sm:$0xf] %v5808
    %5873 = vst [vmem:[#allocation3 + $0x14] sm:$0xf] %v5809
    %5874 = vst [vmem:[#allocation3 + $0x18] sm:$0xf] %v5810
    %5875 = vst [vmem:[#allocation3 + $0x1c] sm:$0xf] %v5811
    %5876 = vst [vmem:[#allocation3 + $0x20] sm:$0xf] %v5812
    %5877 = vst [vmem:[#allocation3 + $0x24] sm:$0xf] %v5813
    %5878 = vst [vmem:[#allocation3 + $0x28] sm:$0xf] %v5814
    %5879 = vst [vmem:[#allocation3 + $0x2c] sm:$0xf] %v5815
    %5880 = vst [vmem:[#allocation3 + $0x30] sm:$0xf] %v5816
    %5881 = vst [vmem:[#allocation3 + $0x34] sm:$0xf] %v5817
    %5882 = vst [vmem:[#allocation3 + $0x38] sm:$0xf] %v5818
    %5883 = vst [vmem:[#allocation3 + $0x3c] sm:$0xf] %v5819
    %5884 = vst [vmem:[#allocation3 + $0x40] sm:$0xf] %v5820
    %5885 = vst [vmem:[#allocation3 + $0x44] sm:$0xf] %v5821
    %5886 = vst [vmem:[#allocation3 + $0x48] sm:$0xf] %v5822
    %5887 = vst [vmem:[#allocation3 + $0x4c] sm:$0xf] %v5823
    %5888 = vst [vmem:[#allocation3 + $0x50] sm:$0xf] %v5824
    %5889 = vst [vmem:[#allocation3 + $0x54] sm:$0xf] %v5825
    %5890 = vst [vmem:[#allocation3 + $0x58] sm:$0xf] %v5826
    %5891 = vst [vmem:[#allocation3 + $0x5c] sm:$0xf] %v5827
    %5892 = vst [vmem:[#allocation3 + $0x60] sm:$0xf] %v5828
    %5893 = vst [vmem:[#allocation3 + $0x64] sm:$0xf] %v5829
    %5894 = vst [vmem:[#allocation3 + $0x68] sm:$0xf] %v5830
    %5895 = vst [vmem:[#allocation3 + $0x6c] sm:$0xf] %v5831
    %5896 = vst [vmem:[#allocation3 + $0x70] sm:$0xf] %v5832
    %5897 = vst [vmem:[#allocation3 + $0x74] sm:$0xf] %v5833
    %5898 = vst [vmem:[#allocation3 + $0x78] sm:$0xf] %v5834
    %5899 = vst [vmem:[#allocation3 + $0x7c] sm:$0xf] %v5835
    %5900 = vst [vmem:[#allocation3 + $0x80] sm:$0xf] %v5836
    %5901 = vst [vmem:[#allocation3 + $0x84] sm:$0xf] %v5837
    %5902 = vst [vmem:[#allocation3 + $0x88] sm:$0xf] %v5838
    %5903 = vst [vmem:[#allocation3 + $0x8c] sm:$0xf] %v5839
    %5904 = vst [vmem:[#allocation3 + $0x90] sm:$0xf] %v5840
    %5905 = vst [vmem:[#allocation3 + $0x94] sm:$0xf] %v5841
    %5906 = vst [vmem:[#allocation3 + $0x98] sm:$0xf] %v5842
    %5907 = vst [vmem:[#allocation3 + $0x9c] sm:$0xf] %v5843
    %5908 = vst [vmem:[#allocation3 + $0xa0] sm:$0xf] %v5844
    %5909 = vst [vmem:[#allocation3 + $0xa4] sm:$0xf] %v5845
    %5910 = vst [vmem:[#allocation3 + $0xa8] sm:$0xf] %v5846
    %5911 = vst [vmem:[#allocation3 + $0xac] sm:$0xf] %v5847
    %5912 = vst [vmem:[#allocation3 + $0xb0] sm:$0xf] %v5848
    %5913 = vst [vmem:[#allocation3 + $0xb4] sm:$0xf] %v5849
    %5914 = vst [vmem:[#allocation3 + $0xb8] sm:$0xf] %v5850
    %5915 = vst [vmem:[#allocation3 + $0xbc] sm:$0xf] %v5851
    %5916 = vst [vmem:[#allocation3 + $0xc0] sm:$0xf] %v5852
    %5917 = vst [vmem:[#allocation3 + $0xc4] sm:$0xf] %v5853
    %5918 = vst [vmem:[#allocation3 + $0xc8] sm:$0xf] %v5854
    %5919 = vst [vmem:[#allocation3 + $0xcc] sm:$0xf] %v5855
    %5920 = vst [vmem:[#allocation3 + $0xd0] sm:$0xf] %v5856
    %5921 = vst [vmem:[#allocation3 + $0xd4] sm:$0xf] %v5857
    %5922 = vst [vmem:[#allocation3 + $0xd8] sm:$0xf] %v5858
    %5923 = vst [vmem:[#allocation3 + $0xdc] sm:$0xf] %v5859
    %5924 = vst [vmem:[#allocation3 + $0xe0] sm:$0xf] %v5860
    %5925 = vst [vmem:[#allocation3 + $0xe4] sm:$0xf] %v5861
    %5926 = vst [vmem:[#allocation3 + $0xe8] sm:$0xf] %v5862
    %5927 = vst [vmem:[#allocation3 + $0xec] sm:$0xf] %v5863
    %5928 = vst [vmem:[#allocation3 + $0xf0] sm:$0xf] %v5864
    %5929 = vst [vmem:[#allocation3 + $0xf4] sm:$0xf] %v5865
    %5930 = vst [vmem:[#allocation3 + $0xf8] sm:$0xf] %v5866
    %5931 = vst [vmem:[#allocation3 + $0xfc] sm:$0xf] %v5867
    // Predicated region
    $region30: #{bottleneck_forward.1} parent=1 // pred_check
      _
    $region31: #{bottleneck_forward.1} parent=1 // pred_check_branch
      %5933 = sbr.rel (0) target = $region33
    $region32: #{bottleneck_forward.1} parent=1 // pred_region
      %5935 = vsyncadd [#allocation4], 0
      %s5936 = sshll.u32 [#allocation3], 4
      %s5937 = int_to_ptr.vmem [resolvable:$true] %s5936
      %s5938 = sshll.u32 %s7, 4
      %s5939 = int_to_ptr.hbm [resolvable:$true] %s5938
      %5944 = dma.vmem_to_hbm [thread:$0]  %s5937, 4096, %s5939, [#allocation4], 64, 64, 4
    $region33: #{bottleneck_forward.1} parent=1 // pred_fallthru
      _
    // Predicated region
    $region34: #{bottleneck_forward.1} parent=1 // pred_check
      _
    $region35: #{bottleneck_forward.1} parent=1 // pred_check_branch
      %5946 = sbr.rel (0) target = $region37
    $region36: #{bottleneck_forward.1} parent=1 // pred_region
      %5948 = dma.done [#allocation4], 4096
    $region37: #{bottleneck_forward.1} parent=1 // pred_fallthru
      _
    %5949 = vsyncpa [#allocation4], 1

</llo_original>
